<compile_context>
chip_gen: v7x
topology: tpu7x:2x2x1
jax: 0.10.0
libtpu: 0.0.40
codegen_flags: <defaults>
</compile_context>

<pallas_src>
import numpy as np
import jax
import jax.numpy as jnp
from jax import lax
from jax.experimental import pallas as pl
from jax.experimental.pallas import tpu as pltpu


def _prelu(x, a):
    return jnp.where(x > 0, x, a * x)


# -----------------------------------------------------------------------------
# Host-side weight repacking: banded matmul operands (numpy, runs once per call).
# Activation layout inside the kernel is (H, W*C); a 3x3 conv over (H, W) becomes
# ONE matmul of the activation rows against a weight matrix whose columns hold
# the three vertical-tap (kh) banded slabs side by side.  Each banded slab folds
# the horizontal taps (and, for the Conv3d stack, the depth/C taps) plus their
# zero padding into the contraction dim.
# -----------------------------------------------------------------------------
def _band2d(w, W):
    """(Cout, Cin, 3, 3) OIHW  ->  (3, W*Cin, W*Cout) banded per-kh slabs."""
    Cout, Cin = w.shape[0], w.shape[1]
    B = np.zeros((3, W, Cin, W, Cout), np.float32)
    for kh in range(3):
        for kw in range(3):
            wt = w[:, :, kh, kw].T                      # (Cin, Cout)
            for wo in range(W):
                wi = wo + kw - 1
                if 0 <= wi < W:
                    B[kh, wi, :, wo, :] = wt
    return B.reshape(3, W * Cin, W * Cout)


def _band3d_first(w3a, W, C):
    """Conv3d(1->C3) weights (C3,1,3,3,3) -> (3, W*C, W*C*C3) banded slabs."""
    C3 = w3a.shape[0]
    B = np.zeros((3, W, C, W, C, C3), np.float32)
    for kh in range(3):
        for kw in range(3):
            for kc in range(3):
                vec = w3a[:, 0, kh, kw, kc]             # (C3,)
                for wo in range(W):
                    wi = wo + kw - 1
                    if not (0 <= wi < W):
                        continue
                    for co in range(C):
                        ci = co + kc - 1
                        if 0 <= ci < C:
                            B[kh, wi, ci, wo, co, :] = vec
    return B.reshape(3, W * C, W * C * C3)


def _band3d_second(w3b, W, C):
    """Conv3d(C3->1) weights (1,C3,3,3,3) -> (3, W*C*C3, W*C) banded slabs."""
    C3 = w3b.shape[1]
    B = np.zeros((3, W, C, C3, W, C), np.float32)
    for kh in range(3):
        for kw in range(3):
            for kc in range(3):
                vec = w3b[0, :, kh, kw, kc]             # (C3,)
                for wo in range(W):
                    wi = wo + kw - 1
                    if not (0 <= wi < W):
                        continue
                    for co in range(C):
                        ci = co + kc - 1
                        if 0 <= ci < C:
                            B[kh, wi, ci, :, wo, co] = vec
    return B.reshape(3, W * C * C3, W * C)


def _khcat(B):
    """(3, K, N) banded slabs -> (K, 3*N): kh blocks stacked along the columns."""
    K, Nout = B.shape[1], B.shape[2]
    return B.transpose(1, 0, 2).reshape(K, 3 * Nout)


# -----------------------------------------------------------------------------
# Fused kernel: one batch BLOCK (Nb elements) per grid step.
# -----------------------------------------------------------------------------
def _residual_block_kernel(x_ref, WA_ref, b1_ref, bd_ref, W2_ref, b2_ref,
                           W3a_ref, b3a_ref, W3b_ref, b3b_ref, alpha_ref,
                           o_ref, accA_ref, accB_ref, accC_ref):
    Nb, H, WCo = o_ref.shape
    WCoC3 = accC_ref.shape[2]
    alpha = alpha_ref[0]

    def conv(v2d_bf16, w_ref):
        # (Nb*H, K) x (K, 3*Nout) single MXU matmul, f32 accumulation.
        y = jnp.dot(v2d_bf16, w_ref[...], preferred_element_type=jnp.float32)
        return y.reshape(Nb, H, y.shape[1])

    def combine(acc_ref, y, n, bias_ref, accumulate=False):
        # y[:, h] holds the three per-tap contributions [kh0 | kh1 | kh2] of
        # intermediate row h; output row h = kh0[h-1] + kh1[h] + kh2[h+1] + bias.
        # The +/-1-row shifts never cross a batch boundary (3D layout) and the
        # H-border zero padding falls out of the slice ranges.
        center = y[:, :, n:2 * n] + bias_ref[...]
        if accumulate:
            acc_ref[...] += center
        else:
            acc_ref[...] = center
        acc_ref[:, 1:H, :] += y[:, 0:H - 1, 0:n]
        acc_ref[:, 0:H - 1, :] += y[:, 1:H, 2 * n:3 * n]

    # Stage A: conv1 and downsample share x -> one fused MXU matmul (bias last).
    xb = x_ref[...].reshape(Nb * H, x_ref.shape[2])       # bf16 lane-dense rows
    yA = conv(xb, WA_ref)                                  # (Nb, H, 6*WCo) f32
    combine(accA_ref, yA[:, :, 0:3 * WCo], WCo, b1_ref)         # conv1 pre-act
    combine(accB_ref, yA[:, :, 3 * WCo:6 * WCo], WCo, bd_ref)   # downsample branch

    # Stage B: conv2 accumulated on top of the downsample branch (residual add).
    c1 = _prelu(accA_ref[...], alpha).astype(jnp.bfloat16).reshape(Nb * H, WCo)
    combine(accB_ref, conv(c1, W2_ref), WCo, b2_ref, accumulate=True)

    # Stage C: PReLU, then Conv3d(1->C3) + PReLU over the (H, W, C) volume
    # (C == depth axis), then Conv3d(C3->1).
    # TODO(synk): Dropout3d training-mode channel dropout not implemented
    # (eval-mode identity).
    r = _prelu(accB_ref[...], alpha).astype(jnp.bfloat16).reshape(Nb * H, WCo)
    combine(accC_ref, conv(r, W3a_ref), WCoC3, b3a_ref)

    m = _prelu(accC_ref[...], alpha).astype(jnp.bfloat16).reshape(Nb * H, WCoC3)
    combine(o_ref, conv(m, W3b_ref), WCo, b3b_ref)        # lane-dense f32 output


# -----------------------------------------------------------------------------
# Wrapper: layout transforms + banded weight packing + pallas_call.
# -----------------------------------------------------------------------------
def residual_block_forward(x_nchw, params):
    N, Cin, H, W = x_nchw.shape
    w1 = np.asarray(params["w1"], np.float32); b1 = np.asarray(params["b1"], np.float32)
    w2 = np.asarray(params["w2"], np.float32); b2 = np.asarray(params["b2"], np.float32)
    wd = np.asarray(params["wd"], np.float32); bd = np.asarray(params["bd"], np.float32)
    w3a = np.asarray(params["w3a"], np.float32); b3a = np.asarray(params["b3a"], np.float32)
    w3b = np.asarray(params["w3b"], np.float32); b3b = np.asarray(params["b3b"], np.float32)
    Cout = w1.shape[0]
    C3 = w3a.shape[0]
    WCo = W * Cout
    WCoC3 = WCo * C3

    # The banded packing hard-codes the module defaults; anything else is unsupported.
    assert w1.shape == (Cout, Cin, 3, 3) and wd.shape == (Cout, Cin, 3, 3)
    assert w2.shape == (Cout, Cout, 3, 3)
    assert w3a.shape == (C3, 1, 3, 3, 3) and w3b.shape == (1, C3, 3, 3, 3)
    assert np.asarray(params["alpha"]).size == 1, "single shared PReLU scalar only"

    # kh-fused banded MXU weights (bf16) and biases broadcast along W (and depth).
    WA = np.concatenate([_khcat(_band2d(w1, W)),
                         _khcat(_band2d(wd, W))], axis=1)        # (W*Cin, 6*WCo)
    W2 = _khcat(_band2d(w2, W))                                  # (WCo, 3*WCo)
    W3a = _khcat(_band3d_first(w3a, W, Cout))                    # (WCo, 3*WCoC3)
    W3b = _khcat(_band3d_second(w3b, W, Cout))                   # (WCoC3, 3*WCo)
    b1r = np.tile(b1, W)[None, :]
    bdr = np.tile(bd, W)[None, :]
    b2r = np.tile(b2, W)[None, :]
    b3ar = np.tile(b3a, WCo)[None, :]
    b3br = np.full((1, WCo), float(b3b[0]), np.float32)

    # Batch block: target M = Nb*H matmul rows (>= 128 when the batch allows) to
    # fill the MXU and amortize per-grid-step overhead.  (With tiny N the grid
    # may collapse to 1; for large N this also keeps >= 2 steps for megacore.)
    Nb = 1
    for cand in range(1, N + 1):
        if N % cand == 0 and cand * H <= 256:
            Nb = cand
    grid = (N // Nb,)

    bf = lambda a: jnp.asarray(a, jnp.bfloat16)
    f32 = lambda a: jnp.asarray(a, jnp.float32)
    alpha = jnp.asarray(params["alpha"], jnp.float32).reshape(1)

    # NCHW -> lane-dense bf16 rows (N, H, W*Cin); H zero-padding handled in-kernel.
    x_rows = jnp.transpose(x_nchw, (0, 2, 3, 1)).reshape(N, H, W * Cin)
    x_rows = x_rows.astype(jnp.bfloat16)

    out = pl.pallas_call(
        _residual_block_kernel,
        out_shape=jax.ShapeDtypeStruct((N, H, WCo), jnp.float32),
        grid=grid,
        in_specs=[
            pl.BlockSpec((Nb, H, W * Cin), lambda n: (n, 0, 0)),
            pl.BlockSpec((W * Cin, 6 * WCo), lambda n: (0, 0)),
            pl.BlockSpec((1, WCo), lambda n: (0, 0)),
            pl.BlockSpec((1, WCo), lambda n: (0, 0)),
            pl.BlockSpec((WCo, 3 * WCo), lambda n: (0, 0)),
            pl.BlockSpec((1, WCo), lambda n: (0, 0)),
            pl.BlockSpec((WCo, 3 * WCoC3), lambda n: (0, 0)),
            pl.BlockSpec((1, WCoC3), lambda n: (0, 0)),
            pl.BlockSpec((WCoC3, 3 * WCo), lambda n: (0, 0)),
            pl.BlockSpec((1, WCo), lambda n: (0, 0)),
            pl.BlockSpec(memory_space=pltpu.MemorySpace.SMEM),
        ],
        out_specs=pl.BlockSpec((Nb, H, WCo), lambda n: (n, 0, 0)),
        scratch_shapes=[
            pltpu.VMEM((Nb, H, WCo), jnp.float32),     # conv1 pre-activation
            pltpu.VMEM((Nb, H, WCo), jnp.float32),     # conv2 + downsample sum
            pltpu.VMEM((Nb, H, WCoC3), jnp.float32),   # Conv3d#1 pre-activation
        ],
        compiler_params=pltpu.CompilerParams(
            dimension_semantics=("parallel",),
            vmem_limit_bytes=32 * 1024 * 1024),
    )(x_rows, bf(WA), f32(b1r), f32(bdr), bf(W2), f32(b2r),
      bf(W3a), f32(b3ar), bf(W3b), f32(b3br), alpha)

    # (N, H, W*Cout) -> NCHW
    return jnp.transpose(out.reshape(N, H, W, Cout), (0, 3, 1, 2))


# -----------------------------------------------------------------------------
# Pure-JAX reference (eval-mode PyTorch semantics) and parameter init
# -----------------------------------------------------------------------------
def reference_forward(x, p):
    def conv2d(x, w, b):
        y = lax.conv_general_dilated(x, w, (1, 1), ((1, 1), (1, 1)),
                                     dimension_numbers=("NCHW", "OIHW", "NCHW"),
                                     precision=lax.Precision.HIGHEST)
        return y + b[None, :, None, None]

    def conv3d(x, w, b):
        y = lax.conv_general_dilated(x, w, (1, 1, 1), ((1, 1),) * 3,
                                     dimension_numbers=("NCDHW", "OIDHW", "NCDHW"),
                                     precision=lax.Precision.HIGHEST)
        return y + b[None, :, None, None, None]

    a = p["alpha"]
    out = _prelu(conv2d(x, p["w1"], p["b1"]), a)
    out = conv2d(out, p["w2"], p["b2"])
    res = conv2d(x, p["wd"], p["bd"])
    out = _prelu(out + res, a)
    vol = jnp.transpose(out, (0, 2, 3, 1))[:, None]            # (N,1,H,W,C)
    mid = _prelu(conv3d(vol, p["w3a"], p["b3a"]), a)           # Dropout3d == identity (eval)
    y = conv3d(mid, p["w3b"], p["b3b"])                        # (N,1,H,W,C)
    return jnp.transpose(y[:, 0], (0, 3, 1, 2))


def init_params(key, cin, cout, c3):
    def uni(k, shape, fan_in):
        bound = 1.0 / np.sqrt(fan_in)
        return jax.random.uniform(k, shape, jnp.float32, -bound, bound)

    ks = jax.random.split(key, 10)
    return {
        "w1": uni(ks[0], (cout, cin, 3, 3), cin * 9),
        "b1": uni(ks[1], (cout,), cin * 9),
        "w2": uni(ks[2], (cout, cout, 3, 3), cout * 9),
        "b2": uni(ks[3], (cout,), cout * 9),
        "wd": uni(ks[4], (cout, cin, 3, 3), cin * 9),
        "bd": uni(ks[5], (cout,), cin * 9),
        "w3a": uni(ks[6], (c3, 1, 3, 3, 3), 27),
        "b3a": uni(ks[7], (c3,), 27),
        "w3b": uni(ks[8], (1, c3, 3, 3, 3), 27 * c3),
        "b3b": uni(ks[9], (1,), 27 * c3),
        "alpha": jnp.array(0.25, jnp.float32),   # nn.PReLU() default, shared everywhere
    }


if __name__ == "__main__":
    key = jax.random.PRNGKey(0)
    kx, kp = jax.random.split(key)
    N, Cin, Cout, C3, H, W = 2, 4, 8, 8, 16, 16

    x = jax.random.normal(kx, (N, Cin, H, W), jnp.float32)
    params = init_params(kp, Cin, Cout, C3)

    out = jax.block_until_ready(residual_block_forward(x, params))
    ref = reference_forward(x, params)

    assert out.shape == ref.shape == (N, Cout, H, W)
    # bf16 MXU operands vs f32 HIGHEST-precision reference -> modest tolerance.
    np.testing.assert_allclose(np.asarray(out), np.asarray(ref), atol=3e-2, rtol=3e-2)

    print("KERNEL_OK")
</pallas_src>

<mosaic_0001>
module attributes {stable_mosaic.version = 11 : i64} {
  func.func @_residual_block_kernel(%arg0: i32, %arg1: memref<2x16x64xbf16, #tpu.memory_space<vmem>>, %arg2: memref<64x768xbf16, #tpu.memory_space<vmem>>, %arg3: memref<1x128xf32, #tpu.memory_space<vmem>>, %arg4: memref<1x128xf32, #tpu.memory_space<vmem>>, %arg5: memref<128x384xbf16, #tpu.memory_space<vmem>>, %arg6: memref<1x128xf32, #tpu.memory_space<vmem>>, %arg7: memref<128x3072xbf16, #tpu.memory_space<vmem>>, %arg8: memref<1x1024xf32, #tpu.memory_space<vmem>>, %arg9: memref<1024x384xbf16, #tpu.memory_space<vmem>>, %arg10: memref<1x128xf32, #tpu.memory_space<vmem>>, %arg11: memref<1xf32, #tpu.memory_space<smem>>, %arg12: memref<2x16x128xf32, #tpu.memory_space<vmem>>, %arg13: memref<2x16x128xf32, #tpu.memory_space<vmem>>, %arg14: memref<2x16x128xf32, #tpu.memory_space<vmem>>, %arg15: memref<2x16x1024xf32, #tpu.memory_space<vmem>>) attributes {dimension_semantics = [#tpu.dimension_semantics<parallel>], iteration_bounds = array<i64: 1>, scalar_prefetch = 0 : i64, scratch_operands = 3 : i64, tpu.core_type = #tpu.core_type<tc>, window_params = [{transform_indices = @transform_0, window_bounds = array<i64: 2, 16, 64>}, {pipeline_mode = #tpu.pipeline_mode<synchronous>, transform_indices = @transform_1, window_bounds = array<i64: 64, 768>}, {pipeline_mode = #tpu.pipeline_mode<synchronous>, transform_indices = @transform_2, window_bounds = array<i64: 1, 128>}, {pipeline_mode = #tpu.pipeline_mode<synchronous>, transform_indices = @transform_3, window_bounds = array<i64: 1, 128>}, {pipeline_mode = #tpu.pipeline_mode<synchronous>, transform_indices = @transform_4, window_bounds = array<i64: 128, 384>}, {pipeline_mode = #tpu.pipeline_mode<synchronous>, transform_indices = @transform_5, window_bounds = array<i64: 1, 128>}, {pipeline_mode = #tpu.pipeline_mode<synchronous>, transform_indices = @transform_6, window_bounds = array<i64: 128, 3072>}, {pipeline_mode = #tpu.pipeline_mode<synchronous>, transform_indices = @transform_7, window_bounds = array<i64: 1, 1024>}, {pipeline_mode = #tpu.pipeline_mode<synchronous>, transform_indices = @transform_8, window_bounds = array<i64: 1024, 384>}, {pipeline_mode = #tpu.pipeline_mode<synchronous>, transform_indices = @transform_9, window_bounds = array<i64: 1, 128>}, {transform_indices = @transform_10, window_bounds = array<i64: 1>}, {transform_indices = @transform_11, window_bounds = array<i64: 2, 16, 128>}]} {
    %c0 = arith.constant 0 : index
    %0 = memref.load %arg11[%c0] : memref<1xf32, #tpu.memory_space<smem>>
    %c0_0 = arith.constant 0 : index
    %c0_1 = arith.constant 0 : index
    %c0_2 = arith.constant 0 : index
    %1 = vector.load %arg1[%c0_0, %c0_1, %c0_2] : memref<2x16x64xbf16, #tpu.memory_space<vmem>>, vector<2x16x64xbf16>
    %2 = vector.shape_cast %1 : vector<2x16x64xbf16> to vector<32x64xbf16>
    %c0_3 = arith.constant 0 : index
    %c0_4 = arith.constant 0 : index
    %3 = vector.load %arg2[%c0_3, %c0_4] : memref<64x768xbf16, #tpu.memory_space<vmem>>, vector<64x768xbf16>
    %cst = arith.constant dense<0.000000e+00> : vector<32x768xf32>
    %4 = tpu.matmul %2, %3, %cst {dimension_numbers = #tpu.dot_dimension_numbers<[1], [0], [0], [1], [0, 0, 1, 1], [], []>} : vector<32x64xbf16>, vector<64x768xbf16>, vector<32x768xf32> -> vector<32x768xf32>
    %5 = vector.shape_cast %4 : vector<32x768xf32> to vector<2x16x768xf32>
    %6 = vector.extract_strided_slice %5 {offsets = [0, 0, 0], sizes = [2, 16, 384], strides = [1, 1, 1]} : vector<2x16x768xf32> to vector<2x16x384xf32>
    %7 = vector.extract_strided_slice %6 {offsets = [0, 0, 128], sizes = [2, 16, 128], strides = [1, 1, 1]} : vector<2x16x384xf32> to vector<2x16x128xf32>
    %c0_5 = arith.constant 0 : index
    %c0_6 = arith.constant 0 : index
    %8 = vector.load %arg3[%c0_5, %c0_6] : memref<1x128xf32, #tpu.memory_space<vmem>>, vector<1x128xf32>
    %9 = vector.shape_cast %8 : vector<1x128xf32> to vector<1x1x128xf32>
    %10 = vector.broadcast %9 : vector<1x1x128xf32> to vector<2x16x128xf32>
    %11 = arith.addf %7, %10 : vector<2x16x128xf32>
    %c0_7 = arith.constant 0 : index
    %c0_8 = arith.constant 0 : index
    %c0_9 = arith.constant 0 : index
    %12 = vector.load %arg13[%c0_7, %c0_8, %c0_9] : memref<2x16x128xf32, #tpu.memory_space<vmem>>, vector<2x16x128xf32>
    tpu.vector_store %arg13[%c0_7, %c0_8, %c0_9], %11 {strides = array<i32>} : memref<2x16x128xf32, #tpu.memory_space<vmem>>, vector<2x16x128xf32>,
    %c0_10 = arith.constant 0 : index
    %c1 = arith.constant 1 : index
    %c0_11 = arith.constant 0 : index
    %13 = vector.load %arg13[%c0_10, %c1, %c0_11] : memref<2x16x128xf32, #tpu.memory_space<vmem>>, vector<2x15x128xf32>
    %14 = vector.extract_strided_slice %6 {offsets = [0, 0, 0], sizes = [2, 15, 128], strides = [1, 1, 1]} : vector<2x16x384xf32> to vector<2x15x128xf32>
    %15 = arith.addf %13, %14 : vector<2x15x128xf32>
    %c0_12 = arith.constant 0 : index
    %c1_13 = arith.constant 1 : index
    %c0_14 = arith.constant 0 : index
    %16 = vector.load %arg13[%c0_12, %c1_13, %c0_14] : memref<2x16x128xf32, #tpu.memory_space<vmem>>, vector<2x15x128xf32>
    tpu.vector_store %arg13[%c0_12, %c1_13, %c0_14], %15 {strides = array<i32>} : memref<2x16x128xf32, #tpu.memory_space<vmem>>, vector<2x15x128xf32>,
    %c0_15 = arith.constant 0 : index
    %c0_16 = arith.constant 0 : index
    %c0_17 = arith.constant 0 : index
    %17 = vector.load %arg13[%c0_15, %c0_16, %c0_17] : memref<2x16x128xf32, #tpu.memory_space<vmem>>, vector<2x15x128xf32>
    %18 = vector.extract_strided_slice %6 {offsets = [0, 1, 256], sizes = [2, 15, 128], strides = [1, 1, 1]} : vector<2x16x384xf32> to vector<2x15x128xf32>
    %19 = arith.addf %17, %18 : vector<2x15x128xf32>
    %c0_18 = arith.constant 0 : index
    %c0_19 = arith.constant 0 : index
    %c0_20 = arith.constant 0 : index
    %20 = vector.load %arg13[%c0_18, %c0_19, %c0_20] : memref<2x16x128xf32, #tpu.memory_space<vmem>>, vector<2x15x128xf32>
    tpu.vector_store %arg13[%c0_18, %c0_19, %c0_20], %19 {strides = array<i32>} : memref<2x16x128xf32, #tpu.memory_space<vmem>>, vector<2x15x128xf32>,
    %21 = vector.extract_strided_slice %5 {offsets = [0, 0, 384], sizes = [2, 16, 384], strides = [1, 1, 1]} : vector<2x16x768xf32> to vector<2x16x384xf32>
    %22 = vector.extract_strided_slice %21 {offsets = [0, 0, 128], sizes = [2, 16, 128], strides = [1, 1, 1]} : vector<2x16x384xf32> to vector<2x16x128xf32>
    %c0_21 = arith.constant 0 : index
    %c0_22 = arith.constant 0 : index
    %23 = vector.load %arg4[%c0_21, %c0_22] : memref<1x128xf32, #tpu.memory_space<vmem>>, vector<1x128xf32>
    %24 = vector.shape_cast %23 : vector<1x128xf32> to vector<1x1x128xf32>
    %25 = vector.broadcast %24 : vector<1x1x128xf32> to vector<2x16x128xf32>
    %26 = arith.addf %22, %25 : vector<2x16x128xf32>
    %c0_23 = arith.constant 0 : index
    %c0_24 = arith.constant 0 : index
    %c0_25 = arith.constant 0 : index
    %27 = vector.load %arg14[%c0_23, %c0_24, %c0_25] : memref<2x16x128xf32, #tpu.memory_space<vmem>>, vector<2x16x128xf32>
    tpu.vector_store %arg14[%c0_23, %c0_24, %c0_25], %26 {strides = array<i32>} : memref<2x16x128xf32, #tpu.memory_space<vmem>>, vector<2x16x128xf32>,
    %c0_26 = arith.constant 0 : index
    %c1_27 = arith.constant 1 : index
    %c0_28 = arith.constant 0 : index
    %28 = vector.load %arg14[%c0_26, %c1_27, %c0_28] : memref<2x16x128xf32, #tpu.memory_space<vmem>>, vector<2x15x128xf32>
    %29 = vector.extract_strided_slice %21 {offsets = [0, 0, 0], sizes = [2, 15, 128], strides = [1, 1, 1]} : vector<2x16x384xf32> to vector<2x15x128xf32>
    %30 = arith.addf %28, %29 : vector<2x15x128xf32>
    %c0_29 = arith.constant 0 : index
    %c1_30 = arith.constant 1 : index
    %c0_31 = arith.constant 0 : index
    %31 = vector.load %arg14[%c0_29, %c1_30, %c0_31] : memref<2x16x128xf32, #tpu.memory_space<vmem>>, vector<2x15x128xf32>
    tpu.vector_store %arg14[%c0_29, %c1_30, %c0_31], %30 {strides = array<i32>} : memref<2x16x128xf32, #tpu.memory_space<vmem>>, vector<2x15x128xf32>,
    %c0_32 = arith.constant 0 : index
    %c0_33 = arith.constant 0 : index
    %c0_34 = arith.constant 0 : index
    %32 = vector.load %arg14[%c0_32, %c0_33, %c0_34] : memref<2x16x128xf32, #tpu.memory_space<vmem>>, vector<2x15x128xf32>
    %33 = vector.extract_strided_slice %21 {offsets = [0, 1, 256], sizes = [2, 15, 128], strides = [1, 1, 1]} : vector<2x16x384xf32> to vector<2x15x128xf32>
    %34 = arith.addf %32, %33 : vector<2x15x128xf32>
    %c0_35 = arith.constant 0 : index
    %c0_36 = arith.constant 0 : index
    %c0_37 = arith.constant 0 : index
    %35 = vector.load %arg14[%c0_35, %c0_36, %c0_37] : memref<2x16x128xf32, #tpu.memory_space<vmem>>, vector<2x15x128xf32>
    tpu.vector_store %arg14[%c0_35, %c0_36, %c0_37], %34 {strides = array<i32>} : memref<2x16x128xf32, #tpu.memory_space<vmem>>, vector<2x15x128xf32>,
    %c0_38 = arith.constant 0 : index
    %c0_39 = arith.constant 0 : index
    %c0_40 = arith.constant 0 : index
    %36 = vector.load %arg13[%c0_38, %c0_39, %c0_40] : memref<2x16x128xf32, #tpu.memory_space<vmem>>, vector<2x16x128xf32>
    %cst_41 = arith.constant 0.000000e+00 : f32
    %37 = vector.broadcast %cst_41 : f32 to vector<2x16x128xf32>
    %38 = arith.cmpf ogt, %36, %37 : vector<2x16x128xf32>
    %39 = vector.broadcast %0 : f32 to vector<2x16x128xf32>
    %40 = arith.mulf %39, %36 : vector<2x16x128xf32>
    %41 = arith.select %38, %36, %40 : vector<2x16x128xi1>, vector<2x16x128xf32>
    %42 = arith.truncf %41 : vector<2x16x128xf32> to vector<2x16x128xbf16>
    %43 = vector.shape_cast %42 : vector<2x16x128xbf16> to vector<32x128xbf16>
    %c0_42 = arith.constant 0 : index
    %c0_43 = arith.constant 0 : index
    %44 = vector.load %arg5[%c0_42, %c0_43] : memref<128x384xbf16, #tpu.memory_space<vmem>>, vector<128x384xbf16>
    %cst_44 = arith.constant dense<0.000000e+00> : vector<32x384xf32>
    %45 = tpu.matmul %43, %44, %cst_44 {dimension_numbers = #tpu.dot_dimension_numbers<[1], [0], [0], [1], [0, 0, 1, 1], [], []>} : vector<32x128xbf16>, vector<128x384xbf16>, vector<32x384xf32> -> vector<32x384xf32>
    %46 = vector.shape_cast %45 : vector<32x384xf32> to vector<2x16x384xf32>
    %47 = vector.extract_strided_slice %46 {offsets = [0, 0, 128], sizes = [2, 16, 128], strides = [1, 1, 1]} : vector<2x16x384xf32> to vector<2x16x128xf32>
    %c0_45 = arith.constant 0 : index
    %c0_46 = arith.constant 0 : index
    %48 = vector.load %arg6[%c0_45, %c0_46] : memref<1x128xf32, #tpu.memory_space<vmem>>, vector<1x128xf32>
    %49 = vector.shape_cast %48 : vector<1x128xf32> to vector<1x1x128xf32>
    %50 = vector.broadcast %49 : vector<1x1x128xf32> to vector<2x16x128xf32>
    %51 = arith.addf %47, %50 : vector<2x16x128xf32>
    %c0_47 = arith.constant 0 : index
    %c0_48 = arith.constant 0 : index
    %c0_49 = arith.constant 0 : index
    %52 = vector.load %arg14[%c0_47, %c0_48, %c0_49] : memref<2x16x128xf32, #tpu.memory_space<vmem>>, vector<2x16x128xf32>
    %53 = arith.addf %52, %51 : vector<2x16x128xf32>
    %c0_50 = arith.constant 0 : index
    %c0_51 = arith.constant 0 : index
    %c0_52 = arith.constant 0 : index
    %54 = vector.load %arg14[%c0_50, %c0_51, %c0_52] : memref<2x16x128xf32, #tpu.memory_space<vmem>>, vector<2x16x128xf32>
    tpu.vector_store %arg14[%c0_50, %c0_51, %c0_52], %53 {strides = array<i32>} : memref<2x16x128xf32, #tpu.memory_space<vmem>>, vector<2x16x128xf32>,
    %c0_53 = arith.constant 0 : index
    %c1_54 = arith.constant 1 : index
    %c0_55 = arith.constant 0 : index
    %55 = vector.load %arg14[%c0_53, %c1_54, %c0_55] : memref<2x16x128xf32, #tpu.memory_space<vmem>>, vector<2x15x128xf32>
    %56 = vector.extract_strided_slice %46 {offsets = [0, 0, 0], sizes = [2, 15, 128], strides = [1, 1, 1]} : vector<2x16x384xf32> to vector<2x15x128xf32>
    %57 = arith.addf %55, %56 : vector<2x15x128xf32>
    %c0_56 = arith.constant 0 : index
    %c1_57 = arith.constant 1 : index
    %c0_58 = arith.constant 0 : index
    %58 = vector.load %arg14[%c0_56, %c1_57, %c0_58] : memref<2x16x128xf32, #tpu.memory_space<vmem>>, vector<2x15x128xf32>
    tpu.vector_store %arg14[%c0_56, %c1_57, %c0_58], %57 {strides = array<i32>} : memref<2x16x128xf32, #tpu.memory_space<vmem>>, vector<2x15x128xf32>,
    %c0_59 = arith.constant 0 : index
    %c0_60 = arith.constant 0 : index
    %c0_61 = arith.constant 0 : index
    %59 = vector.load %arg14[%c0_59, %c0_60, %c0_61] : memref<2x16x128xf32, #tpu.memory_space<vmem>>, vector<2x15x128xf32>
    %60 = vector.extract_strided_slice %46 {offsets = [0, 1, 256], sizes = [2, 15, 128], strides = [1, 1, 1]} : vector<2x16x384xf32> to vector<2x15x128xf32>
    %61 = arith.addf %59, %60 : vector<2x15x128xf32>
    %c0_62 = arith.constant 0 : index
    %c0_63 = arith.constant 0 : index
    %c0_64 = arith.constant 0 : index
    %62 = vector.load %arg14[%c0_62, %c0_63, %c0_64] : memref<2x16x128xf32, #tpu.memory_space<vmem>>, vector<2x15x128xf32>
    tpu.vector_store %arg14[%c0_62, %c0_63, %c0_64], %61 {strides = array<i32>} : memref<2x16x128xf32, #tpu.memory_space<vmem>>, vector<2x15x128xf32>,
    %c0_65 = arith.constant 0 : index
    %c0_66 = arith.constant 0 : index
    %c0_67 = arith.constant 0 : index
    %63 = vector.load %arg14[%c0_65, %c0_66, %c0_67] : memref<2x16x128xf32, #tpu.memory_space<vmem>>, vector<2x16x128xf32>
    %cst_68 = arith.constant 0.000000e+00 : f32
    %64 = vector.broadcast %cst_68 : f32 to vector<2x16x128xf32>
    %65 = arith.cmpf ogt, %63, %64 : vector<2x16x128xf32>
    %66 = vector.broadcast %0 : f32 to vector<2x16x128xf32>
    %67 = arith.mulf %66, %63 : vector<2x16x128xf32>
    %68 = arith.select %65, %63, %67 : vector<2x16x128xi1>, vector<2x16x128xf32>
    %69 = arith.truncf %68 : vector<2x16x128xf32> to vector<2x16x128xbf16>
    %70 = vector.shape_cast %69 : vector<2x16x128xbf16> to vector<32x128xbf16>
    %c0_69 = arith.constant 0 : index
    %c0_70 = arith.constant 0 : index
    %71 = vector.load %arg7[%c0_69, %c0_70] : memref<128x3072xbf16, #tpu.memory_space<vmem>>, vector<128x3072xbf16>
    %cst_71 = arith.constant dense<0.000000e+00> : vector<32x3072xf32>
    %72 = tpu.matmul %70, %71, %cst_71 {dimension_numbers = #tpu.dot_dimension_numbers<[1], [0], [0], [1], [0, 0, 1, 1], [], []>} : vector<32x128xbf16>, vector<128x3072xbf16>, vector<32x3072xf32> -> vector<32x3072xf32>
    %73 = vector.shape_cast %72 : vector<32x3072xf32> to vector<2x16x3072xf32>
    %74 = vector.extract_strided_slice %73 {offsets = [0, 0, 1024], sizes = [2, 16, 1024], strides = [1, 1, 1]} : vector<2x16x3072xf32> to vector<2x16x1024xf32>
    %c0_72 = arith.constant 0 : index
    %c0_73 = arith.constant 0 : index
    %75 = vector.load %arg8[%c0_72, %c0_73] : memref<1x1024xf32, #tpu.memory_space<vmem>>, vector<1x1024xf32>
    %76 = vector.shape_cast %75 : vector<1x1024xf32> to vector<1x1x1024xf32>
    %77 = vector.broadcast %76 : vector<1x1x1024xf32> to vector<2x16x1024xf32>
    %78 = arith.addf %74, %77 : vector<2x16x1024xf32>
    %c0_74 = arith.constant 0 : index
    %c0_75 = arith.constant 0 : index
    %c0_76 = arith.constant 0 : index
    %79 = vector.load %arg15[%c0_74, %c0_75, %c0_76] : memref<2x16x1024xf32, #tpu.memory_space<vmem>>, vector<2x16x1024xf32>
    tpu.vector_store %arg15[%c0_74, %c0_75, %c0_76], %78 {strides = array<i32>} : memref<2x16x1024xf32, #tpu.memory_space<vmem>>, vector<2x16x1024xf32>,
    %c0_77 = arith.constant 0 : index
    %c1_78 = arith.constant 1 : index
    %c0_79 = arith.constant 0 : index
    %80 = vector.load %arg15[%c0_77, %c1_78, %c0_79] : memref<2x16x1024xf32, #tpu.memory_space<vmem>>, vector<2x15x1024xf32>
    %81 = vector.extract_strided_slice %73 {offsets = [0, 0, 0], sizes = [2, 15, 1024], strides = [1, 1, 1]} : vector<2x16x3072xf32> to vector<2x15x1024xf32>
    %82 = arith.addf %80, %81 : vector<2x15x1024xf32>
    %c0_80 = arith.constant 0 : index
    %c1_81 = arith.constant 1 : index
    %c0_82 = arith.constant 0 : index
    %83 = vector.load %arg15[%c0_80, %c1_81, %c0_82] : memref<2x16x1024xf32, #tpu.memory_space<vmem>>, vector<2x15x1024xf32>
    tpu.vector_store %arg15[%c0_80, %c1_81, %c0_82], %82 {strides = array<i32>} : memref<2x16x1024xf32, #tpu.memory_space<vmem>>, vector<2x15x1024xf32>,
    %c0_83 = arith.constant 0 : index
    %c0_84 = arith.constant 0 : index
    %c0_85 = arith.constant 0 : index
    %84 = vector.load %arg15[%c0_83, %c0_84, %c0_85] : memref<2x16x1024xf32, #tpu.memory_space<vmem>>, vector<2x15x1024xf32>
    %85 = vector.extract_strided_slice %73 {offsets = [0, 1, 2048], sizes = [2, 15, 1024], strides = [1, 1, 1]} : vector<2x16x3072xf32> to vector<2x15x1024xf32>
    %86 = arith.addf %84, %85 : vector<2x15x1024xf32>
    %c0_86 = arith.constant 0 : index
    %c0_87 = arith.constant 0 : index
    %c0_88 = arith.constant 0 : index
    %87 = vector.load %arg15[%c0_86, %c0_87, %c0_88] : memref<2x16x1024xf32, #tpu.memory_space<vmem>>, vector<2x15x1024xf32>
    tpu.vector_store %arg15[%c0_86, %c0_87, %c0_88], %86 {strides = array<i32>} : memref<2x16x1024xf32, #tpu.memory_space<vmem>>, vector<2x15x1024xf32>,
    %c0_89 = arith.constant 0 : index
    %c0_90 = arith.constant 0 : index
    %c0_91 = arith.constant 0 : index
    %88 = vector.load %arg15[%c0_89, %c0_90, %c0_91] : memref<2x16x1024xf32, #tpu.memory_space<vmem>>, vector<2x16x1024xf32>
    %cst_92 = arith.constant 0.000000e+00 : f32
    %89 = vector.broadcast %cst_92 : f32 to vector<2x16x1024xf32>
    %90 = arith.cmpf ogt, %88, %89 : vector<2x16x1024xf32>
    %91 = vector.broadcast %0 : f32 to vector<2x16x1024xf32>
    %92 = arith.mulf %91, %88 : vector<2x16x1024xf32>
    %93 = arith.select %90, %88, %92 : vector<2x16x1024xi1>, vector<2x16x1024xf32>
    %94 = arith.truncf %93 : vector<2x16x1024xf32> to vector<2x16x1024xbf16>
    %95 = vector.shape_cast %94 : vector<2x16x1024xbf16> to vector<32x1024xbf16>
    %c0_93 = arith.constant 0 : index
    %c0_94 = arith.constant 0 : index
    %96 = vector.load %arg9[%c0_93, %c0_94] : memref<1024x384xbf16, #tpu.memory_space<vmem>>, vector<1024x384xbf16>
    %cst_95 = arith.constant dense<0.000000e+00> : vector<32x384xf32>
    %97 = tpu.matmul %95, %96, %cst_95 {dimension_numbers = #tpu.dot_dimension_numbers<[1], [0], [0], [1], [0, 0, 1, 1], [], []>} : vector<32x1024xbf16>, vector<1024x384xbf16>, vector<32x384xf32> -> vector<32x384xf32>
    %98 = vector.shape_cast %97 : vector<32x384xf32> to vector<2x16x384xf32>
    %99 = vector.extract_strided_slice %98 {offsets = [0, 0, 128], sizes = [2, 16, 128], strides = [1, 1, 1]} : vector<2x16x384xf32> to vector<2x16x128xf32>
    %c0_96 = arith.constant 0 : index
    %c0_97 = arith.constant 0 : index
    %100 = vector.load %arg10[%c0_96, %c0_97] : memref<1x128xf32, #tpu.memory_space<vmem>>, vector<1x128xf32>
    %101 = vector.shape_cast %100 : vector<1x128xf32> to vector<1x1x128xf32>
    %102 = vector.broadcast %101 : vector<1x1x128xf32> to vector<2x16x128xf32>
    %103 = arith.addf %99, %102 : vector<2x16x128xf32>
    %c0_98 = arith.constant 0 : index
    %c0_99 = arith.constant 0 : index
    %c0_100 = arith.constant 0 : index
    %104 = vector.load %arg12[%c0_98, %c0_99, %c0_100] : memref<2x16x128xf32, #tpu.memory_space<vmem>>, vector<2x16x128xf32>
    tpu.vector_store %arg12[%c0_98, %c0_99, %c0_100], %103 {strides = array<i32>} : memref<2x16x128xf32, #tpu.memory_space<vmem>>, vector<2x16x128xf32>,
    %c0_101 = arith.constant 0 : index
    %c1_102 = arith.constant 1 : index
    %c0_103 = arith.constant 0 : index
    %105 = vector.load %arg12[%c0_101, %c1_102, %c0_103] : memref<2x16x128xf32, #tpu.memory_space<vmem>>, vector<2x15x128xf32>
    %106 = vector.extract_strided_slice %98 {offsets = [0, 0, 0], sizes = [2, 15, 128], strides = [1, 1, 1]} : vector<2x16x384xf32> to vector<2x15x128xf32>
    %107 = arith.addf %105, %106 : vector<2x15x128xf32>
    %c0_104 = arith.constant 0 : index
    %c1_105 = arith.constant 1 : index
    %c0_106 = arith.constant 0 : index
    %108 = vector.load %arg12[%c0_104, %c1_105, %c0_106] : memref<2x16x128xf32, #tpu.memory_space<vmem>>, vector<2x15x128xf32>
    tpu.vector_store %arg12[%c0_104, %c1_105, %c0_106], %107 {strides = array<i32>} : memref<2x16x128xf32, #tpu.memory_space<vmem>>, vector<2x15x128xf32>,
    %c0_107 = arith.constant 0 : index
    %c0_108 = arith.constant 0 : index
    %c0_109 = arith.constant 0 : index
    %109 = vector.load %arg12[%c0_107, %c0_108, %c0_109] : memref<2x16x128xf32, #tpu.memory_space<vmem>>, vector<2x15x128xf32>
    %110 = vector.extract_strided_slice %98 {offsets = [0, 1, 256], sizes = [2, 15, 128], strides = [1, 1, 1]} : vector<2x16x384xf32> to vector<2x15x128xf32>
    %111 = arith.addf %109, %110 : vector<2x15x128xf32>
    %c0_110 = arith.constant 0 : index
    %c0_111 = arith.constant 0 : index
    %c0_112 = arith.constant 0 : index
    %112 = vector.load %arg12[%c0_110, %c0_111, %c0_112] : memref<2x16x128xf32, #tpu.memory_space<vmem>>, vector<2x15x128xf32>
    tpu.vector_store %arg12[%c0_110, %c0_111, %c0_112], %111 {strides = array<i32>} : memref<2x16x128xf32, #tpu.memory_space<vmem>>, vector<2x15x128xf32>,
    return
  }
  func.func @transform_0(%arg0: i32) -> (i32, i32, i32) {
    %c0_i32 = arith.constant 0 : i32
    %c0_i32_0 = arith.constant 0 : i32
    %c0_i32_1 = arith.constant 0 : i32
    return %arg0, %c0_i32, %c0_i32_0 : i32, i32, i32
  }
  func.func @transform_1(%arg0: i32) -> (i32, i32) {
    %c0_i32 = arith.constant 0 : i32
    %c0_i32_0 = arith.constant 0 : i32
    %c0_i32_1 = arith.constant 0 : i32
    return %c0_i32, %c0_i32_0 : i32, i32
  }
  func.func @transform_2(%arg0: i32) -> (i32, i32) {
    %c0_i32 = arith.constant 0 : i32
    %c0_i32_0 = arith.constant 0 : i32
    %c0_i32_1 = arith.constant 0 : i32
    return %c0_i32, %c0_i32_0 : i32, i32
  }
  func.func @transform_3(%arg0: i32) -> (i32, i32) {
    %c0_i32 = arith.constant 0 : i32
    %c0_i32_0 = arith.constant 0 : i32
    %c0_i32_1 = arith.constant 0 : i32
    return %c0_i32, %c0_i32_0 : i32, i32
  }
  func.func @transform_4(%arg0: i32) -> (i32, i32) {
    %c0_i32 = arith.constant 0 : i32
    %c0_i32_0 = arith.constant 0 : i32
    %c0_i32_1 = arith.constant 0 : i32
    return %c0_i32, %c0_i32_0 : i32, i32
  }
  func.func @transform_5(%arg0: i32) -> (i32, i32) {
    %c0_i32 = arith.constant 0 : i32
    %c0_i32_0 = arith.constant 0 : i32
    %c0_i32_1 = arith.constant 0 : i32
    return %c0_i32, %c0_i32_0 : i32, i32
  }
  func.func @transform_6(%arg0: i32) -> (i32, i32) {
    %c0_i32 = arith.constant 0 : i32
    %c0_i32_0 = arith.constant 0 : i32
    %c0_i32_1 = arith.constant 0 : i32
    return %c0_i32, %c0_i32_0 : i32, i32
  }
  func.func @transform_7(%arg0: i32) -> (i32, i32) {
    %c0_i32 = arith.constant 0 : i32
    %c0_i32_0 = arith.constant 0 : i32
    %c0_i32_1 = arith.constant 0 : i32
    return %c0_i32, %c0_i32_0 : i32, i32
  }
  func.func @transform_8(%arg0: i32) -> (i32, i32) {
    %c0_i32 = arith.constant 0 : i32
    %c0_i32_0 = arith.constant 0 : i32
    %c0_i32_1 = arith.constant 0 : i32
    return %c0_i32, %c0_i32_0 : i32, i32
  }
  func.func @transform_9(%arg0: i32) -> (i32, i32) {
    %c0_i32 = arith.constant 0 : i32
    %c0_i32_0 = arith.constant 0 : i32
    %c0_i32_1 = arith.constant 0 : i32
    return %c0_i32, %c0_i32_0 : i32, i32
  }
  func.func @transform_10(%arg0: i32) -> i32 {
    %c0_i32 = arith.constant 0 : i32
    %c0_i32_0 = arith.constant 0 : i32
    return %c0_i32 : i32
  }
  func.func @transform_11(%arg0: i32) -> (i32, i32, i32) {
    %c0_i32 = arith.constant 0 : i32
    %c0_i32_0 = arith.constant 0 : i32
    %c0_i32_1 = arith.constant 0 : i32
    return %arg0, %c0_i32, %c0_i32_0 : i32, i32, i32
  }
}

</mosaic_0001>

<llo_original>
// kernel: tpu_custom_call.1
$region0: #{tpu_custom_call.1}
  #allocation0 [shape = 'u32[]', space=smem, size = 0x4, offset = 0x4, fixed_abs, tag = 'smem constant byte address 0x4 - core index']
  #allocation1 [shape = 'u32[144,128]{1,0:T(1,128)}', space=vmem, size = 0x12000, scoped, tag = 'internal scratch']
  #allocation2 [shape = 'f32[2,16,128]{2,1,0:T(8,128)}', space=vmem, size = 0x4000, scoped, tag = 'scratch operand']
  #allocation3 [shape = 'f32[2,16,128]{2,1,0:T(8,128)}', space=vmem, size = 0x4000, scoped, tag = 'scratch operand']
  #allocation4 [shape = 'f32[2,16,1024]{2,1,0:T(8,128)}', space=vmem, size = 0x20000, scoped, tag = 'scratch operand']
  #allocation5 [shape = 'f32[1]{0:T(128)S(6)}', space=smem, size = 0x200, scoped, tag = 'scoped memory for tpu_custom_call.1']
  %s0 = inlined_call_operand.hbm [shape: bf16[2,16,64], index: 0, kind: input, shape index: {}]
  %s1 = inlined_call_operand.hbm [shape: bf16[64,768], index: 1, kind: input, shape index: {}]
  %s2 = inlined_call_operand.vmem [shape: f32[1,128], index: 2, kind: input, shape index: {}]
  %s3 = inlined_call_operand.vmem [shape: f32[1,128], index: 3, kind: input, shape index: {}]
  %s4 = inlined_call_operand.hbm [shape: bf16[128,384], index: 4, kind: input, shape index: {}]
  %s5 = inlined_call_operand.vmem [shape: f32[1,128], index: 5, kind: input, shape index: {}]
  %s6 = inlined_call_operand.hbm [shape: bf16[128,3072], index: 6, kind: input, shape index: {}]
  %s7 = inlined_call_operand.vmem [shape: f32[1,1024], index: 7, kind: input, shape index: {}]
  %s8 = inlined_call_operand.hbm [shape: bf16[1024,384], index: 8, kind: input, shape index: {}]
  %s9 = inlined_call_operand.vmem [shape: f32[1,128], index: 9, kind: input, shape index: {}]
  %s10 = inlined_call_operand.<no memory space> [shape: f32[1], index: 10, kind: input, shape index: {}]
  %s11 = inlined_call_operand.hbm [shape: f32[2,16,128], index: 11, kind: output, shape index: {}]
  %s12 = sld [smem:[#allocation0]]
  $region74: #{tpu_custom_call.1} parent=0
    _
  %s14 = ssub.s32 1, %s12
  %s15 = scalar_select 0, %s14, %s12
  %16 = sst [smem:[#allocation5]] %s10
  $region1: #{tpu_custom_call.1} parent=0
    #allocation6 [shape = 'u8[8192]{0}', space=vmem, size = 0x2000, scoped, tag = 'input window, operand 0, single buffered']
    #allocation7 [shape = 's32[1]{0}', space=sflag, size = 0x4, scoped, tag = 'scoped memory for tpu_custom_call.1']
    #allocation8 [shape = 's32[1]{0}', space=sflag, size = 0x4, scoped, tag = 'scoped memory for tpu_custom_call.1']
    #allocation9 [shape = 'u8[98304]{0}', space=vmem, size = 0x18000, scoped, tag = 'input window, operand 1, single buffered']
    #allocation10 [shape = 's32[1]{0}', space=sflag, size = 0x4, scoped, tag = 'scoped memory for tpu_custom_call.1']
    #allocation11 [shape = 'u8[98304]{0}', space=vmem, size = 0x18000, scoped, tag = 'input window, operand 4, single buffered']
    #allocation12 [shape = 'u8[786432]{0}', space=vmem, size = 0xc0000, scoped, tag = 'input window, operand 6, single buffered']
    #allocation13 [shape = 's32[1]{0}', space=sflag, size = 0x4, scoped, tag = 'scoped memory for tpu_custom_call.1']
    #allocation14 [shape = 'u8[786432]{0}', space=vmem, size = 0xc0000, scoped, tag = 'input window, operand 8, single buffered']
    #allocation15 [shape = 'u8[16384]{0}', space=vmem, size = 0x4000, scoped, tag = 'output window, operand 0, single buffered']
    %17 = vsyncpa [#allocation7], 0
    %18 = vsyncpa [#allocation10], 0
    %19 = vsyncpa [#allocation13], 0
    %20 = vsyncpa [#allocation8], 0
    // Predicated region
    $region2: #{tpu_custom_call.1} parent=1 // pred_check
      _
    $region3: #{tpu_custom_call.1} parent=1 // pred_check_branch
      %22 = sbr.rel (0) target = $region5
    $region4: #{tpu_custom_call.1} parent=1 // pred_region
      %s24 = ssub.s32 256, 256
      %25 = vsyncadd [#allocation7], %s24
      %s26 = sshll.u32 [#allocation6], 4
      %s27 = int_to_ptr.vmem [resolvable:$true] %s26
      %32 = dma.hbm_to_vmem [thread:$0]  %s0, 256, %s27, [#allocation7], 64, 64, 4
    $region5: #{tpu_custom_call.1} parent=1 // pred_fallthru
      _
    // Predicated region
    $region6: #{tpu_custom_call.1} parent=1 // pred_check
      _
    $region7: #{tpu_custom_call.1} parent=1 // pred_check_branch
      %34 = sbr.rel (0) target = $region9
    $region8: #{tpu_custom_call.1} parent=1 // pred_region
      %s36 = ssub.s32 3072, 3072
      %37 = vsyncadd [#allocation10], %s36
      %s38 = sshll.u32 [#allocation9], 4
      %s39 = int_to_ptr.vmem [resolvable:$true] %s38
      %44 = dma.hbm_to_vmem [thread:$0]  %s1, 3072, %s39, [#allocation10], 384, 384, 24
    $region9: #{tpu_custom_call.1} parent=1 // pred_fallthru
      _
    // Predicated region
    $region10: #{tpu_custom_call.1} parent=1 // pred_check
      _
    $region11: #{tpu_custom_call.1} parent=1 // pred_check_branch
      %46 = sbr.rel (0) target = $region13
    $region12: #{tpu_custom_call.1} parent=1 // pred_region
      _
    $region13: #{tpu_custom_call.1} parent=1 // pred_fallthru
      _
    // Predicated region
    $region14: #{tpu_custom_call.1} parent=1 // pred_check
      _
    $region15: #{tpu_custom_call.1} parent=1 // pred_check_branch
      %48 = sbr.rel (0) target = $region17
    $region16: #{tpu_custom_call.1} parent=1 // pred_region
      _
    $region17: #{tpu_custom_call.1} parent=1 // pred_fallthru
      _
    // Predicated region
    $region18: #{tpu_custom_call.1} parent=1 // pred_check
      _
    $region19: #{tpu_custom_call.1} parent=1 // pred_check_branch
      %50 = sbr.rel (0) target = $region21
    $region20: #{tpu_custom_call.1} parent=1 // pred_region
      %s52 = ssub.s32 3072, 3072
      %53 = vsyncadd [#allocation10], %s52
      %s54 = sshll.u32 [#allocation11], 4
      %s55 = int_to_ptr.vmem [resolvable:$true] %s54
      %60 = dma.hbm_to_vmem [thread:$0]  %s4, 3072, %s55, [#allocation10], 192, 192, 12
    $region21: #{tpu_custom_call.1} parent=1 // pred_fallthru
      _
    // Predicated region
    $region22: #{tpu_custom_call.1} parent=1 // pred_check
      _
    $region23: #{tpu_custom_call.1} parent=1 // pred_check_branch
      %62 = sbr.rel (0) target = $region25
    $region24: #{tpu_custom_call.1} parent=1 // pred_region
      _
    $region25: #{tpu_custom_call.1} parent=1 // pred_fallthru
      _
    // Predicated region
    $region26: #{tpu_custom_call.1} parent=1 // pred_check
      _
    $region27: #{tpu_custom_call.1} parent=1 // pred_check_branch
      %64 = sbr.rel (0) target = $region29
    $region28: #{tpu_custom_call.1} parent=1 // pred_region
      %s66 = ssub.s32 24576, 24576
      %67 = vsyncadd [#allocation13], %s66
      %s68 = sshll.u32 [#allocation12], 4
      %s69 = int_to_ptr.vmem [resolvable:$true] %s68
      %74 = dma.hbm_to_vmem [thread:$0]  %s6, 24576, %s69, [#allocation13], 1536, 1536, 96
    $region29: #{tpu_custom_call.1} parent=1 // pred_fallthru
      _
    // Predicated region
    $region30: #{tpu_custom_call.1} parent=1 // pred_check
      _
    $region31: #{tpu_custom_call.1} parent=1 // pred_check_branch
      %76 = sbr.rel (0) target = $region33
    $region32: #{tpu_custom_call.1} parent=1 // pred_region
      _
    $region33: #{tpu_custom_call.1} parent=1 // pred_fallthru
      _
    // Predicated region
    $region34: #{tpu_custom_call.1} parent=1 // pred_check
      _
    $region35: #{tpu_custom_call.1} parent=1 // pred_check_branch
      %78 = sbr.rel (0) target = $region37
    $region36: #{tpu_custom_call.1} parent=1 // pred_region
      %s80 = ssub.s32 24576, 24576
      %81 = vsyncadd [#allocation13], %s80
      %s82 = sshll.u32 [#allocation14], 4
      %s83 = int_to_ptr.vmem [resolvable:$true] %s82
      %88 = dma.hbm_to_vmem [thread:$0]  %s8, 24576, %s83, [#allocation13], 192, 192, 12
    $region37: #{tpu_custom_call.1} parent=1 // pred_fallthru
      _
    // Predicated region
    $region38: #{tpu_custom_call.1} parent=1 // pred_check
      _
    $region39: #{tpu_custom_call.1} parent=1 // pred_check_branch
      %90 = sbr.rel (0) target = $region41
    $region40: #{tpu_custom_call.1} parent=1 // pred_region
      _
    $region41: #{tpu_custom_call.1} parent=1 // pred_fallthru
      _
    // Predicated region
    $region42: #{tpu_custom_call.1} parent=1 // pred_check
      _
    $region43: #{tpu_custom_call.1} parent=1 // pred_check_branch
      %92 = sbr.rel (0) target = $region45
    $region44: #{tpu_custom_call.1} parent=1 // pred_region
      _
    $region45: #{tpu_custom_call.1} parent=1 // pred_fallthru
      _
    // Predicated region
    $region46: #{tpu_custom_call.1} parent=1 // pred_check
      _
    $region47: #{tpu_custom_call.1} parent=1 // pred_check_branch
      %94 = sbr.rel (0) target = $region49
    $region48: #{tpu_custom_call.1} parent=1 // pred_region
      %95 = dma.done [#allocation7], 256
    $region49: #{tpu_custom_call.1} parent=1 // pred_fallthru
      _
    // Predicated region
    $region50: #{tpu_custom_call.1} parent=1 // pred_check
      _
    $region51: #{tpu_custom_call.1} parent=1 // pred_check_branch
      %97 = sbr.rel (0) target = $region53
    $region52: #{tpu_custom_call.1} parent=1 // pred_region
      %98 = dma.done [#allocation10], 3072
    $region53: #{tpu_custom_call.1} parent=1 // pred_fallthru
      _
    // Predicated region
    $region54: #{tpu_custom_call.1} parent=1 // pred_check
      _
    $region55: #{tpu_custom_call.1} parent=1 // pred_check_branch
      %100 = sbr.rel (0) target = $region57
    $region56: #{tpu_custom_call.1} parent=1 // pred_region
      %101 = dma.done [#allocation10], 3072
    $region57: #{tpu_custom_call.1} parent=1 // pred_fallthru
      _
    // Predicated region
    $region58: #{tpu_custom_call.1} parent=1 // pred_check
      _
    $region59: #{tpu_custom_call.1} parent=1 // pred_check_branch
      %103 = sbr.rel (0) target = $region61
    $region60: #{tpu_custom_call.1} parent=1 // pred_region
      %104 = dma.done [#allocation13], 24576
    $region61: #{tpu_custom_call.1} parent=1 // pred_fallthru
      _
    // Predicated region
    $region62: #{tpu_custom_call.1} parent=1 // pred_check
      _
    $region63: #{tpu_custom_call.1} parent=1 // pred_check_branch
      %106 = sbr.rel (0) target = $region65
    $region64: #{tpu_custom_call.1} parent=1 // pred_region
      %107 = dma.done [#allocation13], 24576
    $region65: #{tpu_custom_call.1} parent=1 // pred_fallthru
      _
    %s109 = sld [smem:[#allocation5]]
    %v110 = vld [vmem:[#allocation6] sm:$0xf]
    %v111 = vld [vmem:[#allocation6 + $0x4] sm:$0xf]
    %v112 = vld [vmem:[#allocation6 + $0x8] sm:$0xf]
    %v113 = vld [vmem:[#allocation6 + $0xc] sm:$0xf]
    %v114 = vld [vmem:[#allocation9] sm:$0xff]
    %v115 = vld [vmem:[#allocation9 + $0x8] sm:$0xff]
    %v116 = vld [vmem:[#allocation9 + $0x10] sm:$0xff]
    %v117 = vld [vmem:[#allocation9 + $0x18] sm:$0xff]
    %v118 = vld [vmem:[#allocation9 + $0x20] sm:$0xff]
    %v119 = vld [vmem:[#allocation9 + $0x28] sm:$0xff]
    %v120 = vld [vmem:[#allocation9 + $0x30] sm:$0xff]
    %v121 = vld [vmem:[#allocation9 + $0x38] sm:$0xff]
    %v122 = vld [vmem:[#allocation9 + $0x40] sm:$0xff]
    %v123 = vld [vmem:[#allocation9 + $0x48] sm:$0xff]
    %v124 = vld [vmem:[#allocation9 + $0x50] sm:$0xff]
    %v125 = vld [vmem:[#allocation9 + $0x58] sm:$0xff]
    %v126 = vld [vmem:[#allocation9 + $0x60] sm:$0xff]
    %v127 = vld [vmem:[#allocation9 + $0x68] sm:$0xff]
    %v128 = vld [vmem:[#allocation9 + $0x70] sm:$0xff]
    %v129 = vld [vmem:[#allocation9 + $0x78] sm:$0xff]
    %v130 = vld [vmem:[#allocation9 + $0x80] sm:$0xff]
    %v131 = vld [vmem:[#allocation9 + $0x88] sm:$0xff]
    %v132 = vld [vmem:[#allocation9 + $0x90] sm:$0xff]
    %v133 = vld [vmem:[#allocation9 + $0x98] sm:$0xff]
    %v134 = vld [vmem:[#allocation9 + $0xa0] sm:$0xff]
    %v135 = vld [vmem:[#allocation9 + $0xa8] sm:$0xff]
    %v136 = vld [vmem:[#allocation9 + $0xb0] sm:$0xff]
    %v137 = vld [vmem:[#allocation9 + $0xb8] sm:$0xff]
    %v142 = vunpack.c.l.b16 %v110
    %v143 = vunpack.c.l.b16 %v111
    %v144 = vunpack.c.l.b16 %v112
    %v145 = vunpack.c.l.b16 %v113
    %v146 = vpack.c.b16 %v143, %v142
    %v147 = vpack.c.b16 %v145, %v144
    %v172 = vunpack.c.l.b16 %v114
    %v173 = vunpack.c.h.b16 %v114
    %v174 = vunpack.c.l.b16 %v115
    %v175 = vunpack.c.h.b16 %v115
    %v176 = vunpack.c.l.b16 %v116
    %v177 = vunpack.c.h.b16 %v116
    %v178 = vunpack.c.l.b16 %v117
    %v179 = vunpack.c.h.b16 %v117
    %v180 = vunpack.c.l.b16 %v118
    %v181 = vunpack.c.h.b16 %v118
    %v182 = vunpack.c.l.b16 %v119
    %v183 = vunpack.c.h.b16 %v119
    %v184 = vunpack.c.l.b16 %v120
    %v185 = vunpack.c.h.b16 %v120
    %v186 = vunpack.c.l.b16 %v121
    %v187 = vunpack.c.h.b16 %v121
    %v188 = vunpack.c.l.b16 %v122
    %v189 = vunpack.c.h.b16 %v122
    %v190 = vunpack.c.l.b16 %v123
    %v191 = vunpack.c.h.b16 %v123
    %v192 = vunpack.c.l.b16 %v124
    %v193 = vunpack.c.h.b16 %v124
    %v194 = vunpack.c.l.b16 %v125
    %v195 = vunpack.c.h.b16 %v125
    %v196 = vunpack.c.l.b16 %v126
    %v197 = vunpack.c.h.b16 %v126
    %v198 = vunpack.c.l.b16 %v127
    %v199 = vunpack.c.h.b16 %v127
    %v200 = vunpack.c.l.b16 %v128
    %v201 = vunpack.c.h.b16 %v128
    %v202 = vunpack.c.l.b16 %v129
    %v203 = vunpack.c.h.b16 %v129
    %v204 = vunpack.c.l.b16 %v130
    %v205 = vunpack.c.h.b16 %v130
    %v206 = vunpack.c.l.b16 %v131
    %v207 = vunpack.c.h.b16 %v131
    %v208 = vunpack.c.l.b16 %v132
    %v209 = vunpack.c.h.b16 %v132
    %v210 = vunpack.c.l.b16 %v133
    %v211 = vunpack.c.h.b16 %v133
    %v212 = vunpack.c.l.b16 %v134
    %v213 = vunpack.c.h.b16 %v134
    %v214 = vunpack.c.l.b16 %v135
    %v215 = vunpack.c.h.b16 %v135
    %v216 = vunpack.c.l.b16 %v136
    %v217 = vunpack.c.h.b16 %v136
    %v218 = vunpack.c.l.b16 %v137
    %v219 = vunpack.c.h.b16 %v137
    %v220 = vpack.c.b16 %v178, %v172
    %v221 = vpack.c.b16 %v179, %v173
    %v222 = vpack.c.b16 %v180, %v174
    %v223 = vpack.c.b16 %v181, %v175
    %v224 = vpack.c.b16 %v182, %v176
    %v225 = vpack.c.b16 %v183, %v177
    %v226 = vpack.c.b16 %v190, %v184
    %v227 = vpack.c.b16 %v191, %v185
    %v228 = vpack.c.b16 %v192, %v186
    %v229 = vpack.c.b16 %v193, %v187
    %v230 = vpack.c.b16 %v194, %v188
    %v231 = vpack.c.b16 %v195, %v189
    %v232 = vpack.c.b16 %v202, %v196
    %v233 = vpack.c.b16 %v203, %v197
    %v234 = vpack.c.b16 %v204, %v198
    %v235 = vpack.c.b16 %v205, %v199
    %v236 = vpack.c.b16 %v206, %v200
    %v237 = vpack.c.b16 %v207, %v201
    %v238 = vpack.c.b16 %v214, %v208
    %v239 = vpack.c.b16 %v215, %v209
    %v240 = vpack.c.b16 %v216, %v210
    %v241 = vpack.c.b16 %v217, %v211
    %v242 = vpack.c.b16 %v218, %v212
    %v243 = vpack.c.b16 %v219, %v213
    %vm268 = vcmask 523264
    %v270 = vsel %vm268, %v146, 0
    %v273 = vsel %vm268, %v147, 0
    %275 = vmatprep.subr.bf16.mxu0 %v221
    %276 = vmatpush1.bf16.msra.mxu0 %v220
    %277 = vmatprep.subr.bf16.mxu0 %v227
    %278 = vmatpush1.bf16.msra.mxu0 %v226
    %279 = vmatprep.subr.bf16.mxu0 %v233
    %280 = vmatpush1.bf16.msra.mxu0 %v232
    %281 = vmatprep.subr.bf16.mxu0 %v239
    %282 = vmatpush1.bf16.msra.mxu0 %v238
    %283 = vmatprep.subr.bf16.mxu0 0
    %284 = vmatpush1.bf16.msra.mxu0 0
    %285 = vmatprep.subr.bf16.mxu0 0
    %286 = vmatpush1.bf16.msra.mxu0 0
    %287 = vmatprep.subr.bf16.mxu0 0
    %288 = vmatpush1.bf16.msra.mxu0 0
    %289 = vmatprep.subr.bf16.mxu0 0
    %290 = vmatpush1.bf16.msra.mxu0 0
    %291 = vmatprep.subr.bf16.mxu0 0
    %292 = vmatpush1.bf16.msra.mxu0 0
    %293 = vmatprep.subr.bf16.mxu0 0
    %294 = vmatpush1.bf16.msra.mxu0 0
    %295 = vmatprep.subr.bf16.mxu0 0
    %296 = vmatpush1.bf16.msra.mxu0 0
    %297 = vmatprep.subr.bf16.mxu0 0
    %298 = vmatpush1.bf16.msra.mxu0 0
    %299 = vmatprep.subr.bf16.mxu0 0
    %300 = vmatpush1.bf16.msra.mxu0 0
    %301 = vmatprep.subr.bf16.mxu0 0
    %302 = vmatpush1.bf16.msra.mxu0 0
    %303 = vmatprep.subr.bf16.mxu0 0
    %304 = vmatpush1.bf16.msra.mxu0 0
    %305 = vmatprep.subr.bf16.mxu0 0
    %306 = vmatpush1.bf16.msra.mxu0 0
    %307 = vmatprep.mubr.bf16.mxu0 0
    %308 = vmatmul.mubr.bf16.gmra.mrb[0].mxu0 %v270
    %v309 = vpop.f32.mrb[0].mxu0
    %v310 = vadd.f32 0.0, %v309
    %v311 = vpop.f32.mrb[0].mxu0
    %v312 = vadd.f32 0.0, %v311
    %v313 = vpop.f32.mrb[0].mxu0
    %v314 = vadd.f32 0.0, %v313
    %v315 = vpop.f32.mrb[0].mxu0
    %v316 = vadd.f32 0.0, %v315
    %317 = vmatprep.mubr.bf16.mxu0 0
    %318 = vmatmul.mubr.bf16.gmra.mrb[0].mxu0 %v273
    %v319 = vpop.f32.mrb[0].mxu0
    %v320 = vadd.f32 0.0, %v319
    %v321 = vpop.f32.mrb[0].mxu0
    %v322 = vadd.f32 0.0, %v321
    %v323 = vpop.f32.mrb[0].mxu0
    %v324 = vadd.f32 0.0, %v323
    %v325 = vpop.f32.mrb[0].mxu0
    %v326 = vadd.f32 0.0, %v325
    %327 = vdwg.mxu0
    %328 = vmatprep.subr.bf16.mxu0 %v223
    %329 = vmatpush1.bf16.msra.mxu0 %v222
    %330 = vmatprep.subr.bf16.mxu0 %v229
    %331 = vmatpush1.bf16.msra.mxu0 %v228
    %332 = vmatprep.subr.bf16.mxu0 %v235
    %333 = vmatpush1.bf16.msra.mxu0 %v234
    %334 = vmatprep.subr.bf16.mxu0 %v241
    %335 = vmatpush1.bf16.msra.mxu0 %v240
    %336 = vmatprep.subr.bf16.mxu0 0
    %337 = vmatpush1.bf16.msra.mxu0 0
    %338 = vmatprep.subr.bf16.mxu0 0
    %339 = vmatpush1.bf16.msra.mxu0 0
    %340 = vmatprep.subr.bf16.mxu0 0
    %341 = vmatpush1.bf16.msra.mxu0 0
    %342 = vmatprep.subr.bf16.mxu0 0
    %343 = vmatpush1.bf16.msra.mxu0 0
    %344 = vmatprep.subr.bf16.mxu0 0
    %345 = vmatpush1.bf16.msra.mxu0 0
    %346 = vmatprep.subr.bf16.mxu0 0
    %347 = vmatpush1.bf16.msra.mxu0 0
    %348 = vmatprep.subr.bf16.mxu0 0
    %349 = vmatpush1.bf16.msra.mxu0 0
    %350 = vmatprep.subr.bf16.mxu0 0
    %351 = vmatpush1.bf16.msra.mxu0 0
    %352 = vmatprep.subr.bf16.mxu0 0
    %353 = vmatpush1.bf16.msra.mxu0 0
    %354 = vmatprep.subr.bf16.mxu0 0
    %355 = vmatpush1.bf16.msra.mxu0 0
    %356 = vmatprep.subr.bf16.mxu0 0
    %357 = vmatpush1.bf16.msra.mxu0 0
    %358 = vmatprep.subr.bf16.mxu0 0
    %359 = vmatpush1.bf16.msra.mxu0 0
    %360 = vmatprep.mubr.bf16.mxu0 0
    %361 = vmatmul.mubr.bf16.gmra.mrb[0].mxu0 %v270
    %v362 = vpop.f32.mrb[0].mxu0
    %v363 = vadd.f32 0.0, %v362
    %v364 = vpop.f32.mrb[0].mxu0
    %v365 = vadd.f32 0.0, %v364
    %v366 = vpop.f32.mrb[0].mxu0
    %v367 = vadd.f32 0.0, %v366
    %v368 = vpop.f32.mrb[0].mxu0
    %v369 = vadd.f32 0.0, %v368
    %370 = vmatprep.mubr.bf16.mxu0 0
    %371 = vmatmul.mubr.bf16.gmra.mrb[0].mxu0 %v273
    %v372 = vpop.f32.mrb[0].mxu0
    %v373 = vadd.f32 0.0, %v372
    %v374 = vpop.f32.mrb[0].mxu0
    %v375 = vadd.f32 0.0, %v374
    %v376 = vpop.f32.mrb[0].mxu0
    %v377 = vadd.f32 0.0, %v376
    %v378 = vpop.f32.mrb[0].mxu0
    %v379 = vadd.f32 0.0, %v378
    %380 = vdwg.mxu0
    %381 = vmatprep.subr.bf16.mxu0 %v225
    %382 = vmatpush1.bf16.msra.mxu0 %v224
    %383 = vmatprep.subr.bf16.mxu0 %v231
    %384 = vmatpush1.bf16.msra.mxu0 %v230
    %385 = vmatprep.subr.bf16.mxu0 %v237
    %386 = vmatpush1.bf16.msra.mxu0 %v236
    %387 = vmatprep.subr.bf16.mxu0 %v243
    %388 = vmatpush1.bf16.msra.mxu0 %v242
    %389 = vmatprep.subr.bf16.mxu0 0
    %390 = vmatpush1.bf16.msra.mxu0 0
    %391 = vmatprep.subr.bf16.mxu0 0
    %392 = vmatpush1.bf16.msra.mxu0 0
    %393 = vmatprep.subr.bf16.mxu0 0
    %394 = vmatpush1.bf16.msra.mxu0 0
    %395 = vmatprep.subr.bf16.mxu0 0
    %396 = vmatpush1.bf16.msra.mxu0 0
    %397 = vmatprep.subr.bf16.mxu0 0
    %398 = vmatpush1.bf16.msra.mxu0 0
    %399 = vmatprep.subr.bf16.mxu0 0
    %400 = vmatpush1.bf16.msra.mxu0 0
    %401 = vmatprep.subr.bf16.mxu0 0
    %402 = vmatpush1.bf16.msra.mxu0 0
    %403 = vmatprep.subr.bf16.mxu0 0
    %404 = vmatpush1.bf16.msra.mxu0 0
    %405 = vmatprep.subr.bf16.mxu0 0
    %406 = vmatpush1.bf16.msra.mxu0 0
    %407 = vmatprep.subr.bf16.mxu0 0
    %408 = vmatpush1.bf16.msra.mxu0 0
    %409 = vmatprep.subr.bf16.mxu0 0
    %410 = vmatpush1.bf16.msra.mxu0 0
    %411 = vmatprep.subr.bf16.mxu0 0
    %412 = vmatpush1.bf16.msra.mxu0 0
    %413 = vmatprep.mubr.bf16.mxu0 0
    %414 = vmatmul.mubr.bf16.gmra.mrb[0].mxu0 %v270
    %v415 = vpop.f32.mrb[0].mxu0
    %v416 = vadd.f32 0.0, %v415
    %v417 = vpop.f32.mrb[0].mxu0
    %v418 = vadd.f32 0.0, %v417
    %v419 = vpop.f32.mrb[0].mxu0
    %v420 = vadd.f32 0.0, %v419
    %v421 = vpop.f32.mrb[0].mxu0
    %v422 = vadd.f32 0.0, %v421
    %423 = vmatprep.mubr.bf16.mxu0 0
    %424 = vmatmul.mubr.bf16.gmra.mrb[0].mxu0 %v273
    %v425 = vpop.f32.mrb[0].mxu0
    %v426 = vadd.f32 0.0, %v425
    %v427 = vpop.f32.mrb[0].mxu0
    %v428 = vadd.f32 0.0, %v427
    %v429 = vpop.f32.mrb[0].mxu0
    %v430 = vadd.f32 0.0, %v429
    %v431 = vpop.f32.mrb[0].mxu0
    %v432 = vadd.f32 0.0, %v431
    %433 = vdwg.mxu0
    %v434 = vld [vmem:[%s2] sm:$0x1]
    %v436 = vlaneseq
    %v437 = vshrl.u32 %v436, 7
    %v438 = vsub.s32 0, %v437
    %v439 = vrot.slane %v434, %v438
    %v441 = vadd.f32 %v312, %v439
    %v442 = vadd.f32 %v316, %v439
    %v443 = vadd.f32 %v322, %v439
    %v444 = vadd.f32 %v326, %v439
    %445 = vst [vmem:[#allocation2] sm:$0xff] %v441
    %446 = vst [vmem:[#allocation2 + $0x8] sm:$0xff] %v442
    %447 = vst [vmem:[#allocation2 + $0x10] sm:$0xff] %v443
    %448 = vst [vmem:[#allocation2 + $0x18] sm:$0xff] %v444
    %v449 = vld [vmem:[#allocation2 + $0x1] sm:$0xff]
    %v450 = vld [vmem:[#allocation2 + $0x9] sm:$0x7f]
    %v451 = vld [vmem:[#allocation2 + $0x11] sm:$0xff]
    %v452 = vld [vmem:[#allocation2 + $0x19] sm:$0x7f]
    %v453 = vadd.f32 %v449, %v310
    %v454 = vadd.f32 %v450, %v314
    %v455 = vadd.f32 %v451, %v320
    %v456 = vadd.f32 %v452, %v324
    %457 = vst [vmem:[#allocation2 + $0x1] sm:$0xff] %v453
    %458 = vst [vmem:[#allocation2 + $0x9] sm:$0x7f] %v454
    %459 = vst [vmem:[#allocation2 + $0x11] sm:$0xff] %v455
    %460 = vst [vmem:[#allocation2 + $0x19] sm:$0x7f] %v456
    %v461 = vld [vmem:[#allocation2] sm:$0xff]
    %v462 = vld [vmem:[#allocation2 + $0x8] sm:$0x7f]
    %v463 = vld [vmem:[#allocation2 + $0x10] sm:$0xff]
    %v464 = vld [vmem:[#allocation2 + $0x18] sm:$0x7f]
    %vm469 = vcmask 1046528
    %v470 = vrot.slane %v363, 1
    %v471 = vrot.slane %v367, 1
    %v472 = vsel %vm469, %v470, %v471
    %v473 = vrot.slane %v373, 1
    %v474 = vrot.slane %v377, 1
    %v475 = vsel %vm469, %v473, %v474
    %v480 = vadd.f32 %v461, %v472
    %v481 = vadd.f32 %v462, %v471
    %v482 = vadd.f32 %v463, %v475
    %v483 = vadd.f32 %v464, %v474
    %484 = vst [vmem:[#allocation2] sm:$0xff] %v480
    %485 = vst [vmem:[#allocation2 + $0x8] sm:$0x7f] %v481
    %486 = vst [vmem:[#allocation2 + $0x10] sm:$0xff] %v482
    %487 = vst [vmem:[#allocation2 + $0x18] sm:$0x7f] %v483
    %v488 = vld [vmem:[%s3] sm:$0x1]
    %v490 = vlaneseq
    %v491 = vshrl.u32 %v490, 7
    %v492 = vsub.s32 0, %v491
    %v493 = vrot.slane %v488, %v492
    %v495 = vadd.f32 %v416, %v493
    %v496 = vadd.f32 %v420, %v493
    %v497 = vadd.f32 %v426, %v493
    %v498 = vadd.f32 %v430, %v493
    %499 = vst [vmem:[#allocation3] sm:$0xff] %v495
    %500 = vst [vmem:[#allocation3 + $0x8] sm:$0xff] %v496
    %501 = vst [vmem:[#allocation3 + $0x10] sm:$0xff] %v497
    %502 = vst [vmem:[#allocation3 + $0x18] sm:$0xff] %v498
    %v503 = vld [vmem:[#allocation3 + $0x1] sm:$0xff]
    %v504 = vld [vmem:[#allocation3 + $0x9] sm:$0x7f]
    %v505 = vld [vmem:[#allocation3 + $0x11] sm:$0xff]
    %v506 = vld [vmem:[#allocation3 + $0x19] sm:$0x7f]
    %v507 = vadd.f32 %v503, %v365
    %v508 = vadd.f32 %v504, %v369
    %v509 = vadd.f32 %v505, %v375
    %v510 = vadd.f32 %v506, %v379
    %511 = vst [vmem:[#allocation3 + $0x1] sm:$0xff] %v507
    %512 = vst [vmem:[#allocation3 + $0x9] sm:$0x7f] %v508
    %513 = vst [vmem:[#allocation3 + $0x11] sm:$0xff] %v509
    %514 = vst [vmem:[#allocation3 + $0x19] sm:$0x7f] %v510
    %v515 = vld [vmem:[#allocation3] sm:$0xff]
    %v516 = vld [vmem:[#allocation3 + $0x8] sm:$0x7f]
    %v517 = vld [vmem:[#allocation3 + $0x10] sm:$0xff]
    %v518 = vld [vmem:[#allocation3 + $0x18] sm:$0x7f]
    %v523 = vrot.slane %v418, 1
    %v524 = vrot.slane %v422, 1
    %v525 = vsel %vm469, %v523, %v524
    %v526 = vrot.slane %v428, 1
    %v527 = vrot.slane %v432, 1
    %v528 = vsel %vm469, %v526, %v527
    %v533 = vadd.f32 %v515, %v525
    %v534 = vadd.f32 %v516, %v524
    %v535 = vadd.f32 %v517, %v528
    %v536 = vadd.f32 %v518, %v527
    %537 = vst [vmem:[#allocation3] sm:$0xff] %v533
    %538 = vst [vmem:[#allocation3 + $0x8] sm:$0x7f] %v534
    %539 = vst [vmem:[#allocation3 + $0x10] sm:$0xff] %v535
    %540 = vst [vmem:[#allocation3 + $0x18] sm:$0x7f] %v536
    %v541 = vld [vmem:[#allocation2] sm:$0xff]
    %v542 = vld [vmem:[#allocation2 + $0x8] sm:$0xff]
    %v543 = vld [vmem:[#allocation2 + $0x10] sm:$0xff]
    %v544 = vld [vmem:[#allocation2 + $0x18] sm:$0xff]
    %vm545 = vcmp.gt.f32.partialorder %v541, 0.0
    %vm546 = vcmp.gt.f32.partialorder %v542, 0.0
    %vm547 = vcmp.gt.f32.partialorder %v543, 0.0
    %vm548 = vcmp.gt.f32.partialorder %v544, 0.0
    %v549 = vstv %s109
    %v550 = vmul.f32 %v549, %v541
    %v551 = vmul.f32 %v549, %v542
    %v552 = vmul.f32 %v549, %v543
    %v553 = vmul.f32 %v549, %v544
    %v554 = vsel %vm545, %v541, %v550
    %v555 = vsel %vm546, %v542, %v551
    %v556 = vsel %vm547, %v543, %v552
    %v557 = vsel %vm548, %v544, %v553
    %v558 = vpack.c.bf16 %v555, %v554
    %v559 = vpack.c.bf16 %v557, %v556
    %v560 = vld [vmem:[#allocation11] sm:$0xff]
    %v561 = vld [vmem:[#allocation11 + $0x8] sm:$0xf]
    %v562 = vld [vmem:[#allocation11 + $0xc] sm:$0xff]
    %v563 = vld [vmem:[#allocation11 + $0x14] sm:$0xf]
    %v564 = vld [vmem:[#allocation11 + $0x18] sm:$0xff]
    %v565 = vld [vmem:[#allocation11 + $0x20] sm:$0xf]
    %v566 = vld [vmem:[#allocation11 + $0x24] sm:$0xff]
    %v567 = vld [vmem:[#allocation11 + $0x2c] sm:$0xf]
    %v568 = vld [vmem:[#allocation11 + $0x30] sm:$0xff]
    %v569 = vld [vmem:[#allocation11 + $0x38] sm:$0xf]
    %v570 = vld [vmem:[#allocation11 + $0x3c] sm:$0xff]
    %v571 = vld [vmem:[#allocation11 + $0x44] sm:$0xf]
    %v572 = vld [vmem:[#allocation11 + $0x48] sm:$0xff]
    %v573 = vld [vmem:[#allocation11 + $0x50] sm:$0xf]
    %v574 = vld [vmem:[#allocation11 + $0x54] sm:$0xff]
    %v575 = vld [vmem:[#allocation11 + $0x5c] sm:$0xf]
    %v576 = vld [vmem:[#allocation11 + $0x60] sm:$0xff]
    %v577 = vld [vmem:[#allocation11 + $0x68] sm:$0xf]
    %v578 = vld [vmem:[#allocation11 + $0x6c] sm:$0xff]
    %v579 = vld [vmem:[#allocation11 + $0x74] sm:$0xf]
    %v580 = vld [vmem:[#allocation11 + $0x78] sm:$0xff]
    %v581 = vld [vmem:[#allocation11 + $0x80] sm:$0xf]
    %v582 = vld [vmem:[#allocation11 + $0x84] sm:$0xff]
    %v583 = vld [vmem:[#allocation11 + $0x8c] sm:$0xf]
    %v584 = vld [vmem:[#allocation11 + $0x90] sm:$0xff]
    %v585 = vld [vmem:[#allocation11 + $0x98] sm:$0xf]
    %v586 = vld [vmem:[#allocation11 + $0x9c] sm:$0xff]
    %v587 = vld [vmem:[#allocation11 + $0xa4] sm:$0xf]
    %v588 = vld [vmem:[#allocation11 + $0xa8] sm:$0xff]
    %v589 = vld [vmem:[#allocation11 + $0xb0] sm:$0xf]
    %v590 = vld [vmem:[#allocation11 + $0xb4] sm:$0xff]
    %v591 = vld [vmem:[#allocation11 + $0xbc] sm:$0xf]
    %v624 = vunpack.c.l.b16 %v560
    %v625 = vunpack.c.h.b16 %v560
    %v626 = vunpack.c.l.b16 %v561
    %v627 = vunpack.c.l.b16 %v562
    %v628 = vunpack.c.h.b16 %v562
    %v629 = vunpack.c.l.b16 %v563
    %v630 = vunpack.c.l.b16 %v564
    %v631 = vunpack.c.h.b16 %v564
    %v632 = vunpack.c.l.b16 %v565
    %v633 = vunpack.c.l.b16 %v566
    %v634 = vunpack.c.h.b16 %v566
    %v635 = vunpack.c.l.b16 %v567
    %v636 = vunpack.c.l.b16 %v568
    %v637 = vunpack.c.h.b16 %v568
    %v638 = vunpack.c.l.b16 %v569
    %v639 = vunpack.c.l.b16 %v570
    %v640 = vunpack.c.h.b16 %v570
    %v641 = vunpack.c.l.b16 %v571
    %v642 = vunpack.c.l.b16 %v572
    %v643 = vunpack.c.h.b16 %v572
    %v644 = vunpack.c.l.b16 %v573
    %v645 = vunpack.c.l.b16 %v574
    %v646 = vunpack.c.h.b16 %v574
    %v647 = vunpack.c.l.b16 %v575
    %v648 = vunpack.c.l.b16 %v576
    %v649 = vunpack.c.h.b16 %v576
    %v650 = vunpack.c.l.b16 %v577
    %v651 = vunpack.c.l.b16 %v578
    %v652 = vunpack.c.h.b16 %v578
    %v653 = vunpack.c.l.b16 %v579
    %v654 = vunpack.c.l.b16 %v580
    %v655 = vunpack.c.h.b16 %v580
    %v656 = vunpack.c.l.b16 %v581
    %v657 = vunpack.c.l.b16 %v582
    %v658 = vunpack.c.h.b16 %v582
    %v659 = vunpack.c.l.b16 %v583
    %v660 = vunpack.c.l.b16 %v584
    %v661 = vunpack.c.h.b16 %v584
    %v662 = vunpack.c.l.b16 %v585
    %v663 = vunpack.c.l.b16 %v586
    %v664 = vunpack.c.h.b16 %v586
    %v665 = vunpack.c.l.b16 %v587
    %v666 = vunpack.c.l.b16 %v588
    %v667 = vunpack.c.h.b16 %v588
    %v668 = vunpack.c.l.b16 %v589
    %v669 = vunpack.c.l.b16 %v590
    %v670 = vunpack.c.h.b16 %v590
    %v671 = vunpack.c.l.b16 %v591
    %v672 = vpack.c.b16 %v627, %v624
    %v673 = vpack.c.b16 %v628, %v625
    %v674 = vpack.c.b16 %v629, %v626
    %v675 = vpack.c.b16 %v633, %v630
    %v676 = vpack.c.b16 %v634, %v631
    %v677 = vpack.c.b16 %v635, %v632
    %v678 = vpack.c.b16 %v639, %v636
    %v679 = vpack.c.b16 %v640, %v637
    %v680 = vpack.c.b16 %v641, %v638
    %v681 = vpack.c.b16 %v645, %v642
    %v682 = vpack.c.b16 %v646, %v643
    %v683 = vpack.c.b16 %v647, %v644
    %v684 = vpack.c.b16 %v651, %v648
    %v685 = vpack.c.b16 %v652, %v649
    %v686 = vpack.c.b16 %v653, %v650
    %v687 = vpack.c.b16 %v657, %v654
    %v688 = vpack.c.b16 %v658, %v655
    %v689 = vpack.c.b16 %v659, %v656
    %v690 = vpack.c.b16 %v663, %v660
    %v691 = vpack.c.b16 %v664, %v661
    %v692 = vpack.c.b16 %v665, %v662
    %v693 = vpack.c.b16 %v669, %v666
    %v694 = vpack.c.b16 %v670, %v667
    %v695 = vpack.c.b16 %v671, %v668
    %720 = vmatprep.subr.bf16.mxu0 %v673
    %721 = vmatpush1.bf16.msra.mxu0 %v672
    %722 = vmatprep.subr.bf16.mxu0 %v676
    %723 = vmatpush1.bf16.msra.mxu0 %v675
    %724 = vmatprep.subr.bf16.mxu0 %v679
    %725 = vmatpush1.bf16.msra.mxu0 %v678
    %726 = vmatprep.subr.bf16.mxu0 %v682
    %727 = vmatpush1.bf16.msra.mxu0 %v681
    %728 = vmatprep.subr.bf16.mxu0 %v685
    %729 = vmatpush1.bf16.msra.mxu0 %v684
    %730 = vmatprep.subr.bf16.mxu0 %v688
    %731 = vmatpush1.bf16.msra.mxu0 %v687
    %732 = vmatprep.subr.bf16.mxu0 %v691
    %733 = vmatpush1.bf16.msra.mxu0 %v690
    %734 = vmatprep.subr.bf16.mxu0 %v694
    %735 = vmatpush1.bf16.msra.mxu0 %v693
    %736 = vmatprep.subr.bf16.mxu0 0
    %737 = vmatpush1.bf16.msra.mxu0 0
    %738 = vmatprep.subr.bf16.mxu0 0
    %739 = vmatpush1.bf16.msra.mxu0 0
    %740 = vmatprep.subr.bf16.mxu0 0
    %741 = vmatpush1.bf16.msra.mxu0 0
    %742 = vmatprep.subr.bf16.mxu0 0
    %743 = vmatpush1.bf16.msra.mxu0 0
    %744 = vmatprep.subr.bf16.mxu0 0
    %745 = vmatpush1.bf16.msra.mxu0 0
    %746 = vmatprep.subr.bf16.mxu0 0
    %747 = vmatpush1.bf16.msra.mxu0 0
    %748 = vmatprep.subr.bf16.mxu0 0
    %749 = vmatpush1.bf16.msra.mxu0 0
    %750 = vmatprep.subr.bf16.mxu0 0
    %751 = vmatpush1.bf16.msra.mxu0 0
    %752 = vmatprep.mubr.bf16.mxu0 0
    %753 = vmatmul.mubr.bf16.gmra.mrb[0].mxu0 %v558
    %v754 = vpop.f32.mrb[0].mxu0
    %v755 = vadd.f32 0.0, %v754
    %v756 = vpop.f32.mrb[0].mxu0
    %v757 = vadd.f32 0.0, %v756
    %v758 = vpop.f32.mrb[0].mxu0
    %v759 = vadd.f32 0.0, %v758
    %v760 = vpop.f32.mrb[0].mxu0
    %v761 = vadd.f32 0.0, %v760
    %762 = vmatprep.mubr.bf16.mxu0 0
    %763 = vmatmul.mubr.bf16.gmra.mrb[0].mxu0 %v559
    %v764 = vpop.f32.mrb[0].mxu0
    %v765 = vadd.f32 0.0, %v764
    %v766 = vpop.f32.mrb[0].mxu0
    %v767 = vadd.f32 0.0, %v766
    %v768 = vpop.f32.mrb[0].mxu0
    %v769 = vadd.f32 0.0, %v768
    %v770 = vpop.f32.mrb[0].mxu0
    %v771 = vadd.f32 0.0, %v770
    %772 = vdwg.mxu0
    %773 = vmatprep.subr.bf16.mxu0 0
    %774 = vmatpush1.bf16.msra.mxu0 %v674
    %775 = vmatprep.subr.bf16.mxu0 0
    %776 = vmatpush1.bf16.msra.mxu0 %v677
    %777 = vmatprep.subr.bf16.mxu0 0
    %778 = vmatpush1.bf16.msra.mxu0 %v680
    %779 = vmatprep.subr.bf16.mxu0 0
    %780 = vmatpush1.bf16.msra.mxu0 %v683
    %781 = vmatprep.subr.bf16.mxu0 0
    %782 = vmatpush1.bf16.msra.mxu0 %v686
    %783 = vmatprep.subr.bf16.mxu0 0
    %784 = vmatpush1.bf16.msra.mxu0 %v689
    %785 = vmatprep.subr.bf16.mxu0 0
    %786 = vmatpush1.bf16.msra.mxu0 %v692
    %787 = vmatprep.subr.bf16.mxu0 0
    %788 = vmatpush1.bf16.msra.mxu0 %v695
    %789 = vmatprep.subr.bf16.mxu0 0
    %790 = vmatpush1.bf16.msra.mxu0 0
    %791 = vmatprep.subr.bf16.mxu0 0
    %792 = vmatpush1.bf16.msra.mxu0 0
    %793 = vmatprep.subr.bf16.mxu0 0
    %794 = vmatpush1.bf16.msra.mxu0 0
    %795 = vmatprep.subr.bf16.mxu0 0
    %796 = vmatpush1.bf16.msra.mxu0 0
    %797 = vmatprep.subr.bf16.mxu0 0
    %798 = vmatpush1.bf16.msra.mxu0 0
    %799 = vmatprep.subr.bf16.mxu0 0
    %800 = vmatpush1.bf16.msra.mxu0 0
    %801 = vmatprep.subr.bf16.mxu0 0
    %802 = vmatpush1.bf16.msra.mxu0 0
    %803 = vmatprep.subr.bf16.mxu0 0
    %804 = vmatpush1.bf16.msra.mxu0 0
    %805 = vmatprep.mubr.bf16.mxu0 0
    %806 = vmatmul.mubr.bf16.gmra.mrb[0].mxu0 %v558
    %v807 = vpop.f32.mrb[0].mxu0
    %v808 = vadd.f32 0.0, %v807
    %v809 = vpop.f32.mrb[0].mxu0
    %v810 = vpop.f32.mrb[0].mxu0
    %v811 = vadd.f32 0.0, %v810
    %v812 = vpop.f32.mrb[0].mxu0
    %813 = vmatprep.mubr.bf16.mxu0 0
    %814 = vmatmul.mubr.bf16.gmra.mrb[0].mxu0 %v559
    %v815 = vpop.f32.mrb[0].mxu0
    %v816 = vadd.f32 0.0, %v815
    %v817 = vpop.f32.mrb[0].mxu0
    %v818 = vpop.f32.mrb[0].mxu0
    %v819 = vadd.f32 0.0, %v818
    %v820 = vpop.f32.mrb[0].mxu0
    %821 = vdwg.mxu0
    %v822 = vld [vmem:[%s5] sm:$0x1]
    %v824 = vlaneseq
    %v825 = vshrl.u32 %v824, 7
    %v826 = vsub.s32 0, %v825
    %v827 = vrot.slane %v822, %v826
    %v829 = vadd.f32 %v757, %v827
    %v830 = vadd.f32 %v761, %v827
    %v831 = vadd.f32 %v767, %v827
    %v832 = vadd.f32 %v771, %v827
    %v833 = vld [vmem:[#allocation3] sm:$0xff]
    %v834 = vld [vmem:[#allocation3 + $0x8] sm:$0xff]
    %v835 = vld [vmem:[#allocation3 + $0x10] sm:$0xff]
    %v836 = vld [vmem:[#allocation3 + $0x18] sm:$0xff]
    %v837 = vadd.f32 %v833, %v829
    %v838 = vadd.f32 %v834, %v830
    %v839 = vadd.f32 %v835, %v831
    %v840 = vadd.f32 %v836, %v832
    %841 = vst [vmem:[#allocation3] sm:$0xff] %v837
    %842 = vst [vmem:[#allocation3 + $0x8] sm:$0xff] %v838
    %843 = vst [vmem:[#allocation3 + $0x10] sm:$0xff] %v839
    %844 = vst [vmem:[#allocation3 + $0x18] sm:$0xff] %v840
    %v845 = vld [vmem:[#allocation3 + $0x1] sm:$0xff]
    %v846 = vld [vmem:[#allocation3 + $0x9] sm:$0x7f]
    %v847 = vld [vmem:[#allocation3 + $0x11] sm:$0xff]
    %v848 = vld [vmem:[#allocation3 + $0x19] sm:$0x7f]
    %v849 = vadd.f32 %v845, %v755
    %v850 = vadd.f32 %v846, %v759
    %v851 = vadd.f32 %v847, %v765
    %v852 = vadd.f32 %v848, %v769
    %853 = vst [vmem:[#allocation3 + $0x1] sm:$0xff] %v849
    %854 = vst [vmem:[#allocation3 + $0x9] sm:$0x7f] %v850
    %855 = vst [vmem:[#allocation3 + $0x11] sm:$0xff] %v851
    %856 = vst [vmem:[#allocation3 + $0x19] sm:$0x7f] %v852
    %v857 = vld [vmem:[#allocation3] sm:$0xff]
    %v858 = vld [vmem:[#allocation3 + $0x8] sm:$0x7f]
    %v859 = vld [vmem:[#allocation3 + $0x10] sm:$0xff]
    %v860 = vld [vmem:[#allocation3 + $0x18] sm:$0x7f]
    %v865 = vrot.slane %v808, 1
    %v866 = vrot.slane %v811, 1
    %v867 = vsel %vm469, %v865, %v866
    %v868 = vrot.slane %v816, 1
    %v869 = vrot.slane %v819, 1
    %v870 = vsel %vm469, %v868, %v869
    %v875 = vadd.f32 %v857, %v867
    %v876 = vadd.f32 %v858, %v866
    %v877 = vadd.f32 %v859, %v870
    %v878 = vadd.f32 %v860, %v869
    %879 = vst [vmem:[#allocation3] sm:$0xff] %v875
    %880 = vst [vmem:[#allocation3 + $0x8] sm:$0x7f] %v876
    %881 = vst [vmem:[#allocation3 + $0x10] sm:$0xff] %v877
    %882 = vst [vmem:[#allocation3 + $0x18] sm:$0x7f] %v878
    %v883 = vld [vmem:[#allocation3] sm:$0xff]
    %v884 = vld [vmem:[#allocation3 + $0x8] sm:$0xff]
    %v885 = vld [vmem:[#allocation3 + $0x10] sm:$0xff]
    %v886 = vld [vmem:[#allocation3 + $0x18] sm:$0xff]
    %vm887 = vcmp.gt.f32.partialorder %v883, 0.0
    %vm888 = vcmp.gt.f32.partialorder %v884, 0.0
    %vm889 = vcmp.gt.f32.partialorder %v885, 0.0
    %vm890 = vcmp.gt.f32.partialorder %v886, 0.0
    %v891 = vmul.f32 %v549, %v883
    %v892 = vmul.f32 %v549, %v884
    %v893 = vmul.f32 %v549, %v885
    %v894 = vmul.f32 %v549, %v886
    %v895 = vsel %vm887, %v883, %v891
    %v896 = vsel %vm888, %v884, %v892
    %v897 = vsel %vm889, %v885, %v893
    %v898 = vsel %vm890, %v886, %v894
    %v899 = vpack.c.bf16 %v896, %v895
    %v900 = vpack.c.bf16 %v898, %v897
    %v901 = vld [vmem:[#allocation12] sm:$0xff]
    %v902 = vld [vmem:[#allocation12 + $0x8] sm:$0xff]
    %v903 = vld [vmem:[#allocation12 + $0x10] sm:$0xff]
    %v904 = vld [vmem:[#allocation12 + $0x18] sm:$0xff]
    %v905 = vld [vmem:[#allocation12 + $0x20] sm:$0xff]
    %v906 = vld [vmem:[#allocation12 + $0x28] sm:$0xff]
    %v907 = vld [vmem:[#allocation12 + $0x30] sm:$0xff]
    %v908 = vld [vmem:[#allocation12 + $0x38] sm:$0xff]
    %v909 = vld [vmem:[#allocation12 + $0x40] sm:$0xff]
    %v910 = vld [vmem:[#allocation12 + $0x48] sm:$0xff]
    %v911 = vld [vmem:[#allocation12 + $0x50] sm:$0xff]
    %v912 = vld [vmem:[#allocation12 + $0x58] sm:$0xff]
    %v913 = vld [vmem:[#allocation12 + $0x60] sm:$0xff]
    %v914 = vld [vmem:[#allocation12 + $0x68] sm:$0xff]
    %v915 = vld [vmem:[#allocation12 + $0x70] sm:$0xff]
    %v916 = vld [vmem:[#allocation12 + $0x78] sm:$0xff]
    %v917 = vld [vmem:[#allocation12 + $0x80] sm:$0xff]
    %v918 = vld [vmem:[#allocation12 + $0x88] sm:$0xff]
    %v919 = vld [vmem:[#allocation12 + $0x90] sm:$0xff]
    %v920 = vld [vmem:[#allocation12 + $0x98] sm:$0xff]
    %v921 = vld [vmem:[#allocation12 + $0xa0] sm:$0xff]
    %v922 = vld [vmem:[#allocation12 + $0xa8] sm:$0xff]
    %v923 = vld [vmem:[#allocation12 + $0xb0] sm:$0xff]
    %v924 = vld [vmem:[#allocation12 + $0xb8] sm:$0xff]
    %v925 = vld [vmem:[#allocation12 + $0xc0] sm:$0xff]
    %v926 = vld [vmem:[#allocation12 + $0xc8] sm:$0xff]
    %v927 = vld [vmem:[#allocation12 + $0xd0] sm:$0xff]
    %v928 = vld [vmem:[#allocation12 + $0xd8] sm:$0xff]
    %v929 = vld [vmem:[#allocation12 + $0xe0] sm:$0xff]
    %v930 = vld [vmem:[#allocation12 + $0xe8] sm:$0xff]
    %v931 = vld [vmem:[#allocation12 + $0xf0] sm:$0xff]
    %v932 = vld [vmem:[#allocation12 + $0xf8] sm:$0xff]
    %v933 = vld [vmem:[#allocation12 + $0x100] sm:$0xff]
    %v934 = vld [vmem:[#allocation12 + $0x108] sm:$0xff]
    %v935 = vld [vmem:[#allocation12 + $0x110] sm:$0xff]
    %v936 = vld [vmem:[#allocation12 + $0x118] sm:$0xff]
    %v937 = vld [vmem:[#allocation12 + $0x120] sm:$0xff]
    %v938 = vld [vmem:[#allocation12 + $0x128] sm:$0xff]
    %v939 = vld [vmem:[#allocation12 + $0x130] sm:$0xff]
    %v940 = vld [vmem:[#allocation12 + $0x138] sm:$0xff]
    %v941 = vld [vmem:[#allocation12 + $0x140] sm:$0xff]
    %v942 = vld [vmem:[#allocation12 + $0x148] sm:$0xff]
    %v943 = vld [vmem:[#allocation12 + $0x150] sm:$0xff]
    %v944 = vld [vmem:[#allocation12 + $0x158] sm:$0xff]
    %v945 = vld [vmem:[#allocation12 + $0x160] sm:$0xff]
    %v946 = vld [vmem:[#allocation12 + $0x168] sm:$0xff]
    %v947 = vld [vmem:[#allocation12 + $0x170] sm:$0xff]
    %v948 = vld [vmem:[#allocation12 + $0x178] sm:$0xff]
    %v949 = vld [vmem:[#allocation12 + $0x180] sm:$0xff]
    %v950 = vld [vmem:[#allocation12 + $0x188] sm:$0xff]
    %v951 = vld [vmem:[#allocation12 + $0x190] sm:$0xff]
    %v952 = vld [vmem:[#allocation12 + $0x198] sm:$0xff]
    %v953 = vld [vmem:[#allocation12 + $0x1a0] sm:$0xff]
    %v954 = vld [vmem:[#allocation12 + $0x1a8] sm:$0xff]
    %v955 = vld [vmem:[#allocation12 + $0x1b0] sm:$0xff]
    %v956 = vld [vmem:[#allocation12 + $0x1b8] sm:$0xff]
    %v957 = vld [vmem:[#allocation12 + $0x1c0] sm:$0xff]
    %v958 = vld [vmem:[#allocation12 + $0x1c8] sm:$0xff]
    %v959 = vld [vmem:[#allocation12 + $0x1d0] sm:$0xff]
    %v960 = vld [vmem:[#allocation12 + $0x1d8] sm:$0xff]
    %v961 = vld [vmem:[#allocation12 + $0x1e0] sm:$0xff]
    %v962 = vld [vmem:[#allocation12 + $0x1e8] sm:$0xff]
    %v963 = vld [vmem:[#allocation12 + $0x1f0] sm:$0xff]
    %v964 = vld [vmem:[#allocation12 + $0x1f8] sm:$0xff]
    %v965 = vld [vmem:[#allocation12 + $0x200] sm:$0xff]
    %v966 = vld [vmem:[#allocation12 + $0x208] sm:$0xff]
    %v967 = vld [vmem:[#allocation12 + $0x210] sm:$0xff]
    %v968 = vld [vmem:[#allocation12 + $0x218] sm:$0xff]
    %v969 = vld [vmem:[#allocation12 + $0x220] sm:$0xff]
    %v970 = vld [vmem:[#allocation12 + $0x228] sm:$0xff]
    %v971 = vld [vmem:[#allocation12 + $0x230] sm:$0xff]
    %v972 = vld [vmem:[#allocation12 + $0x238] sm:$0xff]
    %v973 = vld [vmem:[#allocation12 + $0x240] sm:$0xff]
    %v974 = vld [vmem:[#allocation12 + $0x248] sm:$0xff]
    %v975 = vld [vmem:[#allocation12 + $0x250] sm:$0xff]
    %v976 = vld [vmem:[#allocation12 + $0x258] sm:$0xff]
    %v977 = vld [vmem:[#allocation12 + $0x260] sm:$0xff]
    %v978 = vld [vmem:[#allocation12 + $0x268] sm:$0xff]
    %v979 = vld [vmem:[#allocation12 + $0x270] sm:$0xff]
    %v980 = vld [vmem:[#allocation12 + $0x278] sm:$0xff]
    %v981 = vld [vmem:[#allocation12 + $0x280] sm:$0xff]
    %v982 = vld [vmem:[#allocation12 + $0x288] sm:$0xff]
    %v983 = vld [vmem:[#allocation12 + $0x290] sm:$0xff]
    %v984 = vld [vmem:[#allocation12 + $0x298] sm:$0xff]
    %v985 = vld [vmem:[#allocation12 + $0x2a0] sm:$0xff]
    %v986 = vld [vmem:[#allocation12 + $0x2a8] sm:$0xff]
    %v987 = vld [vmem:[#allocation12 + $0x2b0] sm:$0xff]
    %v988 = vld [vmem:[#allocation12 + $0x2b8] sm:$0xff]
    %v989 = vld [vmem:[#allocation12 + $0x2c0] sm:$0xff]
    %v990 = vld [vmem:[#allocation12 + $0x2c8] sm:$0xff]
    %v991 = vld [vmem:[#allocation12 + $0x2d0] sm:$0xff]
    %v992 = vld [vmem:[#allocation12 + $0x2d8] sm:$0xff]
    %v993 = vld [vmem:[#allocation12 + $0x2e0] sm:$0xff]
    %v994 = vld [vmem:[#allocation12 + $0x2e8] sm:$0xff]
    %v995 = vld [vmem:[#allocation12 + $0x2f0] sm:$0xff]
    %v996 = vld [vmem:[#allocation12 + $0x2f8] sm:$0xff]
    %v997 = vld [vmem:[#allocation12 + $0x300] sm:$0xff]
    %v998 = vld [vmem:[#allocation12 + $0x308] sm:$0xff]
    %v999 = vld [vmem:[#allocation12 + $0x310] sm:$0xff]
    %v1000 = vld [vmem:[#allocation12 + $0x318] sm:$0xff]
    %v1001 = vld [vmem:[#allocation12 + $0x320] sm:$0xff]
    %v1002 = vld [vmem:[#allocation12 + $0x328] sm:$0xff]
    %v1003 = vld [vmem:[#allocation12 + $0x330] sm:$0xff]
    %v1004 = vld [vmem:[#allocation12 + $0x338] sm:$0xff]
    %v1005 = vld [vmem:[#allocation12 + $0x340] sm:$0xff]
    %v1006 = vld [vmem:[#allocation12 + $0x348] sm:$0xff]
    %v1007 = vld [vmem:[#allocation12 + $0x350] sm:$0xff]
    %v1008 = vld [vmem:[#allocation12 + $0x358] sm:$0xff]
    %v1009 = vld [vmem:[#allocation12 + $0x360] sm:$0xff]
    %v1010 = vld [vmem:[#allocation12 + $0x368] sm:$0xff]
    %v1011 = vld [vmem:[#allocation12 + $0x370] sm:$0xff]
    %v1012 = vld [vmem:[#allocation12 + $0x378] sm:$0xff]
    %v1013 = vld [vmem:[#allocation12 + $0x380] sm:$0xff]
    %v1014 = vld [vmem:[#allocation12 + $0x388] sm:$0xff]
    %v1015 = vld [vmem:[#allocation12 + $0x390] sm:$0xff]
    %v1016 = vld [vmem:[#allocation12 + $0x398] sm:$0xff]
    %v1017 = vld [vmem:[#allocation12 + $0x3a0] sm:$0xff]
    %v1018 = vld [vmem:[#allocation12 + $0x3a8] sm:$0xff]
    %v1019 = vld [vmem:[#allocation12 + $0x3b0] sm:$0xff]
    %v1020 = vld [vmem:[#allocation12 + $0x3b8] sm:$0xff]
    %v1021 = vld [vmem:[#allocation12 + $0x3c0] sm:$0xff]
    %v1022 = vld [vmem:[#allocation12 + $0x3c8] sm:$0xff]
    %v1023 = vld [vmem:[#allocation12 + $0x3d0] sm:$0xff]
    %v1024 = vld [vmem:[#allocation12 + $0x3d8] sm:$0xff]
    %v1025 = vld [vmem:[#allocation12 + $0x3e0] sm:$0xff]
    %v1026 = vld [vmem:[#allocation12 + $0x3e8] sm:$0xff]
    %v1027 = vld [vmem:[#allocation12 + $0x3f0] sm:$0xff]
    %v1028 = vld [vmem:[#allocation12 + $0x3f8] sm:$0xff]
    %v1029 = vld [vmem:[#allocation12 + $0x400] sm:$0xff]
    %v1030 = vld [vmem:[#allocation12 + $0x408] sm:$0xff]
    %v1031 = vld [vmem:[#allocation12 + $0x410] sm:$0xff]
    %v1032 = vld [vmem:[#allocation12 + $0x418] sm:$0xff]
    %v1033 = vld [vmem:[#allocation12 + $0x420] sm:$0xff]
    %v1034 = vld [vmem:[#allocation12 + $0x428] sm:$0xff]
    %v1035 = vld [vmem:[#allocation12 + $0x430] sm:$0xff]
    %v1036 = vld [vmem:[#allocation12 + $0x438] sm:$0xff]
    %v1037 = vld [vmem:[#allocation12 + $0x440] sm:$0xff]
    %v1038 = vld [vmem:[#allocation12 + $0x448] sm:$0xff]
    %v1039 = vld [vmem:[#allocation12 + $0x450] sm:$0xff]
    %v1040 = vld [vmem:[#allocation12 + $0x458] sm:$0xff]
    %v1041 = vld [vmem:[#allocation12 + $0x460] sm:$0xff]
    %v1042 = vld [vmem:[#allocation12 + $0x468] sm:$0xff]
    %v1043 = vld [vmem:[#allocation12 + $0x470] sm:$0xff]
    %v1044 = vld [vmem:[#allocation12 + $0x478] sm:$0xff]
    %v1045 = vld [vmem:[#allocation12 + $0x480] sm:$0xff]
    %v1046 = vld [vmem:[#allocation12 + $0x488] sm:$0xff]
    %v1047 = vld [vmem:[#allocation12 + $0x490] sm:$0xff]
    %v1048 = vld [vmem:[#allocation12 + $0x498] sm:$0xff]
    %v1049 = vld [vmem:[#allocation12 + $0x4a0] sm:$0xff]
    %v1050 = vld [vmem:[#allocation12 + $0x4a8] sm:$0xff]
    %v1051 = vld [vmem:[#allocation12 + $0x4b0] sm:$0xff]
    %v1052 = vld [vmem:[#allocation12 + $0x4b8] sm:$0xff]
    %v1053 = vld [vmem:[#allocation12 + $0x4c0] sm:$0xff]
    %v1054 = vld [vmem:[#allocation12 + $0x4c8] sm:$0xff]
    %v1055 = vld [vmem:[#allocation12 + $0x4d0] sm:$0xff]
    %v1056 = vld [vmem:[#allocation12 + $0x4d8] sm:$0xff]
    %v1057 = vld [vmem:[#allocation12 + $0x4e0] sm:$0xff]
    %v1058 = vld [vmem:[#allocation12 + $0x4e8] sm:$0xff]
    %v1059 = vld [vmem:[#allocation12 + $0x4f0] sm:$0xff]
    %v1060 = vld [vmem:[#allocation12 + $0x4f8] sm:$0xff]
    %v1061 = vld [vmem:[#allocation12 + $0x500] sm:$0xff]
    %v1062 = vld [vmem:[#allocation12 + $0x508] sm:$0xff]
    %v1063 = vld [vmem:[#allocation12 + $0x510] sm:$0xff]
    %v1064 = vld [vmem:[#allocation12 + $0x518] sm:$0xff]
    %v1065 = vld [vmem:[#allocation12 + $0x520] sm:$0xff]
    %v1066 = vld [vmem:[#allocation12 + $0x528] sm:$0xff]
    %v1067 = vld [vmem:[#allocation12 + $0x530] sm:$0xff]
    %v1068 = vld [vmem:[#allocation12 + $0x538] sm:$0xff]
    %v1069 = vld [vmem:[#allocation12 + $0x540] sm:$0xff]
    %v1070 = vld [vmem:[#allocation12 + $0x548] sm:$0xff]
    %v1071 = vld [vmem:[#allocation12 + $0x550] sm:$0xff]
    %v1072 = vld [vmem:[#allocation12 + $0x558] sm:$0xff]
    %v1073 = vld [vmem:[#allocation12 + $0x560] sm:$0xff]
    %v1074 = vld [vmem:[#allocation12 + $0x568] sm:$0xff]
    %v1075 = vld [vmem:[#allocation12 + $0x570] sm:$0xff]
    %v1076 = vld [vmem:[#allocation12 + $0x578] sm:$0xff]
    %v1077 = vld [vmem:[#allocation12 + $0x580] sm:$0xff]
    %v1078 = vld [vmem:[#allocation12 + $0x588] sm:$0xff]
    %v1079 = vld [vmem:[#allocation12 + $0x590] sm:$0xff]
    %v1080 = vld [vmem:[#allocation12 + $0x598] sm:$0xff]
    %v1081 = vld [vmem:[#allocation12 + $0x5a0] sm:$0xff]
    %v1082 = vld [vmem:[#allocation12 + $0x5a8] sm:$0xff]
    %v1083 = vld [vmem:[#allocation12 + $0x5b0] sm:$0xff]
    %v1084 = vld [vmem:[#allocation12 + $0x5b8] sm:$0xff]
    %v1085 = vld [vmem:[#allocation12 + $0x5c0] sm:$0xff]
    %v1086 = vld [vmem:[#allocation12 + $0x5c8] sm:$0xff]
    %v1087 = vld [vmem:[#allocation12 + $0x5d0] sm:$0xff]
    %v1088 = vld [vmem:[#allocation12 + $0x5d8] sm:$0xff]
    %v1089 = vld [vmem:[#allocation12 + $0x5e0] sm:$0xff]
    %v1090 = vld [vmem:[#allocation12 + $0x5e8] sm:$0xff]
    %v1091 = vld [vmem:[#allocation12 + $0x5f0] sm:$0xff]
    %v1092 = vld [vmem:[#allocation12 + $0x5f8] sm:$0xff]
    %v1285 = vunpack.c.l.b16 %v901
    %v1286 = vunpack.c.h.b16 %v901
    %v1287 = vunpack.c.l.b16 %v902
    %v1288 = vunpack.c.h.b16 %v902
    %v1289 = vunpack.c.l.b16 %v903
    %v1290 = vunpack.c.h.b16 %v903
    %v1291 = vunpack.c.l.b16 %v904
    %v1292 = vunpack.c.h.b16 %v904
    %v1293 = vunpack.c.l.b16 %v905
    %v1294 = vunpack.c.h.b16 %v905
    %v1295 = vunpack.c.l.b16 %v906
    %v1296 = vunpack.c.h.b16 %v906
    %v1297 = vunpack.c.l.b16 %v907
    %v1298 = vunpack.c.h.b16 %v907
    %v1299 = vunpack.c.l.b16 %v908
    %v1300 = vunpack.c.h.b16 %v908
    %v1301 = vunpack.c.l.b16 %v909
    %v1302 = vunpack.c.h.b16 %v909
    %v1303 = vunpack.c.l.b16 %v910
    %v1304 = vunpack.c.h.b16 %v910
    %v1305 = vunpack.c.l.b16 %v911
    %v1306 = vunpack.c.h.b16 %v911
    %v1307 = vunpack.c.l.b16 %v912
    %v1308 = vunpack.c.h.b16 %v912
    %v1309 = vunpack.c.l.b16 %v913
    %v1310 = vunpack.c.h.b16 %v913
    %v1311 = vunpack.c.l.b16 %v914
    %v1312 = vunpack.c.h.b16 %v914
    %v1313 = vunpack.c.l.b16 %v915
    %v1314 = vunpack.c.h.b16 %v915
    %v1315 = vunpack.c.l.b16 %v916
    %v1316 = vunpack.c.h.b16 %v916
    %v1317 = vunpack.c.l.b16 %v917
    %v1318 = vunpack.c.h.b16 %v917
    %v1319 = vunpack.c.l.b16 %v918
    %v1320 = vunpack.c.h.b16 %v918
    %v1321 = vunpack.c.l.b16 %v919
    %v1322 = vunpack.c.h.b16 %v919
    %v1323 = vunpack.c.l.b16 %v920
    %v1324 = vunpack.c.h.b16 %v920
    %v1325 = vunpack.c.l.b16 %v921
    %v1326 = vunpack.c.h.b16 %v921
    %v1327 = vunpack.c.l.b16 %v922
    %v1328 = vunpack.c.h.b16 %v922
    %v1329 = vunpack.c.l.b16 %v923
    %v1330 = vunpack.c.h.b16 %v923
    %v1331 = vunpack.c.l.b16 %v924
    %v1332 = vunpack.c.h.b16 %v924
    %v1333 = vunpack.c.l.b16 %v925
    %v1334 = vunpack.c.h.b16 %v925
    %v1335 = vunpack.c.l.b16 %v926
    %v1336 = vunpack.c.h.b16 %v926
    %v1337 = vunpack.c.l.b16 %v927
    %v1338 = vunpack.c.h.b16 %v927
    %v1339 = vunpack.c.l.b16 %v928
    %v1340 = vunpack.c.h.b16 %v928
    %v1341 = vunpack.c.l.b16 %v929
    %v1342 = vunpack.c.h.b16 %v929
    %v1343 = vunpack.c.l.b16 %v930
    %v1344 = vunpack.c.h.b16 %v930
    %v1345 = vunpack.c.l.b16 %v931
    %v1346 = vunpack.c.h.b16 %v931
    %v1347 = vunpack.c.l.b16 %v932
    %v1348 = vunpack.c.h.b16 %v932
    %v1349 = vunpack.c.l.b16 %v933
    %v1350 = vunpack.c.h.b16 %v933
    %v1351 = vunpack.c.l.b16 %v934
    %v1352 = vunpack.c.h.b16 %v934
    %v1353 = vunpack.c.l.b16 %v935
    %v1354 = vunpack.c.h.b16 %v935
    %v1355 = vunpack.c.l.b16 %v936
    %v1356 = vunpack.c.h.b16 %v936
    %v1357 = vunpack.c.l.b16 %v937
    %v1358 = vunpack.c.h.b16 %v937
    %v1359 = vunpack.c.l.b16 %v938
    %v1360 = vunpack.c.h.b16 %v938
    %v1361 = vunpack.c.l.b16 %v939
    %v1362 = vunpack.c.h.b16 %v939
    %v1363 = vunpack.c.l.b16 %v940
    %v1364 = vunpack.c.h.b16 %v940
    %v1365 = vunpack.c.l.b16 %v941
    %v1366 = vunpack.c.h.b16 %v941
    %v1367 = vunpack.c.l.b16 %v942
    %v1368 = vunpack.c.h.b16 %v942
    %v1369 = vunpack.c.l.b16 %v943
    %v1370 = vunpack.c.h.b16 %v943
    %v1371 = vunpack.c.l.b16 %v944
    %v1372 = vunpack.c.h.b16 %v944
    %v1373 = vunpack.c.l.b16 %v945
    %v1374 = vunpack.c.h.b16 %v945
    %v1375 = vunpack.c.l.b16 %v946
    %v1376 = vunpack.c.h.b16 %v946
    %v1377 = vunpack.c.l.b16 %v947
    %v1378 = vunpack.c.h.b16 %v947
    %v1379 = vunpack.c.l.b16 %v948
    %v1380 = vunpack.c.h.b16 %v948
    %v1381 = vunpack.c.l.b16 %v949
    %v1382 = vunpack.c.h.b16 %v949
    %v1383 = vunpack.c.l.b16 %v950
    %v1384 = vunpack.c.h.b16 %v950
    %v1385 = vunpack.c.l.b16 %v951
    %v1386 = vunpack.c.h.b16 %v951
    %v1387 = vunpack.c.l.b16 %v952
    %v1388 = vunpack.c.h.b16 %v952
    %v1389 = vunpack.c.l.b16 %v953
    %v1390 = vunpack.c.h.b16 %v953
    %v1391 = vunpack.c.l.b16 %v954
    %v1392 = vunpack.c.h.b16 %v954
    %v1393 = vunpack.c.l.b16 %v955
    %v1394 = vunpack.c.h.b16 %v955
    %v1395 = vunpack.c.l.b16 %v956
    %v1396 = vunpack.c.h.b16 %v956
    %v1397 = vunpack.c.l.b16 %v957
    %v1398 = vunpack.c.h.b16 %v957
    %v1399 = vunpack.c.l.b16 %v958
    %v1400 = vunpack.c.h.b16 %v958
    %v1401 = vunpack.c.l.b16 %v959
    %v1402 = vunpack.c.h.b16 %v959
    %v1403 = vunpack.c.l.b16 %v960
    %v1404 = vunpack.c.h.b16 %v960
    %v1405 = vunpack.c.l.b16 %v961
    %v1406 = vunpack.c.h.b16 %v961
    %v1407 = vunpack.c.l.b16 %v962
    %v1408 = vunpack.c.h.b16 %v962
    %v1409 = vunpack.c.l.b16 %v963
    %v1410 = vunpack.c.h.b16 %v963
    %v1411 = vunpack.c.l.b16 %v964
    %v1412 = vunpack.c.h.b16 %v964
    %v1413 = vunpack.c.l.b16 %v965
    %v1414 = vunpack.c.h.b16 %v965
    %v1415 = vunpack.c.l.b16 %v966
    %v1416 = vunpack.c.h.b16 %v966
    %v1417 = vunpack.c.l.b16 %v967
    %v1418 = vunpack.c.h.b16 %v967
    %v1419 = vunpack.c.l.b16 %v968
    %v1420 = vunpack.c.h.b16 %v968
    %v1421 = vunpack.c.l.b16 %v969
    %v1422 = vunpack.c.h.b16 %v969
    %v1423 = vunpack.c.l.b16 %v970
    %v1424 = vunpack.c.h.b16 %v970
    %v1425 = vunpack.c.l.b16 %v971
    %v1426 = vunpack.c.h.b16 %v971
    %v1427 = vunpack.c.l.b16 %v972
    %v1428 = vunpack.c.h.b16 %v972
    %v1429 = vunpack.c.l.b16 %v973
    %v1430 = vunpack.c.h.b16 %v973
    %v1431 = vunpack.c.l.b16 %v974
    %v1432 = vunpack.c.h.b16 %v974
    %v1433 = vunpack.c.l.b16 %v975
    %v1434 = vunpack.c.h.b16 %v975
    %v1435 = vunpack.c.l.b16 %v976
    %v1436 = vunpack.c.h.b16 %v976
    %v1437 = vunpack.c.l.b16 %v977
    %v1438 = vunpack.c.h.b16 %v977
    %v1439 = vunpack.c.l.b16 %v978
    %v1440 = vunpack.c.h.b16 %v978
    %v1441 = vunpack.c.l.b16 %v979
    %v1442 = vunpack.c.h.b16 %v979
    %v1443 = vunpack.c.l.b16 %v980
    %v1444 = vunpack.c.h.b16 %v980
    %v1445 = vunpack.c.l.b16 %v981
    %v1446 = vunpack.c.h.b16 %v981
    %v1447 = vunpack.c.l.b16 %v982
    %v1448 = vunpack.c.h.b16 %v982
    %v1449 = vunpack.c.l.b16 %v983
    %v1450 = vunpack.c.h.b16 %v983
    %v1451 = vunpack.c.l.b16 %v984
    %v1452 = vunpack.c.h.b16 %v984
    %v1453 = vunpack.c.l.b16 %v985
    %v1454 = vunpack.c.h.b16 %v985
    %v1455 = vunpack.c.l.b16 %v986
    %v1456 = vunpack.c.h.b16 %v986
    %v1457 = vunpack.c.l.b16 %v987
    %v1458 = vunpack.c.h.b16 %v987
    %v1459 = vunpack.c.l.b16 %v988
    %v1460 = vunpack.c.h.b16 %v988
    %v1461 = vunpack.c.l.b16 %v989
    %v1462 = vunpack.c.h.b16 %v989
    %v1463 = vunpack.c.l.b16 %v990
    %v1464 = vunpack.c.h.b16 %v990
    %v1465 = vunpack.c.l.b16 %v991
    %v1466 = vunpack.c.h.b16 %v991
    %v1467 = vunpack.c.l.b16 %v992
    %v1468 = vunpack.c.h.b16 %v992
    %v1469 = vunpack.c.l.b16 %v993
    %v1470 = vunpack.c.h.b16 %v993
    %v1471 = vunpack.c.l.b16 %v994
    %v1472 = vunpack.c.h.b16 %v994
    %v1473 = vunpack.c.l.b16 %v995
    %v1474 = vunpack.c.h.b16 %v995
    %v1475 = vunpack.c.l.b16 %v996
    %v1476 = vunpack.c.h.b16 %v996
    %v1477 = vunpack.c.l.b16 %v997
    %v1478 = vunpack.c.h.b16 %v997
    %v1479 = vunpack.c.l.b16 %v998
    %v1480 = vunpack.c.h.b16 %v998
    %v1481 = vunpack.c.l.b16 %v999
    %v1482 = vunpack.c.h.b16 %v999
    %v1483 = vunpack.c.l.b16 %v1000
    %v1484 = vunpack.c.h.b16 %v1000
    %v1485 = vunpack.c.l.b16 %v1001
    %v1486 = vunpack.c.h.b16 %v1001
    %v1487 = vunpack.c.l.b16 %v1002
    %v1488 = vunpack.c.h.b16 %v1002
    %v1489 = vunpack.c.l.b16 %v1003
    %v1490 = vunpack.c.h.b16 %v1003
    %v1491 = vunpack.c.l.b16 %v1004
    %v1492 = vunpack.c.h.b16 %v1004
    %v1493 = vunpack.c.l.b16 %v1005
    %v1494 = vunpack.c.h.b16 %v1005
    %v1495 = vunpack.c.l.b16 %v1006
    %v1496 = vunpack.c.h.b16 %v1006
    %v1497 = vunpack.c.l.b16 %v1007
    %v1498 = vunpack.c.h.b16 %v1007
    %v1499 = vunpack.c.l.b16 %v1008
    %v1500 = vunpack.c.h.b16 %v1008
    %v1501 = vunpack.c.l.b16 %v1009
    %v1502 = vunpack.c.h.b16 %v1009
    %v1503 = vunpack.c.l.b16 %v1010
    %v1504 = vunpack.c.h.b16 %v1010
    %v1505 = vunpack.c.l.b16 %v1011
    %v1506 = vunpack.c.h.b16 %v1011
    %v1507 = vunpack.c.l.b16 %v1012
    %v1508 = vunpack.c.h.b16 %v1012
    %v1509 = vunpack.c.l.b16 %v1013
    %v1510 = vunpack.c.h.b16 %v1013
    %v1511 = vunpack.c.l.b16 %v1014
    %v1512 = vunpack.c.h.b16 %v1014
    %v1513 = vunpack.c.l.b16 %v1015
    %v1514 = vunpack.c.h.b16 %v1015
    %v1515 = vunpack.c.l.b16 %v1016
    %v1516 = vunpack.c.h.b16 %v1016
    %v1517 = vunpack.c.l.b16 %v1017
    %v1518 = vunpack.c.h.b16 %v1017
    %v1519 = vunpack.c.l.b16 %v1018
    %v1520 = vunpack.c.h.b16 %v1018
    %v1521 = vunpack.c.l.b16 %v1019
    %v1522 = vunpack.c.h.b16 %v1019
    %v1523 = vunpack.c.l.b16 %v1020
    %v1524 = vunpack.c.h.b16 %v1020
    %v1525 = vunpack.c.l.b16 %v1021
    %v1526 = vunpack.c.h.b16 %v1021
    %v1527 = vunpack.c.l.b16 %v1022
    %v1528 = vunpack.c.h.b16 %v1022
    %v1529 = vunpack.c.l.b16 %v1023
    %v1530 = vunpack.c.h.b16 %v1023
    %v1531 = vunpack.c.l.b16 %v1024
    %v1532 = vunpack.c.h.b16 %v1024
    %v1533 = vunpack.c.l.b16 %v1025
    %v1534 = vunpack.c.h.b16 %v1025
    %v1535 = vunpack.c.l.b16 %v1026
    %v1536 = vunpack.c.h.b16 %v1026
    %v1537 = vunpack.c.l.b16 %v1027
    %v1538 = vunpack.c.h.b16 %v1027
    %v1539 = vunpack.c.l.b16 %v1028
    %v1540 = vunpack.c.h.b16 %v1028
    %v1541 = vunpack.c.l.b16 %v1029
    %v1542 = vunpack.c.h.b16 %v1029
    %v1543 = vunpack.c.l.b16 %v1030
    %v1544 = vunpack.c.h.b16 %v1030
    %v1545 = vunpack.c.l.b16 %v1031
    %v1546 = vunpack.c.h.b16 %v1031
    %v1547 = vunpack.c.l.b16 %v1032
    %v1548 = vunpack.c.h.b16 %v1032
    %v1549 = vunpack.c.l.b16 %v1033
    %v1550 = vunpack.c.h.b16 %v1033
    %v1551 = vunpack.c.l.b16 %v1034
    %v1552 = vunpack.c.h.b16 %v1034
    %v1553 = vunpack.c.l.b16 %v1035
    %v1554 = vunpack.c.h.b16 %v1035
    %v1555 = vunpack.c.l.b16 %v1036
    %v1556 = vunpack.c.h.b16 %v1036
    %v1557 = vunpack.c.l.b16 %v1037
    %v1558 = vunpack.c.h.b16 %v1037
    %v1559 = vunpack.c.l.b16 %v1038
    %v1560 = vunpack.c.h.b16 %v1038
    %v1561 = vunpack.c.l.b16 %v1039
    %v1562 = vunpack.c.h.b16 %v1039
    %v1563 = vunpack.c.l.b16 %v1040
    %v1564 = vunpack.c.h.b16 %v1040
    %v1565 = vunpack.c.l.b16 %v1041
    %v1566 = vunpack.c.h.b16 %v1041
    %v1567 = vunpack.c.l.b16 %v1042
    %v1568 = vunpack.c.h.b16 %v1042
    %v1569 = vunpack.c.l.b16 %v1043
    %v1570 = vunpack.c.h.b16 %v1043
    %v1571 = vunpack.c.l.b16 %v1044
    %v1572 = vunpack.c.h.b16 %v1044
    %v1573 = vunpack.c.l.b16 %v1045
    %v1574 = vunpack.c.h.b16 %v1045
    %v1575 = vunpack.c.l.b16 %v1046
    %v1576 = vunpack.c.h.b16 %v1046
    %v1577 = vunpack.c.l.b16 %v1047
    %v1578 = vunpack.c.h.b16 %v1047
    %v1579 = vunpack.c.l.b16 %v1048
    %v1580 = vunpack.c.h.b16 %v1048
    %v1581 = vunpack.c.l.b16 %v1049
    %v1582 = vunpack.c.h.b16 %v1049
    %v1583 = vunpack.c.l.b16 %v1050
    %v1584 = vunpack.c.h.b16 %v1050
    %v1585 = vunpack.c.l.b16 %v1051
    %v1586 = vunpack.c.h.b16 %v1051
    %v1587 = vunpack.c.l.b16 %v1052
    %v1588 = vunpack.c.h.b16 %v1052
    %v1589 = vunpack.c.l.b16 %v1053
    %v1590 = vunpack.c.h.b16 %v1053
    %v1591 = vunpack.c.l.b16 %v1054
    %v1592 = vunpack.c.h.b16 %v1054
    %v1593 = vunpack.c.l.b16 %v1055
    %v1594 = vunpack.c.h.b16 %v1055
    %v1595 = vunpack.c.l.b16 %v1056
    %v1596 = vunpack.c.h.b16 %v1056
    %v1597 = vunpack.c.l.b16 %v1057
    %v1598 = vunpack.c.h.b16 %v1057
    %v1599 = vunpack.c.l.b16 %v1058
    %v1600 = vunpack.c.h.b16 %v1058
    %v1601 = vunpack.c.l.b16 %v1059
    %v1602 = vunpack.c.h.b16 %v1059
    %v1603 = vunpack.c.l.b16 %v1060
    %v1604 = vunpack.c.h.b16 %v1060
    %v1605 = vunpack.c.l.b16 %v1061
    %v1606 = vunpack.c.h.b16 %v1061
    %v1607 = vunpack.c.l.b16 %v1062
    %v1608 = vunpack.c.h.b16 %v1062
    %v1609 = vunpack.c.l.b16 %v1063
    %v1610 = vunpack.c.h.b16 %v1063
    %v1611 = vunpack.c.l.b16 %v1064
    %v1612 = vunpack.c.h.b16 %v1064
    %v1613 = vunpack.c.l.b16 %v1065
    %v1614 = vunpack.c.h.b16 %v1065
    %v1615 = vunpack.c.l.b16 %v1066
    %v1616 = vunpack.c.h.b16 %v1066
    %v1617 = vunpack.c.l.b16 %v1067
    %v1618 = vunpack.c.h.b16 %v1067
    %v1619 = vunpack.c.l.b16 %v1068
    %v1620 = vunpack.c.h.b16 %v1068
    %v1621 = vunpack.c.l.b16 %v1069
    %v1622 = vunpack.c.h.b16 %v1069
    %v1623 = vunpack.c.l.b16 %v1070
    %v1624 = vunpack.c.h.b16 %v1070
    %v1625 = vunpack.c.l.b16 %v1071
    %v1626 = vunpack.c.h.b16 %v1071
    %v1627 = vunpack.c.l.b16 %v1072
    %v1628 = vunpack.c.h.b16 %v1072
    %v1629 = vunpack.c.l.b16 %v1073
    %v1630 = vunpack.c.h.b16 %v1073
    %v1631 = vunpack.c.l.b16 %v1074
    %v1632 = vunpack.c.h.b16 %v1074
    %v1633 = vunpack.c.l.b16 %v1075
    %v1634 = vunpack.c.h.b16 %v1075
    %v1635 = vunpack.c.l.b16 %v1076
    %v1636 = vunpack.c.h.b16 %v1076
    %v1637 = vunpack.c.l.b16 %v1077
    %v1638 = vunpack.c.h.b16 %v1077
    %v1639 = vunpack.c.l.b16 %v1078
    %v1640 = vunpack.c.h.b16 %v1078
    %v1641 = vunpack.c.l.b16 %v1079
    %v1642 = vunpack.c.h.b16 %v1079
    %v1643 = vunpack.c.l.b16 %v1080
    %v1644 = vunpack.c.h.b16 %v1080
    %v1645 = vunpack.c.l.b16 %v1081
    %v1646 = vunpack.c.h.b16 %v1081
    %v1647 = vunpack.c.l.b16 %v1082
    %v1648 = vunpack.c.h.b16 %v1082
    %v1649 = vunpack.c.l.b16 %v1083
    %v1650 = vunpack.c.h.b16 %v1083
    %v1651 = vunpack.c.l.b16 %v1084
    %v1652 = vunpack.c.h.b16 %v1084
    %v1653 = vunpack.c.l.b16 %v1085
    %v1654 = vunpack.c.h.b16 %v1085
    %v1655 = vunpack.c.l.b16 %v1086
    %v1656 = vunpack.c.h.b16 %v1086
    %v1657 = vunpack.c.l.b16 %v1087
    %v1658 = vunpack.c.h.b16 %v1087
    %v1659 = vunpack.c.l.b16 %v1088
    %v1660 = vunpack.c.h.b16 %v1088
    %v1661 = vunpack.c.l.b16 %v1089
    %v1662 = vunpack.c.h.b16 %v1089
    %v1663 = vunpack.c.l.b16 %v1090
    %v1664 = vunpack.c.h.b16 %v1090
    %v1665 = vunpack.c.l.b16 %v1091
    %v1666 = vunpack.c.h.b16 %v1091
    %v1667 = vunpack.c.l.b16 %v1092
    %v1668 = vunpack.c.h.b16 %v1092
    %v1669 = vpack.c.b16 %v1309, %v1285
    %v1670 = vpack.c.b16 %v1310, %v1286
    %v1671 = vpack.c.b16 %v1311, %v1287
    %v1672 = vpack.c.b16 %v1312, %v1288
    %v1673 = vpack.c.b16 %v1313, %v1289
    %v1674 = vpack.c.b16 %v1314, %v1290
    %v1675 = vpack.c.b16 %v1315, %v1291
    %v1676 = vpack.c.b16 %v1316, %v1292
    %v1677 = vpack.c.b16 %v1317, %v1293
    %v1678 = vpack.c.b16 %v1318, %v1294
    %v1679 = vpack.c.b16 %v1319, %v1295
    %v1680 = vpack.c.b16 %v1320, %v1296
    %v1681 = vpack.c.b16 %v1321, %v1297
    %v1682 = vpack.c.b16 %v1322, %v1298
    %v1683 = vpack.c.b16 %v1323, %v1299
    %v1684 = vpack.c.b16 %v1324, %v1300
    %v1685 = vpack.c.b16 %v1325, %v1301
    %v1686 = vpack.c.b16 %v1326, %v1302
    %v1687 = vpack.c.b16 %v1327, %v1303
    %v1688 = vpack.c.b16 %v1328, %v1304
    %v1689 = vpack.c.b16 %v1329, %v1305
    %v1690 = vpack.c.b16 %v1330, %v1306
    %v1691 = vpack.c.b16 %v1331, %v1307
    %v1692 = vpack.c.b16 %v1332, %v1308
    %v1693 = vpack.c.b16 %v1357, %v1333
    %v1694 = vpack.c.b16 %v1358, %v1334
    %v1695 = vpack.c.b16 %v1359, %v1335
    %v1696 = vpack.c.b16 %v1360, %v1336
    %v1697 = vpack.c.b16 %v1361, %v1337
    %v1698 = vpack.c.b16 %v1362, %v1338
    %v1699 = vpack.c.b16 %v1363, %v1339
    %v1700 = vpack.c.b16 %v1364, %v1340
    %v1701 = vpack.c.b16 %v1365, %v1341
    %v1702 = vpack.c.b16 %v1366, %v1342
    %v1703 = vpack.c.b16 %v1367, %v1343
    %v1704 = vpack.c.b16 %v1368, %v1344
    %v1705 = vpack.c.b16 %v1369, %v1345
    %v1706 = vpack.c.b16 %v1370, %v1346
    %v1707 = vpack.c.b16 %v1371, %v1347
    %v1708 = vpack.c.b16 %v1372, %v1348
    %v1709 = vpack.c.b16 %v1373, %v1349
    %v1710 = vpack.c.b16 %v1374, %v1350
    %v1711 = vpack.c.b16 %v1375, %v1351
    %v1712 = vpack.c.b16 %v1376, %v1352
    %v1713 = vpack.c.b16 %v1377, %v1353
    %v1714 = vpack.c.b16 %v1378, %v1354
    %v1715 = vpack.c.b16 %v1379, %v1355
    %v1716 = vpack.c.b16 %v1380, %v1356
    %v1717 = vpack.c.b16 %v1405, %v1381
    %v1718 = vpack.c.b16 %v1406, %v1382
    %v1719 = vpack.c.b16 %v1407, %v1383
    %v1720 = vpack.c.b16 %v1408, %v1384
    %v1721 = vpack.c.b16 %v1409, %v1385
    %v1722 = vpack.c.b16 %v1410, %v1386
    %v1723 = vpack.c.b16 %v1411, %v1387
    %v1724 = vpack.c.b16 %v1412, %v1388
    %v1725 = vpack.c.b16 %v1413, %v1389
    %v1726 = vpack.c.b16 %v1414, %v1390
    %v1727 = vpack.c.b16 %v1415, %v1391
    %v1728 = vpack.c.b16 %v1416, %v1392
    %v1729 = vpack.c.b16 %v1417, %v1393
    %v1730 = vpack.c.b16 %v1418, %v1394
    %v1731 = vpack.c.b16 %v1419, %v1395
    %v1732 = vpack.c.b16 %v1420, %v1396
    %v1733 = vpack.c.b16 %v1421, %v1397
    %v1734 = vpack.c.b16 %v1422, %v1398
    %v1735 = vpack.c.b16 %v1423, %v1399
    %v1736 = vpack.c.b16 %v1424, %v1400
    %v1737 = vpack.c.b16 %v1425, %v1401
    %v1738 = vpack.c.b16 %v1426, %v1402
    %v1739 = vpack.c.b16 %v1427, %v1403
    %v1740 = vpack.c.b16 %v1428, %v1404
    %v1741 = vpack.c.b16 %v1453, %v1429
    %v1742 = vpack.c.b16 %v1454, %v1430
    %v1743 = vpack.c.b16 %v1455, %v1431
    %v1744 = vpack.c.b16 %v1456, %v1432
    %v1745 = vpack.c.b16 %v1457, %v1433
    %v1746 = vpack.c.b16 %v1458, %v1434
    %v1747 = vpack.c.b16 %v1459, %v1435
    %v1748 = vpack.c.b16 %v1460, %v1436
    %v1749 = vpack.c.b16 %v1461, %v1437
    %v1750 = vpack.c.b16 %v1462, %v1438
    %v1751 = vpack.c.b16 %v1463, %v1439
    %v1752 = vpack.c.b16 %v1464, %v1440
    %v1753 = vpack.c.b16 %v1465, %v1441
    %v1754 = vpack.c.b16 %v1466, %v1442
    %v1755 = vpack.c.b16 %v1467, %v1443
    %v1756 = vpack.c.b16 %v1468, %v1444
    %v1757 = vpack.c.b16 %v1469, %v1445
    %v1758 = vpack.c.b16 %v1470, %v1446
    %v1759 = vpack.c.b16 %v1471, %v1447
    %v1760 = vpack.c.b16 %v1472, %v1448
    %v1761 = vpack.c.b16 %v1473, %v1449
    %v1762 = vpack.c.b16 %v1474, %v1450
    %v1763 = vpack.c.b16 %v1475, %v1451
    %v1764 = vpack.c.b16 %v1476, %v1452
    %v1765 = vpack.c.b16 %v1501, %v1477
    %v1766 = vpack.c.b16 %v1502, %v1478
    %v1767 = vpack.c.b16 %v1503, %v1479
    %v1768 = vpack.c.b16 %v1504, %v1480
    %v1769 = vpack.c.b16 %v1505, %v1481
    %v1770 = vpack.c.b16 %v1506, %v1482
    %v1771 = vpack.c.b16 %v1507, %v1483
    %v1772 = vpack.c.b16 %v1508, %v1484
    %v1773 = vpack.c.b16 %v1509, %v1485
    %v1774 = vpack.c.b16 %v1510, %v1486
    %v1775 = vpack.c.b16 %v1511, %v1487
    %v1776 = vpack.c.b16 %v1512, %v1488
    %v1777 = vpack.c.b16 %v1513, %v1489
    %v1778 = vpack.c.b16 %v1514, %v1490
    %v1779 = vpack.c.b16 %v1515, %v1491
    %v1780 = vpack.c.b16 %v1516, %v1492
    %v1781 = vpack.c.b16 %v1517, %v1493
    %v1782 = vpack.c.b16 %v1518, %v1494
    %v1783 = vpack.c.b16 %v1519, %v1495
    %v1784 = vpack.c.b16 %v1520, %v1496
    %v1785 = vpack.c.b16 %v1521, %v1497
    %v1786 = vpack.c.b16 %v1522, %v1498
    %v1787 = vpack.c.b16 %v1523, %v1499
    %v1788 = vpack.c.b16 %v1524, %v1500
    %v1789 = vpack.c.b16 %v1549, %v1525
    %v1790 = vpack.c.b16 %v1550, %v1526
    %v1791 = vpack.c.b16 %v1551, %v1527
    %v1792 = vpack.c.b16 %v1552, %v1528
    %v1793 = vpack.c.b16 %v1553, %v1529
    %v1794 = vpack.c.b16 %v1554, %v1530
    %v1795 = vpack.c.b16 %v1555, %v1531
    %v1796 = vpack.c.b16 %v1556, %v1532
    %v1797 = vpack.c.b16 %v1557, %v1533
    %v1798 = vpack.c.b16 %v1558, %v1534
    %v1799 = vpack.c.b16 %v1559, %v1535
    %v1800 = vpack.c.b16 %v1560, %v1536
    %v1801 = vpack.c.b16 %v1561, %v1537
    %v1802 = vpack.c.b16 %v1562, %v1538
    %v1803 = vpack.c.b16 %v1563, %v1539
    %v1804 = vpack.c.b16 %v1564, %v1540
    %v1805 = vpack.c.b16 %v1565, %v1541
    %v1806 = vpack.c.b16 %v1566, %v1542
    %v1807 = vpack.c.b16 %v1567, %v1543
    %v1808 = vpack.c.b16 %v1568, %v1544
    %v1809 = vpack.c.b16 %v1569, %v1545
    %v1810 = vpack.c.b16 %v1570, %v1546
    %v1811 = vpack.c.b16 %v1571, %v1547
    %v1812 = vpack.c.b16 %v1572, %v1548
    %v1813 = vpack.c.b16 %v1597, %v1573
    %v1814 = vpack.c.b16 %v1598, %v1574
    %v1815 = vpack.c.b16 %v1599, %v1575
    %v1816 = vpack.c.b16 %v1600, %v1576
    %v1817 = vpack.c.b16 %v1601, %v1577
    %v1818 = vpack.c.b16 %v1602, %v1578
    %v1819 = vpack.c.b16 %v1603, %v1579
    %v1820 = vpack.c.b16 %v1604, %v1580
    %v1821 = vpack.c.b16 %v1605, %v1581
    %v1822 = vpack.c.b16 %v1606, %v1582
    %v1823 = vpack.c.b16 %v1607, %v1583
    %v1824 = vpack.c.b16 %v1608, %v1584
    %v1825 = vpack.c.b16 %v1609, %v1585
    %v1826 = vpack.c.b16 %v1610, %v1586
    %v1827 = vpack.c.b16 %v1611, %v1587
    %v1828 = vpack.c.b16 %v1612, %v1588
    %v1829 = vpack.c.b16 %v1613, %v1589
    %v1830 = vpack.c.b16 %v1614, %v1590
    %v1831 = vpack.c.b16 %v1615, %v1591
    %v1832 = vpack.c.b16 %v1616, %v1592
    %v1833 = vpack.c.b16 %v1617, %v1593
    %v1834 = vpack.c.b16 %v1618, %v1594
    %v1835 = vpack.c.b16 %v1619, %v1595
    %v1836 = vpack.c.b16 %v1620, %v1596
    %v1837 = vpack.c.b16 %v1645, %v1621
    %v1838 = vpack.c.b16 %v1646, %v1622
    %v1839 = vpack.c.b16 %v1647, %v1623
    %v1840 = vpack.c.b16 %v1648, %v1624
    %v1841 = vpack.c.b16 %v1649, %v1625
    %v1842 = vpack.c.b16 %v1650, %v1626
    %v1843 = vpack.c.b16 %v1651, %v1627
    %v1844 = vpack.c.b16 %v1652, %v1628
    %v1845 = vpack.c.b16 %v1653, %v1629
    %v1846 = vpack.c.b16 %v1654, %v1630
    %v1847 = vpack.c.b16 %v1655, %v1631
    %v1848 = vpack.c.b16 %v1656, %v1632
    %v1849 = vpack.c.b16 %v1657, %v1633
    %v1850 = vpack.c.b16 %v1658, %v1634
    %v1851 = vpack.c.b16 %v1659, %v1635
    %v1852 = vpack.c.b16 %v1660, %v1636
    %v1853 = vpack.c.b16 %v1661, %v1637
    %v1854 = vpack.c.b16 %v1662, %v1638
    %v1855 = vpack.c.b16 %v1663, %v1639
    %v1856 = vpack.c.b16 %v1664, %v1640
    %v1857 = vpack.c.b16 %v1665, %v1641
    %v1858 = vpack.c.b16 %v1666, %v1642
    %v1859 = vpack.c.b16 %v1667, %v1643
    %v1860 = vpack.c.b16 %v1668, %v1644
    %2053 = vmatprep.subr.bf16.mxu0 %v1670
    %2054 = vmatpush1.bf16.msra.mxu0 %v1669
    %2055 = vmatprep.subr.bf16.mxu0 %v1694
    %2056 = vmatpush1.bf16.msra.mxu0 %v1693
    %2057 = vmatprep.subr.bf16.mxu0 %v1718
    %2058 = vmatpush1.bf16.msra.mxu0 %v1717
    %2059 = vmatprep.subr.bf16.mxu0 %v1742
    %2060 = vmatpush1.bf16.msra.mxu0 %v1741
    %2061 = vmatprep.subr.bf16.mxu0 %v1766
    %2062 = vmatpush1.bf16.msra.mxu0 %v1765
    %2063 = vmatprep.subr.bf16.mxu0 %v1790
    %2064 = vmatpush1.bf16.msra.mxu0 %v1789
    %2065 = vmatprep.subr.bf16.mxu0 %v1814
    %2066 = vmatpush1.bf16.msra.mxu0 %v1813
    %2067 = vmatprep.subr.bf16.mxu0 %v1838
    %2068 = vmatpush1.bf16.msra.mxu0 %v1837
    %2069 = vmatprep.subr.bf16.mxu0 0
    %2070 = vmatpush1.bf16.msra.mxu0 0
    %2071 = vmatprep.subr.bf16.mxu0 0
    %2072 = vmatpush1.bf16.msra.mxu0 0
    %2073 = vmatprep.subr.bf16.mxu0 0
    %2074 = vmatpush1.bf16.msra.mxu0 0
    %2075 = vmatprep.subr.bf16.mxu0 0
    %2076 = vmatpush1.bf16.msra.mxu0 0
    %2077 = vmatprep.subr.bf16.mxu0 0
    %2078 = vmatpush1.bf16.msra.mxu0 0
    %2079 = vmatprep.subr.bf16.mxu0 0
    %2080 = vmatpush1.bf16.msra.mxu0 0
    %2081 = vmatprep.subr.bf16.mxu0 0
    %2082 = vmatpush1.bf16.msra.mxu0 0
    %2083 = vmatprep.subr.bf16.mxu0 0
    %2084 = vmatpush1.bf16.msra.mxu0 0
    %2085 = vmatprep.mubr.bf16.mxu0 0
    %2086 = vmatmul.mubr.bf16.gmra.mrb[0].mxu0 %v899
    %v2087 = vpop.f32.mrb[0].mxu0
    %v2088 = vadd.f32 0.0, %v2087
    %v2089 = vpop.f32.mrb[0].mxu0
    %v2090 = vadd.f32 0.0, %v2089
    %v2091 = vpop.f32.mrb[0].mxu0
    %v2092 = vadd.f32 0.0, %v2091
    %v2093 = vpop.f32.mrb[0].mxu0
    %v2094 = vadd.f32 0.0, %v2093
    %2095 = vmatprep.mubr.bf16.mxu0 0
    %2096 = vmatmul.mubr.bf16.gmra.mrb[0].mxu0 %v900
    %v2097 = vpop.f32.mrb[0].mxu0
    %v2098 = vadd.f32 0.0, %v2097
    %v2099 = vpop.f32.mrb[0].mxu0
    %v2100 = vadd.f32 0.0, %v2099
    %v2101 = vpop.f32.mrb[0].mxu0
    %v2102 = vadd.f32 0.0, %v2101
    %v2103 = vpop.f32.mrb[0].mxu0
    %v2104 = vadd.f32 0.0, %v2103
    %2105 = vdwg.mxu0
    %2106 = vmatprep.subr.bf16.mxu0 %v1672
    %2107 = vmatpush1.bf16.msra.mxu0 %v1671
    %2108 = vmatprep.subr.bf16.mxu0 %v1696
    %2109 = vmatpush1.bf16.msra.mxu0 %v1695
    %2110 = vmatprep.subr.bf16.mxu0 %v1720
    %2111 = vmatpush1.bf16.msra.mxu0 %v1719
    %2112 = vmatprep.subr.bf16.mxu0 %v1744
    %2113 = vmatpush1.bf16.msra.mxu0 %v1743
    %2114 = vmatprep.subr.bf16.mxu0 %v1768
    %2115 = vmatpush1.bf16.msra.mxu0 %v1767
    %2116 = vmatprep.subr.bf16.mxu0 %v1792
    %2117 = vmatpush1.bf16.msra.mxu0 %v1791
    %2118 = vmatprep.subr.bf16.mxu0 %v1816
    %2119 = vmatpush1.bf16.msra.mxu0 %v1815
    %2120 = vmatprep.subr.bf16.mxu0 %v1840
    %2121 = vmatpush1.bf16.msra.mxu0 %v1839
    %2122 = vmatprep.subr.bf16.mxu0 0
    %2123 = vmatpush1.bf16.msra.mxu0 0
    %2124 = vmatprep.subr.bf16.mxu0 0
    %2125 = vmatpush1.bf16.msra.mxu0 0
    %2126 = vmatprep.subr.bf16.mxu0 0
    %2127 = vmatpush1.bf16.msra.mxu0 0
    %2128 = vmatprep.subr.bf16.mxu0 0
    %2129 = vmatpush1.bf16.msra.mxu0 0
    %2130 = vmatprep.subr.bf16.mxu0 0
    %2131 = vmatpush1.bf16.msra.mxu0 0
    %2132 = vmatprep.subr.bf16.mxu0 0
    %2133 = vmatpush1.bf16.msra.mxu0 0
    %2134 = vmatprep.subr.bf16.mxu0 0
    %2135 = vmatpush1.bf16.msra.mxu0 0
    %2136 = vmatprep.subr.bf16.mxu0 0
    %2137 = vmatpush1.bf16.msra.mxu0 0
    %2138 = vmatprep.mubr.bf16.mxu0 0
    %2139 = vmatmul.mubr.bf16.gmra.mrb[0].mxu0 %v899
    %v2140 = vpop.f32.mrb[0].mxu0
    %v2141 = vadd.f32 0.0, %v2140
    %v2142 = vpop.f32.mrb[0].mxu0
    %v2143 = vadd.f32 0.0, %v2142
    %v2144 = vpop.f32.mrb[0].mxu0
    %v2145 = vadd.f32 0.0, %v2144
    %v2146 = vpop.f32.mrb[0].mxu0
    %v2147 = vadd.f32 0.0, %v2146
    %2148 = vmatprep.mubr.bf16.mxu0 0
    %2149 = vmatmul.mubr.bf16.gmra.mrb[0].mxu0 %v900
    %v2150 = vpop.f32.mrb[0].mxu0
    %v2151 = vadd.f32 0.0, %v2150
    %v2152 = vpop.f32.mrb[0].mxu0
    %v2153 = vadd.f32 0.0, %v2152
    %v2154 = vpop.f32.mrb[0].mxu0
    %v2155 = vadd.f32 0.0, %v2154
    %v2156 = vpop.f32.mrb[0].mxu0
    %v2157 = vadd.f32 0.0, %v2156
    %2158 = vdwg.mxu0
    %2159 = vmatprep.subr.bf16.mxu0 %v1674
    %2160 = vmatpush1.bf16.msra.mxu0 %v1673
    %2161 = vmatprep.subr.bf16.mxu0 %v1698
    %2162 = vmatpush1.bf16.msra.mxu0 %v1697
    %2163 = vmatprep.subr.bf16.mxu0 %v1722
    %2164 = vmatpush1.bf16.msra.mxu0 %v1721
    %2165 = vmatprep.subr.bf16.mxu0 %v1746
    %2166 = vmatpush1.bf16.msra.mxu0 %v1745
    %2167 = vmatprep.subr.bf16.mxu0 %v1770
    %2168 = vmatpush1.bf16.msra.mxu0 %v1769
    %2169 = vmatprep.subr.bf16.mxu0 %v1794
    %2170 = vmatpush1.bf16.msra.mxu0 %v1793
    %2171 = vmatprep.subr.bf16.mxu0 %v1818
    %2172 = vmatpush1.bf16.msra.mxu0 %v1817
    %2173 = vmatprep.subr.bf16.mxu0 %v1842
    %2174 = vmatpush1.bf16.msra.mxu0 %v1841
    %2175 = vmatprep.subr.bf16.mxu0 0
    %2176 = vmatpush1.bf16.msra.mxu0 0
    %2177 = vmatprep.subr.bf16.mxu0 0
    %2178 = vmatpush1.bf16.msra.mxu0 0
    %2179 = vmatprep.subr.bf16.mxu0 0
    %2180 = vmatpush1.bf16.msra.mxu0 0
    %2181 = vmatprep.subr.bf16.mxu0 0
    %2182 = vmatpush1.bf16.msra.mxu0 0
    %2183 = vmatprep.subr.bf16.mxu0 0
    %2184 = vmatpush1.bf16.msra.mxu0 0
    %2185 = vmatprep.subr.bf16.mxu0 0
    %2186 = vmatpush1.bf16.msra.mxu0 0
    %2187 = vmatprep.subr.bf16.mxu0 0
    %2188 = vmatpush1.bf16.msra.mxu0 0
    %2189 = vmatprep.subr.bf16.mxu0 0
    %2190 = vmatpush1.bf16.msra.mxu0 0
    %2191 = vmatprep.mubr.bf16.mxu0 0
    %2192 = vmatmul.mubr.bf16.gmra.mrb[0].mxu0 %v899
    %v2193 = vpop.f32.mrb[0].mxu0
    %v2194 = vadd.f32 0.0, %v2193
    %v2195 = vpop.f32.mrb[0].mxu0
    %v2196 = vadd.f32 0.0, %v2195
    %v2197 = vpop.f32.mrb[0].mxu0
    %v2198 = vadd.f32 0.0, %v2197
    %v2199 = vpop.f32.mrb[0].mxu0
    %v2200 = vadd.f32 0.0, %v2199
    %2201 = vmatprep.mubr.bf16.mxu0 0
    %2202 = vmatmul.mubr.bf16.gmra.mrb[0].mxu0 %v900
    %v2203 = vpop.f32.mrb[0].mxu0
    %v2204 = vadd.f32 0.0, %v2203
    %v2205 = vpop.f32.mrb[0].mxu0
    %v2206 = vadd.f32 0.0, %v2205
    %v2207 = vpop.f32.mrb[0].mxu0
    %v2208 = vadd.f32 0.0, %v2207
    %v2209 = vpop.f32.mrb[0].mxu0
    %v2210 = vadd.f32 0.0, %v2209
    %2211 = vdwg.mxu0
    %2212 = vmatprep.subr.bf16.mxu0 %v1676
    %2213 = vmatpush1.bf16.msra.mxu0 %v1675
    %2214 = vmatprep.subr.bf16.mxu0 %v1700
    %2215 = vmatpush1.bf16.msra.mxu0 %v1699
    %2216 = vmatprep.subr.bf16.mxu0 %v1724
    %2217 = vmatpush1.bf16.msra.mxu0 %v1723
    %2218 = vmatprep.subr.bf16.mxu0 %v1748
    %2219 = vmatpush1.bf16.msra.mxu0 %v1747
    %2220 = vmatprep.subr.bf16.mxu0 %v1772
    %2221 = vmatpush1.bf16.msra.mxu0 %v1771
    %2222 = vmatprep.subr.bf16.mxu0 %v1796
    %2223 = vmatpush1.bf16.msra.mxu0 %v1795
    %2224 = vmatprep.subr.bf16.mxu0 %v1820
    %2225 = vmatpush1.bf16.msra.mxu0 %v1819
    %2226 = vmatprep.subr.bf16.mxu0 %v1844
    %2227 = vmatpush1.bf16.msra.mxu0 %v1843
    %2228 = vmatprep.subr.bf16.mxu0 0
    %2229 = vmatpush1.bf16.msra.mxu0 0
    %2230 = vmatprep.subr.bf16.mxu0 0
    %2231 = vmatpush1.bf16.msra.mxu0 0
    %2232 = vmatprep.subr.bf16.mxu0 0
    %2233 = vmatpush1.bf16.msra.mxu0 0
    %2234 = vmatprep.subr.bf16.mxu0 0
    %2235 = vmatpush1.bf16.msra.mxu0 0
    %2236 = vmatprep.subr.bf16.mxu0 0
    %2237 = vmatpush1.bf16.msra.mxu0 0
    %2238 = vmatprep.subr.bf16.mxu0 0
    %2239 = vmatpush1.bf16.msra.mxu0 0
    %2240 = vmatprep.subr.bf16.mxu0 0
    %2241 = vmatpush1.bf16.msra.mxu0 0
    %2242 = vmatprep.subr.bf16.mxu0 0
    %2243 = vmatpush1.bf16.msra.mxu0 0
    %2244 = vmatprep.mubr.bf16.mxu0 0
    %2245 = vmatmul.mubr.bf16.gmra.mrb[0].mxu0 %v899
    %v2246 = vpop.f32.mrb[0].mxu0
    %v2247 = vadd.f32 0.0, %v2246
    %v2248 = vpop.f32.mrb[0].mxu0
    %v2249 = vadd.f32 0.0, %v2248
    %v2250 = vpop.f32.mrb[0].mxu0
    %v2251 = vadd.f32 0.0, %v2250
    %v2252 = vpop.f32.mrb[0].mxu0
    %v2253 = vadd.f32 0.0, %v2252
    %2254 = vmatprep.mubr.bf16.mxu0 0
    %2255 = vmatmul.mubr.bf16.gmra.mrb[0].mxu0 %v900
    %v2256 = vpop.f32.mrb[0].mxu0
    %v2257 = vadd.f32 0.0, %v2256
    %v2258 = vpop.f32.mrb[0].mxu0
    %v2259 = vadd.f32 0.0, %v2258
    %v2260 = vpop.f32.mrb[0].mxu0
    %v2261 = vadd.f32 0.0, %v2260
    %v2262 = vpop.f32.mrb[0].mxu0
    %v2263 = vadd.f32 0.0, %v2262
    %2264 = vdwg.mxu0
    %2265 = vmatprep.subr.bf16.mxu0 %v1678
    %2266 = vmatpush1.bf16.msra.mxu0 %v1677
    %2267 = vmatprep.subr.bf16.mxu0 %v1702
    %2268 = vmatpush1.bf16.msra.mxu0 %v1701
    %2269 = vmatprep.subr.bf16.mxu0 %v1726
    %2270 = vmatpush1.bf16.msra.mxu0 %v1725
    %2271 = vmatprep.subr.bf16.mxu0 %v1750
    %2272 = vmatpush1.bf16.msra.mxu0 %v1749
    %2273 = vmatprep.subr.bf16.mxu0 %v1774
    %2274 = vmatpush1.bf16.msra.mxu0 %v1773
    %2275 = vmatprep.subr.bf16.mxu0 %v1798
    %2276 = vmatpush1.bf16.msra.mxu0 %v1797
    %2277 = vmatprep.subr.bf16.mxu0 %v1822
    %2278 = vmatpush1.bf16.msra.mxu0 %v1821
    %2279 = vmatprep.subr.bf16.mxu0 %v1846
    %2280 = vmatpush1.bf16.msra.mxu0 %v1845
    %2281 = vmatprep.subr.bf16.mxu0 0
    %2282 = vmatpush1.bf16.msra.mxu0 0
    %2283 = vmatprep.subr.bf16.mxu0 0
    %2284 = vmatpush1.bf16.msra.mxu0 0
    %2285 = vmatprep.subr.bf16.mxu0 0
    %2286 = vmatpush1.bf16.msra.mxu0 0
    %2287 = vmatprep.subr.bf16.mxu0 0
    %2288 = vmatpush1.bf16.msra.mxu0 0
    %2289 = vmatprep.subr.bf16.mxu0 0
    %2290 = vmatpush1.bf16.msra.mxu0 0
    %2291 = vmatprep.subr.bf16.mxu0 0
    %2292 = vmatpush1.bf16.msra.mxu0 0
    %2293 = vmatprep.subr.bf16.mxu0 0
    %2294 = vmatpush1.bf16.msra.mxu0 0
    %2295 = vmatprep.subr.bf16.mxu0 0
    %2296 = vmatpush1.bf16.msra.mxu0 0
    %2297 = vmatprep.mubr.bf16.mxu0 0
    %2298 = vmatmul.mubr.bf16.gmra.mrb[0].mxu0 %v899
    %v2299 = vpop.f32.mrb[0].mxu0
    %v2300 = vadd.f32 0.0, %v2299
    %v2301 = vpop.f32.mrb[0].mxu0
    %v2302 = vadd.f32 0.0, %v2301
    %v2303 = vpop.f32.mrb[0].mxu0
    %v2304 = vadd.f32 0.0, %v2303
    %v2305 = vpop.f32.mrb[0].mxu0
    %v2306 = vadd.f32 0.0, %v2305
    %2307 = vmatprep.mubr.bf16.mxu0 0
    %2308 = vmatmul.mubr.bf16.gmra.mrb[0].mxu0 %v900
    %v2309 = vpop.f32.mrb[0].mxu0
    %v2310 = vadd.f32 0.0, %v2309
    %v2311 = vpop.f32.mrb[0].mxu0
    %v2312 = vadd.f32 0.0, %v2311
    %v2313 = vpop.f32.mrb[0].mxu0
    %v2314 = vadd.f32 0.0, %v2313
    %v2315 = vpop.f32.mrb[0].mxu0
    %v2316 = vadd.f32 0.0, %v2315
    %2317 = vdwg.mxu0
    %2318 = vmatprep.subr.bf16.mxu0 %v1680
    %2319 = vmatpush1.bf16.msra.mxu0 %v1679
    %2320 = vmatprep.subr.bf16.mxu0 %v1704
    %2321 = vmatpush1.bf16.msra.mxu0 %v1703
    %2322 = vmatprep.subr.bf16.mxu0 %v1728
    %2323 = vmatpush1.bf16.msra.mxu0 %v1727
    %2324 = vmatprep.subr.bf16.mxu0 %v1752
    %2325 = vmatpush1.bf16.msra.mxu0 %v1751
    %2326 = vmatprep.subr.bf16.mxu0 %v1776
    %2327 = vmatpush1.bf16.msra.mxu0 %v1775
    %2328 = vmatprep.subr.bf16.mxu0 %v1800
    %2329 = vmatpush1.bf16.msra.mxu0 %v1799
    %2330 = vmatprep.subr.bf16.mxu0 %v1824
    %2331 = vmatpush1.bf16.msra.mxu0 %v1823
    %2332 = vmatprep.subr.bf16.mxu0 %v1848
    %2333 = vmatpush1.bf16.msra.mxu0 %v1847
    %2334 = vmatprep.subr.bf16.mxu0 0
    %2335 = vmatpush1.bf16.msra.mxu0 0
    %2336 = vmatprep.subr.bf16.mxu0 0
    %2337 = vmatpush1.bf16.msra.mxu0 0
    %2338 = vmatprep.subr.bf16.mxu0 0
    %2339 = vmatpush1.bf16.msra.mxu0 0
    %2340 = vmatprep.subr.bf16.mxu0 0
    %2341 = vmatpush1.bf16.msra.mxu0 0
    %2342 = vmatprep.subr.bf16.mxu0 0
    %2343 = vmatpush1.bf16.msra.mxu0 0
    %2344 = vmatprep.subr.bf16.mxu0 0
    %2345 = vmatpush1.bf16.msra.mxu0 0
    %2346 = vmatprep.subr.bf16.mxu0 0
    %2347 = vmatpush1.bf16.msra.mxu0 0
    %2348 = vmatprep.subr.bf16.mxu0 0
    %2349 = vmatpush1.bf16.msra.mxu0 0
    %2350 = vmatprep.mubr.bf16.mxu0 0
    %2351 = vmatmul.mubr.bf16.gmra.mrb[0].mxu0 %v899
    %v2352 = vpop.f32.mrb[0].mxu0
    %v2353 = vadd.f32 0.0, %v2352
    %v2354 = vpop.f32.mrb[0].mxu0
    %v2355 = vadd.f32 0.0, %v2354
    %v2356 = vpop.f32.mrb[0].mxu0
    %v2357 = vadd.f32 0.0, %v2356
    %v2358 = vpop.f32.mrb[0].mxu0
    %v2359 = vadd.f32 0.0, %v2358
    %2360 = vmatprep.mubr.bf16.mxu0 0
    %2361 = vmatmul.mubr.bf16.gmra.mrb[0].mxu0 %v900
    %v2362 = vpop.f32.mrb[0].mxu0
    %v2363 = vadd.f32 0.0, %v2362
    %v2364 = vpop.f32.mrb[0].mxu0
    %v2365 = vadd.f32 0.0, %v2364
    %v2366 = vpop.f32.mrb[0].mxu0
    %v2367 = vadd.f32 0.0, %v2366
    %v2368 = vpop.f32.mrb[0].mxu0
    %v2369 = vadd.f32 0.0, %v2368
    %2370 = vdwg.mxu0
    %2371 = vmatprep.subr.bf16.mxu0 %v1682
    %2372 = vmatpush1.bf16.msra.mxu0 %v1681
    %2373 = vmatprep.subr.bf16.mxu0 %v1706
    %2374 = vmatpush1.bf16.msra.mxu0 %v1705
    %2375 = vmatprep.subr.bf16.mxu0 %v1730
    %2376 = vmatpush1.bf16.msra.mxu0 %v1729
    %2377 = vmatprep.subr.bf16.mxu0 %v1754
    %2378 = vmatpush1.bf16.msra.mxu0 %v1753
    %2379 = vmatprep.subr.bf16.mxu0 %v1778
    %2380 = vmatpush1.bf16.msra.mxu0 %v1777
    %2381 = vmatprep.subr.bf16.mxu0 %v1802
    %2382 = vmatpush1.bf16.msra.mxu0 %v1801
    %2383 = vmatprep.subr.bf16.mxu0 %v1826
    %2384 = vmatpush1.bf16.msra.mxu0 %v1825
    %2385 = vmatprep.subr.bf16.mxu0 %v1850
    %2386 = vmatpush1.bf16.msra.mxu0 %v1849
    %2387 = vmatprep.subr.bf16.mxu0 0
    %2388 = vmatpush1.bf16.msra.mxu0 0
    %2389 = vmatprep.subr.bf16.mxu0 0
    %2390 = vmatpush1.bf16.msra.mxu0 0
    %2391 = vmatprep.subr.bf16.mxu0 0
    %2392 = vmatpush1.bf16.msra.mxu0 0
    %2393 = vmatprep.subr.bf16.mxu0 0
    %2394 = vmatpush1.bf16.msra.mxu0 0
    %2395 = vmatprep.subr.bf16.mxu0 0
    %2396 = vmatpush1.bf16.msra.mxu0 0
    %2397 = vmatprep.subr.bf16.mxu0 0
    %2398 = vmatpush1.bf16.msra.mxu0 0
    %2399 = vmatprep.subr.bf16.mxu0 0
    %2400 = vmatpush1.bf16.msra.mxu0 0
    %2401 = vmatprep.subr.bf16.mxu0 0
    %2402 = vmatpush1.bf16.msra.mxu0 0
    %2403 = vmatprep.mubr.bf16.mxu0 0
    %2404 = vmatmul.mubr.bf16.gmra.mrb[0].mxu0 %v899
    %v2405 = vpop.f32.mrb[0].mxu0
    %v2406 = vadd.f32 0.0, %v2405
    %v2407 = vpop.f32.mrb[0].mxu0
    %v2408 = vadd.f32 0.0, %v2407
    %v2409 = vpop.f32.mrb[0].mxu0
    %v2410 = vadd.f32 0.0, %v2409
    %v2411 = vpop.f32.mrb[0].mxu0
    %v2412 = vadd.f32 0.0, %v2411
    %2413 = vmatprep.mubr.bf16.mxu0 0
    %2414 = vmatmul.mubr.bf16.gmra.mrb[0].mxu0 %v900
    %v2415 = vpop.f32.mrb[0].mxu0
    %v2416 = vadd.f32 0.0, %v2415
    %v2417 = vpop.f32.mrb[0].mxu0
    %v2418 = vadd.f32 0.0, %v2417
    %v2419 = vpop.f32.mrb[0].mxu0
    %v2420 = vadd.f32 0.0, %v2419
    %v2421 = vpop.f32.mrb[0].mxu0
    %v2422 = vadd.f32 0.0, %v2421
    %2423 = vdwg.mxu0
    %2424 = vmatprep.subr.bf16.mxu0 %v1684
    %2425 = vmatpush1.bf16.msra.mxu0 %v1683
    %2426 = vmatprep.subr.bf16.mxu0 %v1708
    %2427 = vmatpush1.bf16.msra.mxu0 %v1707
    %2428 = vmatprep.subr.bf16.mxu0 %v1732
    %2429 = vmatpush1.bf16.msra.mxu0 %v1731
    %2430 = vmatprep.subr.bf16.mxu0 %v1756
    %2431 = vmatpush1.bf16.msra.mxu0 %v1755
    %2432 = vmatprep.subr.bf16.mxu0 %v1780
    %2433 = vmatpush1.bf16.msra.mxu0 %v1779
    %2434 = vmatprep.subr.bf16.mxu0 %v1804
    %2435 = vmatpush1.bf16.msra.mxu0 %v1803
    %2436 = vmatprep.subr.bf16.mxu0 %v1828
    %2437 = vmatpush1.bf16.msra.mxu0 %v1827
    %2438 = vmatprep.subr.bf16.mxu0 %v1852
    %2439 = vmatpush1.bf16.msra.mxu0 %v1851
    %2440 = vmatprep.subr.bf16.mxu0 0
    %2441 = vmatpush1.bf16.msra.mxu0 0
    %2442 = vmatprep.subr.bf16.mxu0 0
    %2443 = vmatpush1.bf16.msra.mxu0 0
    %2444 = vmatprep.subr.bf16.mxu0 0
    %2445 = vmatpush1.bf16.msra.mxu0 0
    %2446 = vmatprep.subr.bf16.mxu0 0
    %2447 = vmatpush1.bf16.msra.mxu0 0
    %2448 = vmatprep.subr.bf16.mxu0 0
    %2449 = vmatpush1.bf16.msra.mxu0 0
    %2450 = vmatprep.subr.bf16.mxu0 0
    %2451 = vmatpush1.bf16.msra.mxu0 0
    %2452 = vmatprep.subr.bf16.mxu0 0
    %2453 = vmatpush1.bf16.msra.mxu0 0
    %2454 = vmatprep.subr.bf16.mxu0 0
    %2455 = vmatpush1.bf16.msra.mxu0 0
    %2456 = vmatprep.mubr.bf16.mxu0 0
    %2457 = vmatmul.mubr.bf16.gmra.mrb[0].mxu0 %v899
    %v2458 = vpop.f32.mrb[0].mxu0
    %v2459 = vadd.f32 0.0, %v2458
    %v2460 = vpop.f32.mrb[0].mxu0
    %v2461 = vadd.f32 0.0, %v2460
    %v2462 = vpop.f32.mrb[0].mxu0
    %v2463 = vadd.f32 0.0, %v2462
    %v2464 = vpop.f32.mrb[0].mxu0
    %v2465 = vadd.f32 0.0, %v2464
    %2466 = vmatprep.mubr.bf16.mxu0 0
    %2467 = vmatmul.mubr.bf16.gmra.mrb[0].mxu0 %v900
    %v2468 = vpop.f32.mrb[0].mxu0
    %v2469 = vadd.f32 0.0, %v2468
    %v2470 = vpop.f32.mrb[0].mxu0
    %v2471 = vadd.f32 0.0, %v2470
    %v2472 = vpop.f32.mrb[0].mxu0
    %v2473 = vadd.f32 0.0, %v2472
    %v2474 = vpop.f32.mrb[0].mxu0
    %v2475 = vadd.f32 0.0, %v2474
    %2476 = vdwg.mxu0
    %2477 = vmatprep.subr.bf16.mxu0 %v1686
    %2478 = vmatpush1.bf16.msra.mxu0 %v1685
    %2479 = vmatprep.subr.bf16.mxu0 %v1710
    %2480 = vmatpush1.bf16.msra.mxu0 %v1709
    %2481 = vmatprep.subr.bf16.mxu0 %v1734
    %2482 = vmatpush1.bf16.msra.mxu0 %v1733
    %2483 = vmatprep.subr.bf16.mxu0 %v1758
    %2484 = vmatpush1.bf16.msra.mxu0 %v1757
    %2485 = vmatprep.subr.bf16.mxu0 %v1782
    %2486 = vmatpush1.bf16.msra.mxu0 %v1781
    %2487 = vmatprep.subr.bf16.mxu0 %v1806
    %2488 = vmatpush1.bf16.msra.mxu0 %v1805
    %2489 = vmatprep.subr.bf16.mxu0 %v1830
    %2490 = vmatpush1.bf16.msra.mxu0 %v1829
    %2491 = vmatprep.subr.bf16.mxu0 %v1854
    %2492 = vmatpush1.bf16.msra.mxu0 %v1853
    %2493 = vmatprep.subr.bf16.mxu0 0
    %2494 = vmatpush1.bf16.msra.mxu0 0
    %2495 = vmatprep.subr.bf16.mxu0 0
    %2496 = vmatpush1.bf16.msra.mxu0 0
    %2497 = vmatprep.subr.bf16.mxu0 0
    %2498 = vmatpush1.bf16.msra.mxu0 0
    %2499 = vmatprep.subr.bf16.mxu0 0
    %2500 = vmatpush1.bf16.msra.mxu0 0
    %2501 = vmatprep.subr.bf16.mxu0 0
    %2502 = vmatpush1.bf16.msra.mxu0 0
    %2503 = vmatprep.subr.bf16.mxu0 0
    %2504 = vmatpush1.bf16.msra.mxu0 0
    %2505 = vmatprep.subr.bf16.mxu0 0
    %2506 = vmatpush1.bf16.msra.mxu0 0
    %2507 = vmatprep.subr.bf16.mxu0 0
    %2508 = vmatpush1.bf16.msra.mxu0 0
    %2509 = vmatprep.mubr.bf16.mxu0 0
    %2510 = vmatmul.mubr.bf16.gmra.mrb[0].mxu0 %v899
    %v2511 = vpop.f32.mrb[0].mxu0
    %v2512 = vadd.f32 0.0, %v2511
    %v2513 = vpop.f32.mrb[0].mxu0
    %v2514 = vadd.f32 0.0, %v2513
    %v2515 = vpop.f32.mrb[0].mxu0
    %v2516 = vadd.f32 0.0, %v2515
    %v2517 = vpop.f32.mrb[0].mxu0
    %v2518 = vadd.f32 0.0, %v2517
    %2519 = vmatprep.mubr.bf16.mxu0 0
    %2520 = vmatmul.mubr.bf16.gmra.mrb[0].mxu0 %v900
    %v2521 = vpop.f32.mrb[0].mxu0
    %v2522 = vadd.f32 0.0, %v2521
    %v2523 = vpop.f32.mrb[0].mxu0
    %v2524 = vadd.f32 0.0, %v2523
    %v2525 = vpop.f32.mrb[0].mxu0
    %v2526 = vadd.f32 0.0, %v2525
    %v2527 = vpop.f32.mrb[0].mxu0
    %v2528 = vadd.f32 0.0, %v2527
    %2529 = vdwg.mxu0
    %2530 = vmatprep.subr.bf16.mxu0 %v1688
    %2531 = vmatpush1.bf16.msra.mxu0 %v1687
    %2532 = vmatprep.subr.bf16.mxu0 %v1712
    %2533 = vmatpush1.bf16.msra.mxu0 %v1711
    %2534 = vmatprep.subr.bf16.mxu0 %v1736
    %2535 = vmatpush1.bf16.msra.mxu0 %v1735
    %2536 = vmatprep.subr.bf16.mxu0 %v1760
    %2537 = vmatpush1.bf16.msra.mxu0 %v1759
    %2538 = vmatprep.subr.bf16.mxu0 %v1784
    %2539 = vmatpush1.bf16.msra.mxu0 %v1783
    %2540 = vmatprep.subr.bf16.mxu0 %v1808
    %2541 = vmatpush1.bf16.msra.mxu0 %v1807
    %2542 = vmatprep.subr.bf16.mxu0 %v1832
    %2543 = vmatpush1.bf16.msra.mxu0 %v1831
    %2544 = vmatprep.subr.bf16.mxu0 %v1856
    %2545 = vmatpush1.bf16.msra.mxu0 %v1855
    %2546 = vmatprep.subr.bf16.mxu0 0
    %2547 = vmatpush1.bf16.msra.mxu0 0
    %2548 = vmatprep.subr.bf16.mxu0 0
    %2549 = vmatpush1.bf16.msra.mxu0 0
    %2550 = vmatprep.subr.bf16.mxu0 0
    %2551 = vmatpush1.bf16.msra.mxu0 0
    %2552 = vmatprep.subr.bf16.mxu0 0
    %2553 = vmatpush1.bf16.msra.mxu0 0
    %2554 = vmatprep.subr.bf16.mxu0 0
    %2555 = vmatpush1.bf16.msra.mxu0 0
    %2556 = vmatprep.subr.bf16.mxu0 0
    %2557 = vmatpush1.bf16.msra.mxu0 0
    %2558 = vmatprep.subr.bf16.mxu0 0
    %2559 = vmatpush1.bf16.msra.mxu0 0
    %2560 = vmatprep.subr.bf16.mxu0 0
    %2561 = vmatpush1.bf16.msra.mxu0 0
    %2562 = vmatprep.mubr.bf16.mxu0 0
    %2563 = vmatmul.mubr.bf16.gmra.mrb[0].mxu0 %v899
    %v2564 = vpop.f32.mrb[0].mxu0
    %v2565 = vadd.f32 0.0, %v2564
    %v2566 = vpop.f32.mrb[0].mxu0
    %v2567 = vadd.f32 0.0, %v2566
    %v2568 = vpop.f32.mrb[0].mxu0
    %v2569 = vadd.f32 0.0, %v2568
    %v2570 = vpop.f32.mrb[0].mxu0
    %v2571 = vadd.f32 0.0, %v2570
    %2572 = vmatprep.mubr.bf16.mxu0 0
    %2573 = vmatmul.mubr.bf16.gmra.mrb[0].mxu0 %v900
    %v2574 = vpop.f32.mrb[0].mxu0
    %v2575 = vadd.f32 0.0, %v2574
    %v2576 = vpop.f32.mrb[0].mxu0
    %v2577 = vadd.f32 0.0, %v2576
    %v2578 = vpop.f32.mrb[0].mxu0
    %v2579 = vadd.f32 0.0, %v2578
    %v2580 = vpop.f32.mrb[0].mxu0
    %v2581 = vadd.f32 0.0, %v2580
    %2582 = vdwg.mxu0
    %2583 = vmatprep.subr.bf16.mxu0 %v1690
    %2584 = vmatpush1.bf16.msra.mxu0 %v1689
    %2585 = vmatprep.subr.bf16.mxu0 %v1714
    %2586 = vmatpush1.bf16.msra.mxu0 %v1713
    %2587 = vmatprep.subr.bf16.mxu0 %v1738
    %2588 = vmatpush1.bf16.msra.mxu0 %v1737
    %2589 = vmatprep.subr.bf16.mxu0 %v1762
    %2590 = vmatpush1.bf16.msra.mxu0 %v1761
    %2591 = vmatprep.subr.bf16.mxu0 %v1786
    %2592 = vmatpush1.bf16.msra.mxu0 %v1785
    %2593 = vmatprep.subr.bf16.mxu0 %v1810
    %2594 = vmatpush1.bf16.msra.mxu0 %v1809
    %2595 = vmatprep.subr.bf16.mxu0 %v1834
    %2596 = vmatpush1.bf16.msra.mxu0 %v1833
    %2597 = vmatprep.subr.bf16.mxu0 %v1858
    %2598 = vmatpush1.bf16.msra.mxu0 %v1857
    %2599 = vmatprep.subr.bf16.mxu0 0
    %2600 = vmatpush1.bf16.msra.mxu0 0
    %2601 = vmatprep.subr.bf16.mxu0 0
    %2602 = vmatpush1.bf16.msra.mxu0 0
    %2603 = vmatprep.subr.bf16.mxu0 0
    %2604 = vmatpush1.bf16.msra.mxu0 0
    %2605 = vmatprep.subr.bf16.mxu0 0
    %2606 = vmatpush1.bf16.msra.mxu0 0
    %2607 = vmatprep.subr.bf16.mxu0 0
    %2608 = vmatpush1.bf16.msra.mxu0 0
    %2609 = vmatprep.subr.bf16.mxu0 0
    %2610 = vmatpush1.bf16.msra.mxu0 0
    %2611 = vmatprep.subr.bf16.mxu0 0
    %2612 = vmatpush1.bf16.msra.mxu0 0
    %2613 = vmatprep.subr.bf16.mxu0 0
    %2614 = vmatpush1.bf16.msra.mxu0 0
    %2615 = vmatprep.mubr.bf16.mxu0 0
    %2616 = vmatmul.mubr.bf16.gmra.mrb[0].mxu0 %v899
    %v2617 = vpop.f32.mrb[0].mxu0
    %v2618 = vadd.f32 0.0, %v2617
    %v2619 = vpop.f32.mrb[0].mxu0
    %v2620 = vadd.f32 0.0, %v2619
    %v2621 = vpop.f32.mrb[0].mxu0
    %v2622 = vadd.f32 0.0, %v2621
    %v2623 = vpop.f32.mrb[0].mxu0
    %v2624 = vadd.f32 0.0, %v2623
    %2625 = vmatprep.mubr.bf16.mxu0 0
    %2626 = vmatmul.mubr.bf16.gmra.mrb[0].mxu0 %v900
    %v2627 = vpop.f32.mrb[0].mxu0
    %v2628 = vadd.f32 0.0, %v2627
    %v2629 = vpop.f32.mrb[0].mxu0
    %v2630 = vadd.f32 0.0, %v2629
    %v2631 = vpop.f32.mrb[0].mxu0
    %v2632 = vadd.f32 0.0, %v2631
    %v2633 = vpop.f32.mrb[0].mxu0
    %v2634 = vadd.f32 0.0, %v2633
    %2635 = vdwg.mxu0
    %2636 = vmatprep.subr.bf16.mxu0 %v1692
    %2637 = vmatpush1.bf16.msra.mxu0 %v1691
    %2638 = vmatprep.subr.bf16.mxu0 %v1716
    %2639 = vmatpush1.bf16.msra.mxu0 %v1715
    %2640 = vmatprep.subr.bf16.mxu0 %v1740
    %2641 = vmatpush1.bf16.msra.mxu0 %v1739
    %2642 = vmatprep.subr.bf16.mxu0 %v1764
    %2643 = vmatpush1.bf16.msra.mxu0 %v1763
    %2644 = vmatprep.subr.bf16.mxu0 %v1788
    %2645 = vmatpush1.bf16.msra.mxu0 %v1787
    %2646 = vmatprep.subr.bf16.mxu0 %v1812
    %2647 = vmatpush1.bf16.msra.mxu0 %v1811
    %2648 = vmatprep.subr.bf16.mxu0 %v1836
    %2649 = vmatpush1.bf16.msra.mxu0 %v1835
    %2650 = vmatprep.subr.bf16.mxu0 %v1860
    %2651 = vmatpush1.bf16.msra.mxu0 %v1859
    %2652 = vmatprep.subr.bf16.mxu0 0
    %2653 = vmatpush1.bf16.msra.mxu0 0
    %2654 = vmatprep.subr.bf16.mxu0 0
    %2655 = vmatpush1.bf16.msra.mxu0 0
    %2656 = vmatprep.subr.bf16.mxu0 0
    %2657 = vmatpush1.bf16.msra.mxu0 0
    %2658 = vmatprep.subr.bf16.mxu0 0
    %2659 = vmatpush1.bf16.msra.mxu0 0
    %2660 = vmatprep.subr.bf16.mxu0 0
    %2661 = vmatpush1.bf16.msra.mxu0 0
    %2662 = vmatprep.subr.bf16.mxu0 0
    %2663 = vmatpush1.bf16.msra.mxu0 0
    %2664 = vmatprep.subr.bf16.mxu0 0
    %2665 = vmatpush1.bf16.msra.mxu0 0
    %2666 = vmatprep.subr.bf16.mxu0 0
    %2667 = vmatpush1.bf16.msra.mxu0 0
    %2668 = vmatprep.mubr.bf16.mxu0 0
    %2669 = vmatmul.mubr.bf16.gmra.mrb[0].mxu0 %v899
    %v2670 = vpop.f32.mrb[0].mxu0
    %v2671 = vadd.f32 0.0, %v2670
    %v2672 = vpop.f32.mrb[0].mxu0
    %v2673 = vadd.f32 0.0, %v2672
    %v2674 = vpop.f32.mrb[0].mxu0
    %v2675 = vadd.f32 0.0, %v2674
    %v2676 = vpop.f32.mrb[0].mxu0
    %v2677 = vadd.f32 0.0, %v2676
    %2678 = vmatprep.mubr.bf16.mxu0 0
    %2679 = vmatmul.mubr.bf16.gmra.mrb[0].mxu0 %v900
    %v2680 = vpop.f32.mrb[0].mxu0
    %v2681 = vadd.f32 0.0, %v2680
    %v2682 = vpop.f32.mrb[0].mxu0
    %v2683 = vadd.f32 0.0, %v2682
    %v2684 = vpop.f32.mrb[0].mxu0
    %v2685 = vadd.f32 0.0, %v2684
    %v2686 = vpop.f32.mrb[0].mxu0
    %v2687 = vadd.f32 0.0, %v2686
    %2688 = vdwg.mxu0
    %v2689 = vld [vmem:[%s7] sm:$0xff]
    %v2691 = vlaneseq
    %v2692 = vshrl.u32 %v2691, 7
    %v2693 = vsub.s32 0, %v2692
    %v2694 = vrot.slane %v2689, %v2693
    %v2695 = vlaneseq
    %v2696 = vshrl.u32 %v2695, 7
    %v2697 = vsub.s32 1, %v2696
    %v2698 = vrot.slane %v2689, %v2697
    %v2699 = vlaneseq
    %v2700 = vshrl.u32 %v2699, 7
    %v2701 = vsub.s32 2, %v2700
    %v2702 = vrot.slane %v2689, %v2701
    %v2703 = vlaneseq
    %v2704 = vshrl.u32 %v2703, 7
    %v2705 = vsub.s32 3, %v2704
    %v2706 = vrot.slane %v2689, %v2705
    %v2707 = vlaneseq
    %v2708 = vshrl.u32 %v2707, 7
    %v2709 = vsub.s32 4, %v2708
    %v2710 = vrot.slane %v2689, %v2709
    %v2711 = vlaneseq
    %v2712 = vshrl.u32 %v2711, 7
    %v2713 = vsub.s32 5, %v2712
    %v2714 = vrot.slane %v2689, %v2713
    %v2715 = vlaneseq
    %v2716 = vshrl.u32 %v2715, 7
    %v2717 = vsub.s32 6, %v2716
    %v2718 = vrot.slane %v2689, %v2717
    %v2719 = vlaneseq
    %v2720 = vshrl.u32 %v2719, 7
    %v2721 = vsub.s32 7, %v2720
    %v2722 = vrot.slane %v2689, %v2721
    %v2731 = vadd.f32 %v2300, %v2694
    %v2732 = vadd.f32 %v2302, %v2698
    %v2733 = vadd.f32 %v2353, %v2702
    %v2734 = vadd.f32 %v2355, %v2706
    %v2735 = vadd.f32 %v2406, %v2710
    %v2736 = vadd.f32 %v2408, %v2714
    %v2737 = vadd.f32 %v2459, %v2718
    %v2738 = vadd.f32 %v2461, %v2722
    %v2739 = vadd.f32 %v2304, %v2694
    %v2740 = vadd.f32 %v2306, %v2698
    %v2741 = vadd.f32 %v2357, %v2702
    %v2742 = vadd.f32 %v2359, %v2706
    %v2743 = vadd.f32 %v2410, %v2710
    %v2744 = vadd.f32 %v2412, %v2714
    %v2745 = vadd.f32 %v2463, %v2718
    %v2746 = vadd.f32 %v2465, %v2722
    %v2747 = vadd.f32 %v2310, %v2694
    %v2748 = vadd.f32 %v2312, %v2698
    %v2749 = vadd.f32 %v2363, %v2702
    %v2750 = vadd.f32 %v2365, %v2706
    %v2751 = vadd.f32 %v2416, %v2710
    %v2752 = vadd.f32 %v2418, %v2714
    %v2753 = vadd.f32 %v2469, %v2718
    %v2754 = vadd.f32 %v2471, %v2722
    %v2755 = vadd.f32 %v2314, %v2694
    %v2756 = vadd.f32 %v2316, %v2698
    %v2757 = vadd.f32 %v2367, %v2702
    %v2758 = vadd.f32 %v2369, %v2706
    %v2759 = vadd.f32 %v2420, %v2710
    %v2760 = vadd.f32 %v2422, %v2714
    %v2761 = vadd.f32 %v2473, %v2718
    %v2762 = vadd.f32 %v2475, %v2722
    %2763 = vst [vmem:[#allocation4] sm:$0xff] %v2731
    %2764 = vst [vmem:[#allocation4 + $0x8] sm:$0xff] %v2732
    %2765 = vst [vmem:[#allocation4 + $0x10] sm:$0xff] %v2733
    %2766 = vst [vmem:[#allocation4 + $0x18] sm:$0xff] %v2734
    %2767 = vst [vmem:[#allocation4 + $0x20] sm:$0xff] %v2735
    %2768 = vst [vmem:[#allocation4 + $0x28] sm:$0xff] %v2736
    %2769 = vst [vmem:[#allocation4 + $0x30] sm:$0xff] %v2737
    %2770 = vst [vmem:[#allocation4 + $0x38] sm:$0xff] %v2738
    %2771 = vst [vmem:[#allocation4 + $0x40] sm:$0xff] %v2739
    %2772 = vst [vmem:[#allocation4 + $0x48] sm:$0xff] %v2740
    %2773 = vst [vmem:[#allocation4 + $0x50] sm:$0xff] %v2741
    %2774 = vst [vmem:[#allocation4 + $0x58] sm:$0xff] %v2742
    %2775 = vst [vmem:[#allocation4 + $0x60] sm:$0xff] %v2743
    %2776 = vst [vmem:[#allocation4 + $0x68] sm:$0xff] %v2744
    %2777 = vst [vmem:[#allocation4 + $0x70] sm:$0xff] %v2745
    %2778 = vst [vmem:[#allocation4 + $0x78] sm:$0xff] %v2746
    %2779 = vst [vmem:[#allocation4 + $0x80] sm:$0xff] %v2747
    %2780 = vst [vmem:[#allocation4 + $0x88] sm:$0xff] %v2748
    %2781 = vst [vmem:[#allocation4 + $0x90] sm:$0xff] %v2749
    %2782 = vst [vmem:[#allocation4 + $0x98] sm:$0xff] %v2750
    %2783 = vst [vmem:[#allocation4 + $0xa0] sm:$0xff] %v2751
    %2784 = vst [vmem:[#allocation4 + $0xa8] sm:$0xff] %v2752
    %2785 = vst [vmem:[#allocation4 + $0xb0] sm:$0xff] %v2753
    %2786 = vst [vmem:[#allocation4 + $0xb8] sm:$0xff] %v2754
    %2787 = vst [vmem:[#allocation4 + $0xc0] sm:$0xff] %v2755
    %2788 = vst [vmem:[#allocation4 + $0xc8] sm:$0xff] %v2756
    %2789 = vst [vmem:[#allocation4 + $0xd0] sm:$0xff] %v2757
    %2790 = vst [vmem:[#allocation4 + $0xd8] sm:$0xff] %v2758
    %2791 = vst [vmem:[#allocation4 + $0xe0] sm:$0xff] %v2759
    %2792 = vst [vmem:[#allocation4 + $0xe8] sm:$0xff] %v2760
    %2793 = vst [vmem:[#allocation4 + $0xf0] sm:$0xff] %v2761
    %2794 = vst [vmem:[#allocation4 + $0xf8] sm:$0xff] %v2762
    %v2795 = vld [vmem:[#allocation4] sm:$0xfe]
    %v2796 = vld [vmem:[#allocation4 + $0x8] sm:$0xfe]
    %v2797 = vld [vmem:[#allocation4 + $0x10] sm:$0xfe]
    %v2798 = vld [vmem:[#allocation4 + $0x18] sm:$0xfe]
    %v2799 = vld [vmem:[#allocation4 + $0x20] sm:$0xfe]
    %v2800 = vld [vmem:[#allocation4 + $0x28] sm:$0xfe]
    %v2801 = vld [vmem:[#allocation4 + $0x30] sm:$0xfe]
    %v2802 = vld [vmem:[#allocation4 + $0x38] sm:$0xfe]
    %v2803 = vld [vmem:[#allocation4 + $0x40] sm:$0xff]
    %v2804 = vld [vmem:[#allocation4 + $0x48] sm:$0xff]
    %v2805 = vld [vmem:[#allocation4 + $0x50] sm:$0xff]
    %v2806 = vld [vmem:[#allocation4 + $0x58] sm:$0xff]
    %v2807 = vld [vmem:[#allocation4 + $0x60] sm:$0xff]
    %v2808 = vld [vmem:[#allocation4 + $0x68] sm:$0xff]
    %v2809 = vld [vmem:[#allocation4 + $0x70] sm:$0xff]
    %v2810 = vld [vmem:[#allocation4 + $0x78] sm:$0xff]
    %v2811 = vld [vmem:[#allocation4 + $0x80] sm:$0xfe]
    %v2812 = vld [vmem:[#allocation4 + $0x88] sm:$0xfe]
    %v2813 = vld [vmem:[#allocation4 + $0x90] sm:$0xfe]
    %v2814 = vld [vmem:[#allocation4 + $0x98] sm:$0xfe]
    %v2815 = vld [vmem:[#allocation4 + $0xa0] sm:$0xfe]
    %v2816 = vld [vmem:[#allocation4 + $0xa8] sm:$0xfe]
    %v2817 = vld [vmem:[#allocation4 + $0xb0] sm:$0xfe]
    %v2818 = vld [vmem:[#allocation4 + $0xb8] sm:$0xfe]
    %v2819 = vld [vmem:[#allocation4 + $0xc0] sm:$0xff]
    %v2820 = vld [vmem:[#allocation4 + $0xc8] sm:$0xff]
    %v2821 = vld [vmem:[#allocation4 + $0xd0] sm:$0xff]
    %v2822 = vld [vmem:[#allocation4 + $0xd8] sm:$0xff]
    %v2823 = vld [vmem:[#allocation4 + $0xe0] sm:$0xff]
    %v2824 = vld [vmem:[#allocation4 + $0xe8] sm:$0xff]
    %v2825 = vld [vmem:[#allocation4 + $0xf0] sm:$0xff]
    %v2826 = vld [vmem:[#allocation4 + $0xf8] sm:$0xff]
    %vm2859 = vcmask 1040384
    %v2860 = vrot.slane %v2088, 7
    %v2861 = vrot.slane %v2090, 7
    %v2862 = vrot.slane %v2141, 7
    %v2863 = vrot.slane %v2143, 7
    %v2864 = vrot.slane %v2194, 7
    %v2865 = vrot.slane %v2196, 7
    %v2866 = vrot.slane %v2247, 7
    %v2867 = vrot.slane %v2249, 7
    %v2868 = vrot.slane %v2092, 7
    %v2869 = vsel %vm2859, %v2860, %v2868
    %v2870 = vrot.slane %v2094, 7
    %v2871 = vsel %vm2859, %v2861, %v2870
    %v2872 = vrot.slane %v2145, 7
    %v2873 = vsel %vm2859, %v2862, %v2872
    %v2874 = vrot.slane %v2147, 7
    %v2875 = vsel %vm2859, %v2863, %v2874
    %v2876 = vrot.slane %v2198, 7
    %v2877 = vsel %vm2859, %v2864, %v2876
    %v2878 = vrot.slane %v2200, 7
    %v2879 = vsel %vm2859, %v2865, %v2878
    %v2880 = vrot.slane %v2251, 7
    %v2881 = vsel %vm2859, %v2866, %v2880
    %v2882 = vrot.slane %v2253, 7
    %v2883 = vsel %vm2859, %v2867, %v2882
    %v2884 = vrot.slane %v2098, 7
    %v2885 = vrot.slane %v2100, 7
    %v2886 = vrot.slane %v2151, 7
    %v2887 = vrot.slane %v2153, 7
    %v2888 = vrot.slane %v2204, 7
    %v2889 = vrot.slane %v2206, 7
    %v2890 = vrot.slane %v2257, 7
    %v2891 = vrot.slane %v2259, 7
    %v2892 = vrot.slane %v2102, 7
    %v2893 = vsel %vm2859, %v2884, %v2892
    %v2894 = vrot.slane %v2104, 7
    %v2895 = vsel %vm2859, %v2885, %v2894
    %v2896 = vrot.slane %v2155, 7
    %v2897 = vsel %vm2859, %v2886, %v2896
    %v2898 = vrot.slane %v2157, 7
    %v2899 = vsel %vm2859, %v2887, %v2898
    %v2900 = vrot.slane %v2208, 7
    %v2901 = vsel %vm2859, %v2888, %v2900
    %v2902 = vrot.slane %v2210, 7
    %v2903 = vsel %vm2859, %v2889, %v2902
    %v2904 = vrot.slane %v2261, 7
    %v2905 = vsel %vm2859, %v2890, %v2904
    %v2906 = vrot.slane %v2263, 7
    %v2907 = vsel %vm2859, %v2891, %v2906
    %v2940 = vadd.f32 %v2795, %v2860
    %v2941 = vadd.f32 %v2796, %v2861
    %v2942 = vadd.f32 %v2797, %v2862
    %v2943 = vadd.f32 %v2798, %v2863
    %v2944 = vadd.f32 %v2799, %v2864
    %v2945 = vadd.f32 %v2800, %v2865
    %v2946 = vadd.f32 %v2801, %v2866
    %v2947 = vadd.f32 %v2802, %v2867
    %v2948 = vadd.f32 %v2803, %v2869
    %v2949 = vadd.f32 %v2804, %v2871
    %v2950 = vadd.f32 %v2805, %v2873
    %v2951 = vadd.f32 %v2806, %v2875
    %v2952 = vadd.f32 %v2807, %v2877
    %v2953 = vadd.f32 %v2808, %v2879
    %v2954 = vadd.f32 %v2809, %v2881
    %v2955 = vadd.f32 %v2810, %v2883
    %v2956 = vadd.f32 %v2811, %v2884
    %v2957 = vadd.f32 %v2812, %v2885
    %v2958 = vadd.f32 %v2813, %v2886
    %v2959 = vadd.f32 %v2814, %v2887
    %v2960 = vadd.f32 %v2815, %v2888
    %v2961 = vadd.f32 %v2816, %v2889
    %v2962 = vadd.f32 %v2817, %v2890
    %v2963 = vadd.f32 %v2818, %v2891
    %v2964 = vadd.f32 %v2819, %v2893
    %v2965 = vadd.f32 %v2820, %v2895
    %v2966 = vadd.f32 %v2821, %v2897
    %v2967 = vadd.f32 %v2822, %v2899
    %v2968 = vadd.f32 %v2823, %v2901
    %v2969 = vadd.f32 %v2824, %v2903
    %v2970 = vadd.f32 %v2825, %v2905
    %v2971 = vadd.f32 %v2826, %v2907
    %2972 = vst [vmem:[#allocation4] sm:$0xfe] %v2940
    %2973 = vst [vmem:[#allocation4 + $0x8] sm:$0xfe] %v2941
    %2974 = vst [vmem:[#allocation4 + $0x10] sm:$0xfe] %v2942
    %2975 = vst [vmem:[#allocation4 + $0x18] sm:$0xfe] %v2943
    %2976 = vst [vmem:[#allocation4 + $0x20] sm:$0xfe] %v2944
    %2977 = vst [vmem:[#allocation4 + $0x28] sm:$0xfe] %v2945
    %2978 = vst [vmem:[#allocation4 + $0x30] sm:$0xfe] %v2946
    %2979 = vst [vmem:[#allocation4 + $0x38] sm:$0xfe] %v2947
    %2980 = vst [vmem:[#allocation4 + $0x40] sm:$0xff] %v2948
    %2981 = vst [vmem:[#allocation4 + $0x48] sm:$0xff] %v2949
    %2982 = vst [vmem:[#allocation4 + $0x50] sm:$0xff] %v2950
    %2983 = vst [vmem:[#allocation4 + $0x58] sm:$0xff] %v2951
    %2984 = vst [vmem:[#allocation4 + $0x60] sm:$0xff] %v2952
    %2985 = vst [vmem:[#allocation4 + $0x68] sm:$0xff] %v2953
    %2986 = vst [vmem:[#allocation4 + $0x70] sm:$0xff] %v2954
    %2987 = vst [vmem:[#allocation4 + $0x78] sm:$0xff] %v2955
    %2988 = vst [vmem:[#allocation4 + $0x80] sm:$0xfe] %v2956
    %2989 = vst [vmem:[#allocation4 + $0x88] sm:$0xfe] %v2957
    %2990 = vst [vmem:[#allocation4 + $0x90] sm:$0xfe] %v2958
    %2991 = vst [vmem:[#allocation4 + $0x98] sm:$0xfe] %v2959
    %2992 = vst [vmem:[#allocation4 + $0xa0] sm:$0xfe] %v2960
    %2993 = vst [vmem:[#allocation4 + $0xa8] sm:$0xfe] %v2961
    %2994 = vst [vmem:[#allocation4 + $0xb0] sm:$0xfe] %v2962
    %2995 = vst [vmem:[#allocation4 + $0xb8] sm:$0xfe] %v2963
    %2996 = vst [vmem:[#allocation4 + $0xc0] sm:$0xff] %v2964
    %2997 = vst [vmem:[#allocation4 + $0xc8] sm:$0xff] %v2965
    %2998 = vst [vmem:[#allocation4 + $0xd0] sm:$0xff] %v2966
    %2999 = vst [vmem:[#allocation4 + $0xd8] sm:$0xff] %v2967
    %3000 = vst [vmem:[#allocation4 + $0xe0] sm:$0xff] %v2968
    %3001 = vst [vmem:[#allocation4 + $0xe8] sm:$0xff] %v2969
    %3002 = vst [vmem:[#allocation4 + $0xf0] sm:$0xff] %v2970
    %3003 = vst [vmem:[#allocation4 + $0xf8] sm:$0xff] %v2971
    %v3004 = vld [vmem:[#allocation4] sm:$0xff]
    %v3005 = vld [vmem:[#allocation4 + $0x8] sm:$0xff]
    %v3006 = vld [vmem:[#allocation4 + $0x10] sm:$0xff]
    %v3007 = vld [vmem:[#allocation4 + $0x18] sm:$0xff]
    %v3008 = vld [vmem:[#allocation4 + $0x20] sm:$0xff]
    %v3009 = vld [vmem:[#allocation4 + $0x28] sm:$0xff]
    %v3010 = vld [vmem:[#allocation4 + $0x30] sm:$0xff]
    %v3011 = vld [vmem:[#allocation4 + $0x38] sm:$0xff]
    %v3012 = vld [vmem:[#allocation4 + $0x40] sm:$0x7f]
    %v3013 = vld [vmem:[#allocation4 + $0x48] sm:$0x7f]
    %v3014 = vld [vmem:[#allocation4 + $0x50] sm:$0x7f]
    %v3015 = vld [vmem:[#allocation4 + $0x58] sm:$0x7f]
    %v3016 = vld [vmem:[#allocation4 + $0x60] sm:$0x7f]
    %v3017 = vld [vmem:[#allocation4 + $0x68] sm:$0x7f]
    %v3018 = vld [vmem:[#allocation4 + $0x70] sm:$0x7f]
    %v3019 = vld [vmem:[#allocation4 + $0x78] sm:$0x7f]
    %v3020 = vld [vmem:[#allocation4 + $0x80] sm:$0xff]
    %v3021 = vld [vmem:[#allocation4 + $0x88] sm:$0xff]
    %v3022 = vld [vmem:[#allocation4 + $0x90] sm:$0xff]
    %v3023 = vld [vmem:[#allocation4 + $0x98] sm:$0xff]
    %v3024 = vld [vmem:[#allocation4 + $0xa0] sm:$0xff]
    %v3025 = vld [vmem:[#allocation4 + $0xa8] sm:$0xff]
    %v3026 = vld [vmem:[#allocation4 + $0xb0] sm:$0xff]
    %v3027 = vld [vmem:[#allocation4 + $0xb8] sm:$0xff]
    %v3028 = vld [vmem:[#allocation4 + $0xc0] sm:$0x7f]
    %v3029 = vld [vmem:[#allocation4 + $0xc8] sm:$0x7f]
    %v3030 = vld [vmem:[#allocation4 + $0xd0] sm:$0x7f]
    %v3031 = vld [vmem:[#allocation4 + $0xd8] sm:$0x7f]
    %v3032 = vld [vmem:[#allocation4 + $0xe0] sm:$0x7f]
    %v3033 = vld [vmem:[#allocation4 + $0xe8] sm:$0x7f]
    %v3034 = vld [vmem:[#allocation4 + $0xf0] sm:$0x7f]
    %v3035 = vld [vmem:[#allocation4 + $0xf8] sm:$0x7f]
    %v3068 = vrot.slane %v2512, 1
    %v3069 = vrot.slane %v2516, 1
    %v3070 = vsel %vm469, %v3068, %v3069
    %v3071 = vrot.slane %v2514, 1
    %v3072 = vrot.slane %v2518, 1
    %v3073 = vsel %vm469, %v3071, %v3072
    %v3074 = vrot.slane %v2565, 1
    %v3075 = vrot.slane %v2569, 1
    %v3076 = vsel %vm469, %v3074, %v3075
    %v3077 = vrot.slane %v2567, 1
    %v3078 = vrot.slane %v2571, 1
    %v3079 = vsel %vm469, %v3077, %v3078
    %v3080 = vrot.slane %v2618, 1
    %v3081 = vrot.slane %v2622, 1
    %v3082 = vsel %vm469, %v3080, %v3081
    %v3083 = vrot.slane %v2620, 1
    %v3084 = vrot.slane %v2624, 1
    %v3085 = vsel %vm469, %v3083, %v3084
    %v3086 = vrot.slane %v2671, 1
    %v3087 = vrot.slane %v2675, 1
    %v3088 = vsel %vm469, %v3086, %v3087
    %v3089 = vrot.slane %v2673, 1
    %v3090 = vrot.slane %v2677, 1
    %v3091 = vsel %vm469, %v3089, %v3090
    %v3092 = vrot.slane %v2522, 1
    %v3093 = vrot.slane %v2526, 1
    %v3094 = vsel %vm469, %v3092, %v3093
    %v3095 = vrot.slane %v2524, 1
    %v3096 = vrot.slane %v2528, 1
    %v3097 = vsel %vm469, %v3095, %v3096
    %v3098 = vrot.slane %v2575, 1
    %v3099 = vrot.slane %v2579, 1
    %v3100 = vsel %vm469, %v3098, %v3099
    %v3101 = vrot.slane %v2577, 1
    %v3102 = vrot.slane %v2581, 1
    %v3103 = vsel %vm469, %v3101, %v3102
    %v3104 = vrot.slane %v2628, 1
    %v3105 = vrot.slane %v2632, 1
    %v3106 = vsel %vm469, %v3104, %v3105
    %v3107 = vrot.slane %v2630, 1
    %v3108 = vrot.slane %v2634, 1
    %v3109 = vsel %vm469, %v3107, %v3108
    %v3110 = vrot.slane %v2681, 1
    %v3111 = vrot.slane %v2685, 1
    %v3112 = vsel %vm469, %v3110, %v3111
    %v3113 = vrot.slane %v2683, 1
    %v3114 = vrot.slane %v2687, 1
    %v3115 = vsel %vm469, %v3113, %v3114
    %v3148 = vadd.f32 %v3004, %v3070
    %v3149 = vadd.f32 %v3005, %v3073
    %v3150 = vadd.f32 %v3006, %v3076
    %v3151 = vadd.f32 %v3007, %v3079
    %v3152 = vadd.f32 %v3008, %v3082
    %v3153 = vadd.f32 %v3009, %v3085
    %v3154 = vadd.f32 %v3010, %v3088
    %v3155 = vadd.f32 %v3011, %v3091
    %v3156 = vadd.f32 %v3012, %v3069
    %v3157 = vadd.f32 %v3013, %v3072
    %v3158 = vadd.f32 %v3014, %v3075
    %v3159 = vadd.f32 %v3015, %v3078
    %v3160 = vadd.f32 %v3016, %v3081
    %v3161 = vadd.f32 %v3017, %v3084
    %v3162 = vadd.f32 %v3018, %v3087
    %v3163 = vadd.f32 %v3019, %v3090
    %v3164 = vadd.f32 %v3020, %v3094
    %v3165 = vadd.f32 %v3021, %v3097
    %v3166 = vadd.f32 %v3022, %v3100
    %v3167 = vadd.f32 %v3023, %v3103
    %v3168 = vadd.f32 %v3024, %v3106
    %v3169 = vadd.f32 %v3025, %v3109
    %v3170 = vadd.f32 %v3026, %v3112
    %v3171 = vadd.f32 %v3027, %v3115
    %v3172 = vadd.f32 %v3028, %v3093
    %v3173 = vadd.f32 %v3029, %v3096
    %v3174 = vadd.f32 %v3030, %v3099
    %v3175 = vadd.f32 %v3031, %v3102
    %v3176 = vadd.f32 %v3032, %v3105
    %v3177 = vadd.f32 %v3033, %v3108
    %v3178 = vadd.f32 %v3034, %v3111
    %v3179 = vadd.f32 %v3035, %v3114
    %3180 = vst [vmem:[#allocation4] sm:$0xff] %v3148
    %3181 = vst [vmem:[#allocation4 + $0x8] sm:$0xff] %v3149
    %3182 = vst [vmem:[#allocation4 + $0x10] sm:$0xff] %v3150
    %3183 = vst [vmem:[#allocation4 + $0x18] sm:$0xff] %v3151
    %3184 = vst [vmem:[#allocation4 + $0x20] sm:$0xff] %v3152
    %3185 = vst [vmem:[#allocation4 + $0x28] sm:$0xff] %v3153
    %3186 = vst [vmem:[#allocation4 + $0x30] sm:$0xff] %v3154
    %3187 = vst [vmem:[#allocation4 + $0x38] sm:$0xff] %v3155
    %3188 = vst [vmem:[#allocation4 + $0x40] sm:$0x7f] %v3156
    %3189 = vst [vmem:[#allocation4 + $0x48] sm:$0x7f] %v3157
    %3190 = vst [vmem:[#allocation4 + $0x50] sm:$0x7f] %v3158
    %3191 = vst [vmem:[#allocation4 + $0x58] sm:$0x7f] %v3159
    %3192 = vst [vmem:[#allocation4 + $0x60] sm:$0x7f] %v3160
    %3193 = vst [vmem:[#allocation4 + $0x68] sm:$0x7f] %v3161
    %3194 = vst [vmem:[#allocation4 + $0x70] sm:$0x7f] %v3162
    %3195 = vst [vmem:[#allocation4 + $0x78] sm:$0x7f] %v3163
    %3196 = vst [vmem:[#allocation4 + $0x80] sm:$0xff] %v3164
    %3197 = vst [vmem:[#allocation4 + $0x88] sm:$0xff] %v3165
    %3198 = vst [vmem:[#allocation4 + $0x90] sm:$0xff] %v3166
    %3199 = vst [vmem:[#allocation4 + $0x98] sm:$0xff] %v3167
    %3200 = vst [vmem:[#allocation4 + $0xa0] sm:$0xff] %v3168
    %3201 = vst [vmem:[#allocation4 + $0xa8] sm:$0xff] %v3169
    %3202 = vst [vmem:[#allocation4 + $0xb0] sm:$0xff] %v3170
    %3203 = vst [vmem:[#allocation4 + $0xb8] sm:$0xff] %v3171
    %3204 = vst [vmem:[#allocation4 + $0xc0] sm:$0x7f] %v3172
    %3205 = vst [vmem:[#allocation4 + $0xc8] sm:$0x7f] %v3173
    %3206 = vst [vmem:[#allocation4 + $0xd0] sm:$0x7f] %v3174
    %3207 = vst [vmem:[#allocation4 + $0xd8] sm:$0x7f] %v3175
    %3208 = vst [vmem:[#allocation4 + $0xe0] sm:$0x7f] %v3176
    %3209 = vst [vmem:[#allocation4 + $0xe8] sm:$0x7f] %v3177
    %3210 = vst [vmem:[#allocation4 + $0xf0] sm:$0x7f] %v3178
    %3211 = vst [vmem:[#allocation4 + $0xf8] sm:$0x7f] %v3179
    %v3212 = vld [vmem:[#allocation4] sm:$0xff]
    %v3213 = vld [vmem:[#allocation4 + $0x8] sm:$0xff]
    %v3214 = vld [vmem:[#allocation4 + $0x10] sm:$0xff]
    %v3215 = vld [vmem:[#allocation4 + $0x18] sm:$0xff]
    %v3216 = vld [vmem:[#allocation4 + $0x20] sm:$0xff]
    %v3217 = vld [vmem:[#allocation4 + $0x28] sm:$0xff]
    %v3218 = vld [vmem:[#allocation4 + $0x30] sm:$0xff]
    %v3219 = vld [vmem:[#allocation4 + $0x38] sm:$0xff]
    %v3220 = vld [vmem:[#allocation4 + $0x40] sm:$0xff]
    %v3221 = vld [vmem:[#allocation4 + $0x48] sm:$0xff]
    %v3222 = vld [vmem:[#allocation4 + $0x50] sm:$0xff]
    %v3223 = vld [vmem:[#allocation4 + $0x58] sm:$0xff]
    %v3224 = vld [vmem:[#allocation4 + $0x60] sm:$0xff]
    %v3225 = vld [vmem:[#allocation4 + $0x68] sm:$0xff]
    %v3226 = vld [vmem:[#allocation4 + $0x70] sm:$0xff]
    %v3227 = vld [vmem:[#allocation4 + $0x78] sm:$0xff]
    %v3228 = vld [vmem:[#allocation4 + $0x80] sm:$0xff]
    %v3229 = vld [vmem:[#allocation4 + $0x88] sm:$0xff]
    %v3230 = vld [vmem:[#allocation4 + $0x90] sm:$0xff]
    %v3231 = vld [vmem:[#allocation4 + $0x98] sm:$0xff]
    %v3232 = vld [vmem:[#allocation4 + $0xa0] sm:$0xff]
    %v3233 = vld [vmem:[#allocation4 + $0xa8] sm:$0xff]
    %v3234 = vld [vmem:[#allocation4 + $0xb0] sm:$0xff]
    %v3235 = vld [vmem:[#allocation4 + $0xb8] sm:$0xff]
    %v3236 = vld [vmem:[#allocation4 + $0xc0] sm:$0xff]
    %v3237 = vld [vmem:[#allocation4 + $0xc8] sm:$0xff]
    %v3238 = vld [vmem:[#allocation4 + $0xd0] sm:$0xff]
    %v3239 = vld [vmem:[#allocation4 + $0xd8] sm:$0xff]
    %v3240 = vld [vmem:[#allocation4 + $0xe0] sm:$0xff]
    %v3241 = vld [vmem:[#allocation4 + $0xe8] sm:$0xff]
    %v3242 = vld [vmem:[#allocation4 + $0xf0] sm:$0xff]
    %v3243 = vld [vmem:[#allocation4 + $0xf8] sm:$0xff]
    %vm3244 = vcmp.gt.f32.partialorder %v3212, 0.0
    %vm3245 = vcmp.gt.f32.partialorder %v3213, 0.0
    %vm3246 = vcmp.gt.f32.partialorder %v3214, 0.0
    %vm3247 = vcmp.gt.f32.partialorder %v3215, 0.0
    %vm3248 = vcmp.gt.f32.partialorder %v3216, 0.0
    %vm3249 = vcmp.gt.f32.partialorder %v3217, 0.0
    %vm3250 = vcmp.gt.f32.partialorder %v3218, 0.0
    %vm3251 = vcmp.gt.f32.partialorder %v3219, 0.0
    %vm3252 = vcmp.gt.f32.partialorder %v3220, 0.0
    %vm3253 = vcmp.gt.f32.partialorder %v3221, 0.0
    %vm3254 = vcmp.gt.f32.partialorder %v3222, 0.0
    %vm3255 = vcmp.gt.f32.partialorder %v3223, 0.0
    %vm3256 = vcmp.gt.f32.partialorder %v3224, 0.0
    %vm3257 = vcmp.gt.f32.partialorder %v3225, 0.0
    %vm3258 = vcmp.gt.f32.partialorder %v3226, 0.0
    %vm3259 = vcmp.gt.f32.partialorder %v3227, 0.0
    %vm3260 = vcmp.gt.f32.partialorder %v3228, 0.0
    %vm3261 = vcmp.gt.f32.partialorder %v3229, 0.0
    %vm3262 = vcmp.gt.f32.partialorder %v3230, 0.0
    %vm3263 = vcmp.gt.f32.partialorder %v3231, 0.0
    %vm3264 = vcmp.gt.f32.partialorder %v3232, 0.0
    %vm3265 = vcmp.gt.f32.partialorder %v3233, 0.0
    %vm3266 = vcmp.gt.f32.partialorder %v3234, 0.0
    %vm3267 = vcmp.gt.f32.partialorder %v3235, 0.0
    %vm3268 = vcmp.gt.f32.partialorder %v3236, 0.0
    %vm3269 = vcmp.gt.f32.partialorder %v3237, 0.0
    %vm3270 = vcmp.gt.f32.partialorder %v3238, 0.0
    %vm3271 = vcmp.gt.f32.partialorder %v3239, 0.0
    %vm3272 = vcmp.gt.f32.partialorder %v3240, 0.0
    %vm3273 = vcmp.gt.f32.partialorder %v3241, 0.0
    %vm3274 = vcmp.gt.f32.partialorder %v3242, 0.0
    %vm3275 = vcmp.gt.f32.partialorder %v3243, 0.0
    %v3276 = vmul.f32 %v549, %v3212
    %v3277 = vmul.f32 %v549, %v3213
    %v3278 = vmul.f32 %v549, %v3214
    %v3279 = vmul.f32 %v549, %v3215
    %v3280 = vmul.f32 %v549, %v3216
    %v3281 = vmul.f32 %v549, %v3217
    %v3282 = vmul.f32 %v549, %v3218
    %v3283 = vmul.f32 %v549, %v3219
    %v3284 = vmul.f32 %v549, %v3220
    %v3285 = vmul.f32 %v549, %v3221
    %v3286 = vmul.f32 %v549, %v3222
    %v3287 = vmul.f32 %v549, %v3223
    %v3288 = vmul.f32 %v549, %v3224
    %v3289 = vmul.f32 %v549, %v3225
    %v3290 = vmul.f32 %v549, %v3226
    %v3291 = vmul.f32 %v549, %v3227
    %v3292 = vmul.f32 %v549, %v3228
    %v3293 = vmul.f32 %v549, %v3229
    %v3294 = vmul.f32 %v549, %v3230
    %v3295 = vmul.f32 %v549, %v3231
    %v3296 = vmul.f32 %v549, %v3232
    %v3297 = vmul.f32 %v549, %v3233
    %v3298 = vmul.f32 %v549, %v3234
    %v3299 = vmul.f32 %v549, %v3235
    %v3300 = vmul.f32 %v549, %v3236
    %v3301 = vmul.f32 %v549, %v3237
    %v3302 = vmul.f32 %v549, %v3238
    %v3303 = vmul.f32 %v549, %v3239
    %v3304 = vmul.f32 %v549, %v3240
    %v3305 = vmul.f32 %v549, %v3241
    %v3306 = vmul.f32 %v549, %v3242
    %v3307 = vmul.f32 %v549, %v3243
    %v3308 = vsel %vm3244, %v3212, %v3276
    %v3309 = vsel %vm3245, %v3213, %v3277
    %v3310 = vsel %vm3246, %v3214, %v3278
    %v3311 = vsel %vm3247, %v3215, %v3279
    %v3312 = vsel %vm3248, %v3216, %v3280
    %v3313 = vsel %vm3249, %v3217, %v3281
    %v3314 = vsel %vm3250, %v3218, %v3282
    %v3315 = vsel %vm3251, %v3219, %v3283
    %v3316 = vsel %vm3252, %v3220, %v3284
    %v3317 = vsel %vm3253, %v3221, %v3285
    %v3318 = vsel %vm3254, %v3222, %v3286
    %v3319 = vsel %vm3255, %v3223, %v3287
    %v3320 = vsel %vm3256, %v3224, %v3288
    %v3321 = vsel %vm3257, %v3225, %v3289
    %v3322 = vsel %vm3258, %v3226, %v3290
    %v3323 = vsel %vm3259, %v3227, %v3291
    %v3324 = vsel %vm3260, %v3228, %v3292
    %v3325 = vsel %vm3261, %v3229, %v3293
    %v3326 = vsel %vm3262, %v3230, %v3294
    %v3327 = vsel %vm3263, %v3231, %v3295
    %v3328 = vsel %vm3264, %v3232, %v3296
    %v3329 = vsel %vm3265, %v3233, %v3297
    %v3330 = vsel %vm3266, %v3234, %v3298
    %v3331 = vsel %vm3267, %v3235, %v3299
    %v3332 = vsel %vm3268, %v3236, %v3300
    %v3333 = vsel %vm3269, %v3237, %v3301
    %v3334 = vsel %vm3270, %v3238, %v3302
    %v3335 = vsel %vm3271, %v3239, %v3303
    %v3336 = vsel %vm3272, %v3240, %v3304
    %v3337 = vsel %vm3273, %v3241, %v3305
    %v3338 = vsel %vm3274, %v3242, %v3306
    %v3339 = vsel %vm3275, %v3243, %v3307
    %v3340 = vpack.c.bf16 %v3316, %v3308
    %v3341 = vpack.c.bf16 %v3317, %v3309
    %v3342 = vpack.c.bf16 %v3318, %v3310
    %v3343 = vpack.c.bf16 %v3319, %v3311
    %v3344 = vpack.c.bf16 %v3320, %v3312
    %v3345 = vpack.c.bf16 %v3321, %v3313
    %v3346 = vpack.c.bf16 %v3322, %v3314
    %v3347 = vpack.c.bf16 %v3323, %v3315
    %v3348 = vpack.c.bf16 %v3332, %v3324
    %v3349 = vpack.c.bf16 %v3333, %v3325
    %v3350 = vpack.c.bf16 %v3334, %v3326
    %v3351 = vpack.c.bf16 %v3335, %v3327
    %v3352 = vpack.c.bf16 %v3336, %v3328
    %v3353 = vpack.c.bf16 %v3337, %v3329
    %v3354 = vpack.c.bf16 %v3338, %v3330
    %v3355 = vpack.c.bf16 %v3339, %v3331
    %v3356 = vld [vmem:[#allocation14] sm:$0xff]
    %v3357 = vld [vmem:[#allocation14 + $0x8] sm:$0xf]
    %v3358 = vld [vmem:[#allocation14 + $0xc] sm:$0xff]
    %v3359 = vld [vmem:[#allocation14 + $0x14] sm:$0xf]
    %v3360 = vld [vmem:[#allocation14 + $0x18] sm:$0xff]
    %v3361 = vld [vmem:[#allocation14 + $0x20] sm:$0xf]
    %v3362 = vld [vmem:[#allocation14 + $0x24] sm:$0xff]
    %v3363 = vld [vmem:[#allocation14 + $0x2c] sm:$0xf]
    %v3364 = vld [vmem:[#allocation14 + $0x30] sm:$0xff]
    %v3365 = vld [vmem:[#allocation14 + $0x38] sm:$0xf]
    %v3366 = vld [vmem:[#allocation14 + $0x3c] sm:$0xff]
    %v3367 = vld [vmem:[#allocation14 + $0x44] sm:$0xf]
    %v3368 = vld [vmem:[#allocation14 + $0x48] sm:$0xff]
    %v3369 = vld [vmem:[#allocation14 + $0x50] sm:$0xf]
    %v3370 = vld [vmem:[#allocation14 + $0x54] sm:$0xff]
    %v3371 = vld [vmem:[#allocation14 + $0x5c] sm:$0xf]
    %v3372 = vld [vmem:[#allocation14 + $0x60] sm:$0xff]
    %v3373 = vld [vmem:[#allocation14 + $0x68] sm:$0xf]
    %v3374 = vld [vmem:[#allocation14 + $0x6c] sm:$0xff]
    %v3375 = vld [vmem:[#allocation14 + $0x74] sm:$0xf]
    %v3376 = vld [vmem:[#allocation14 + $0x78] sm:$0xff]
    %v3377 = vld [vmem:[#allocation14 + $0x80] sm:$0xf]
    %v3378 = vld [vmem:[#allocation14 + $0x84] sm:$0xff]
    %v3379 = vld [vmem:[#allocation14 + $0x8c] sm:$0xf]
    %v3380 = vld [vmem:[#allocation14 + $0x90] sm:$0xff]
    %v3381 = vld [vmem:[#allocation14 + $0x98] sm:$0xf]
    %v3382 = vld [vmem:[#allocation14 + $0x9c] sm:$0xff]
    %v3383 = vld [vmem:[#allocation14 + $0xa4] sm:$0xf]
    %v3384 = vld [vmem:[#allocation14 + $0xa8] sm:$0xff]
    %v3385 = vld [vmem:[#allocation14 + $0xb0] sm:$0xf]
    %v3386 = vld [vmem:[#allocation14 + $0xb4] sm:$0xff]
    %v3387 = vld [vmem:[#allocation14 + $0xbc] sm:$0xf]
    %v3388 = vld [vmem:[#allocation14 + $0xc0] sm:$0xff]
    %v3389 = vld [vmem:[#allocation14 + $0xc8] sm:$0xf]
    %v3390 = vld [vmem:[#allocation14 + $0xcc] sm:$0xff]
    %v3391 = vld [vmem:[#allocation14 + $0xd4] sm:$0xf]
    %v3392 = vld [vmem:[#allocation14 + $0xd8] sm:$0xff]
    %v3393 = vld [vmem:[#allocation14 + $0xe0] sm:$0xf]
    %v3394 = vld [vmem:[#allocation14 + $0xe4] sm:$0xff]
    %v3395 = vld [vmem:[#allocation14 + $0xec] sm:$0xf]
    %v3396 = vld [vmem:[#allocation14 + $0xf0] sm:$0xff]
    %v3397 = vld [vmem:[#allocation14 + $0xf8] sm:$0xf]
    %v3398 = vld [vmem:[#allocation14 + $0xfc] sm:$0xff]
    %v3399 = vld [vmem:[#allocation14 + $0x104] sm:$0xf]
    %v3400 = vld [vmem:[#allocation14 + $0x108] sm:$0xff]
    %v3401 = vld [vmem:[#allocation14 + $0x110] sm:$0xf]
    %v3402 = vld [vmem:[#allocation14 + $0x114] sm:$0xff]
    %v3403 = vld [vmem:[#allocation14 + $0x11c] sm:$0xf]
    %v3404 = vld [vmem:[#allocation14 + $0x120] sm:$0xff]
    %v3405 = vld [vmem:[#allocation14 + $0x128] sm:$0xf]
    %v3406 = vld [vmem:[#allocation14 + $0x12c] sm:$0xff]
    %v3407 = vld [vmem:[#allocation14 + $0x134] sm:$0xf]
    %v3408 = vld [vmem:[#allocation14 + $0x138] sm:$0xff]
    %v3409 = vld [vmem:[#allocation14 + $0x140] sm:$0xf]
    %v3410 = vld [vmem:[#allocation14 + $0x144] sm:$0xff]
    %v3411 = vld [vmem:[#allocation14 + $0x14c] sm:$0xf]
    %v3412 = vld [vmem:[#allocation14 + $0x150] sm:$0xff]
    %v3413 = vld [vmem:[#allocation14 + $0x158] sm:$0xf]
    %v3414 = vld [vmem:[#allocation14 + $0x15c] sm:$0xff]
    %v3415 = vld [vmem:[#allocation14 + $0x164] sm:$0xf]
    %v3416 = vld [vmem:[#allocation14 + $0x168] sm:$0xff]
    %v3417 = vld [vmem:[#allocation14 + $0x170] sm:$0xf]
    %v3418 = vld [vmem:[#allocation14 + $0x174] sm:$0xff]
    %v3419 = vld [vmem:[#allocation14 + $0x17c] sm:$0xf]
    %v3420 = vld [vmem:[#allocation14 + $0x180] sm:$0xff]
    %v3421 = vld [vmem:[#allocation14 + $0x188] sm:$0xf]
    %v3422 = vld [vmem:[#allocation14 + $0x18c] sm:$0xff]
    %v3423 = vld [vmem:[#allocation14 + $0x194] sm:$0xf]
    %v3424 = vld [vmem:[#allocation14 + $0x198] sm:$0xff]
    %v3425 = vld [vmem:[#allocation14 + $0x1a0] sm:$0xf]
    %v3426 = vld [vmem:[#allocation14 + $0x1a4] sm:$0xff]
    %v3427 = vld [vmem:[#allocation14 + $0x1ac] sm:$0xf]
    %v3428 = vld [vmem:[#allocation14 + $0x1b0] sm:$0xff]
    %v3429 = vld [vmem:[#allocation14 + $0x1b8] sm:$0xf]
    %v3430 = vld [vmem:[#allocation14 + $0x1bc] sm:$0xff]
    %v3431 = vld [vmem:[#allocation14 + $0x1c4] sm:$0xf]
    %v3432 = vld [vmem:[#allocation14 + $0x1c8] sm:$0xff]
    %v3433 = vld [vmem:[#allocation14 + $0x1d0] sm:$0xf]
    %v3434 = vld [vmem:[#allocation14 + $0x1d4] sm:$0xff]
    %v3435 = vld [vmem:[#allocation14 + $0x1dc] sm:$0xf]
    %v3436 = vld [vmem:[#allocation14 + $0x1e0] sm:$0xff]
    %v3437 = vld [vmem:[#allocation14 + $0x1e8] sm:$0xf]
    %v3438 = vld [vmem:[#allocation14 + $0x1ec] sm:$0xff]
    %v3439 = vld [vmem:[#allocation14 + $0x1f4] sm:$0xf]
    %v3440 = vld [vmem:[#allocation14 + $0x1f8] sm:$0xff]
    %v3441 = vld [vmem:[#allocation14 + $0x200] sm:$0xf]
    %v3442 = vld [vmem:[#allocation14 + $0x204] sm:$0xff]
    %v3443 = vld [vmem:[#allocation14 + $0x20c] sm:$0xf]
    %v3444 = vld [vmem:[#allocation14 + $0x210] sm:$0xff]
    %v3445 = vld [vmem:[#allocation14 + $0x218] sm:$0xf]
    %v3446 = vld [vmem:[#allocation14 + $0x21c] sm:$0xff]
    %v3447 = vld [vmem:[#allocation14 + $0x224] sm:$0xf]
    %v3448 = vld [vmem:[#allocation14 + $0x228] sm:$0xff]
    %v3449 = vld [vmem:[#allocation14 + $0x230] sm:$0xf]
    %v3450 = vld [vmem:[#allocation14 + $0x234] sm:$0xff]
    %v3451 = vld [vmem:[#allocation14 + $0x23c] sm:$0xf]
    %v3452 = vld [vmem:[#allocation14 + $0x240] sm:$0xff]
    %v3453 = vld [vmem:[#allocation14 + $0x248] sm:$0xf]
    %v3454 = vld [vmem:[#allocation14 + $0x24c] sm:$0xff]
    %v3455 = vld [vmem:[#allocation14 + $0x254] sm:$0xf]
    %v3456 = vld [vmem:[#allocation14 + $0x258] sm:$0xff]
    %v3457 = vld [vmem:[#allocation14 + $0x260] sm:$0xf]
    %v3458 = vld [vmem:[#allocation14 + $0x264] sm:$0xff]
    %v3459 = vld [vmem:[#allocation14 + $0x26c] sm:$0xf]
    %v3460 = vld [vmem:[#allocation14 + $0x270] sm:$0xff]
    %v3461 = vld [vmem:[#allocation14 + $0x278] sm:$0xf]
    %v3462 = vld [vmem:[#allocation14 + $0x27c] sm:$0xff]
    %v3463 = vld [vmem:[#allocation14 + $0x284] sm:$0xf]
    %v3464 = vld [vmem:[#allocation14 + $0x288] sm:$0xff]
    %v3465 = vld [vmem:[#allocation14 + $0x290] sm:$0xf]
    %v3466 = vld [vmem:[#allocation14 + $0x294] sm:$0xff]
    %v3467 = vld [vmem:[#allocation14 + $0x29c] sm:$0xf]
    %v3468 = vld [vmem:[#allocation14 + $0x2a0] sm:$0xff]
    %v3469 = vld [vmem:[#allocation14 + $0x2a8] sm:$0xf]
    %v3470 = vld [vmem:[#allocation14 + $0x2ac] sm:$0xff]
    %v3471 = vld [vmem:[#allocation14 + $0x2b4] sm:$0xf]
    %v3472 = vld [vmem:[#allocation14 + $0x2b8] sm:$0xff]
    %v3473 = vld [vmem:[#allocation14 + $0x2c0] sm:$0xf]
    %v3474 = vld [vmem:[#allocation14 + $0x2c4] sm:$0xff]
    %v3475 = vld [vmem:[#allocation14 + $0x2cc] sm:$0xf]
    %v3476 = vld [vmem:[#allocation14 + $0x2d0] sm:$0xff]
    %v3477 = vld [vmem:[#allocation14 + $0x2d8] sm:$0xf]
    %v3478 = vld [vmem:[#allocation14 + $0x2dc] sm:$0xff]
    %v3479 = vld [vmem:[#allocation14 + $0x2e4] sm:$0xf]
    %v3480 = vld [vmem:[#allocation14 + $0x2e8] sm:$0xff]
    %v3481 = vld [vmem:[#allocation14 + $0x2f0] sm:$0xf]
    %v3482 = vld [vmem:[#allocation14 + $0x2f4] sm:$0xff]
    %v3483 = vld [vmem:[#allocation14 + $0x2fc] sm:$0xf]
    %v3484 = vld [vmem:[#allocation14 + $0x300] sm:$0xff]
    %v3485 = vld [vmem:[#allocation14 + $0x308] sm:$0xf]
    %v3486 = vld [vmem:[#allocation14 + $0x30c] sm:$0xff]
    %v3487 = vld [vmem:[#allocation14 + $0x314] sm:$0xf]
    %v3488 = vld [vmem:[#allocation14 + $0x318] sm:$0xff]
    %v3489 = vld [vmem:[#allocation14 + $0x320] sm:$0xf]
    %v3490 = vld [vmem:[#allocation14 + $0x324] sm:$0xff]
    %v3491 = vld [vmem:[#allocation14 + $0x32c] sm:$0xf]
    %v3492 = vld [vmem:[#allocation14 + $0x330] sm:$0xff]
    %v3493 = vld [vmem:[#allocation14 + $0x338] sm:$0xf]
    %v3494 = vld [vmem:[#allocation14 + $0x33c] sm:$0xff]
    %v3495 = vld [vmem:[#allocation14 + $0x344] sm:$0xf]
    %v3496 = vld [vmem:[#allocation14 + $0x348] sm:$0xff]
    %v3497 = vld [vmem:[#allocation14 + $0x350] sm:$0xf]
    %v3498 = vld [vmem:[#allocation14 + $0x354] sm:$0xff]
    %v3499 = vld [vmem:[#allocation14 + $0x35c] sm:$0xf]
    %v3500 = vld [vmem:[#allocation14 + $0x360] sm:$0xff]
    %v3501 = vld [vmem:[#allocation14 + $0x368] sm:$0xf]
    %v3502 = vld [vmem:[#allocation14 + $0x36c] sm:$0xff]
    %v3503 = vld [vmem:[#allocation14 + $0x374] sm:$0xf]
    %v3504 = vld [vmem:[#allocation14 + $0x378] sm:$0xff]
    %v3505 = vld [vmem:[#allocation14 + $0x380] sm:$0xf]
    %v3506 = vld [vmem:[#allocation14 + $0x384] sm:$0xff]
    %v3507 = vld [vmem:[#allocation14 + $0x38c] sm:$0xf]
    %v3508 = vld [vmem:[#allocation14 + $0x390] sm:$0xff]
    %v3509 = vld [vmem:[#allocation14 + $0x398] sm:$0xf]
    %v3510 = vld [vmem:[#allocation14 + $0x39c] sm:$0xff]
    %v3511 = vld [vmem:[#allocation14 + $0x3a4] sm:$0xf]
    %v3512 = vld [vmem:[#allocation14 + $0x3a8] sm:$0xff]
    %v3513 = vld [vmem:[#allocation14 + $0x3b0] sm:$0xf]
    %v3514 = vld [vmem:[#allocation14 + $0x3b4] sm:$0xff]
    %v3515 = vld [vmem:[#allocation14 + $0x3bc] sm:$0xf]
    %v3516 = vld [vmem:[#allocation14 + $0x3c0] sm:$0xff]
    %v3517 = vld [vmem:[#allocation14 + $0x3c8] sm:$0xf]
    %v3518 = vld [vmem:[#allocation14 + $0x3cc] sm:$0xff]
    %v3519 = vld [vmem:[#allocation14 + $0x3d4] sm:$0xf]
    %v3520 = vld [vmem:[#allocation14 + $0x3d8] sm:$0xff]
    %v3521 = vld [vmem:[#allocation14 + $0x3e0] sm:$0xf]
    %v3522 = vld [vmem:[#allocation14 + $0x3e4] sm:$0xff]
    %v3523 = vld [vmem:[#allocation14 + $0x3ec] sm:$0xf]
    %v3524 = vld [vmem:[#allocation14 + $0x3f0] sm:$0xff]
    %v3525 = vld [vmem:[#allocation14 + $0x3f8] sm:$0xf]
    %v3526 = vld [vmem:[#allocation14 + $0x3fc] sm:$0xff]
    %v3527 = vld [vmem:[#allocation14 + $0x404] sm:$0xf]
    %v3528 = vld [vmem:[#allocation14 + $0x408] sm:$0xff]
    %v3529 = vld [vmem:[#allocation14 + $0x410] sm:$0xf]
    %v3530 = vld [vmem:[#allocation14 + $0x414] sm:$0xff]
    %v3531 = vld [vmem:[#allocation14 + $0x41c] sm:$0xf]
    %v3532 = vld [vmem:[#allocation14 + $0x420] sm:$0xff]
    %v3533 = vld [vmem:[#allocation14 + $0x428] sm:$0xf]
    %v3534 = vld [vmem:[#allocation14 + $0x42c] sm:$0xff]
    %v3535 = vld [vmem:[#allocation14 + $0x434] sm:$0xf]
    %v3536 = vld [vmem:[#allocation14 + $0x438] sm:$0xff]
    %v3537 = vld [vmem:[#allocation14 + $0x440] sm:$0xf]
    %v3538 = vld [vmem:[#allocation14 + $0x444] sm:$0xff]
    %v3539 = vld [vmem:[#allocation14 + $0x44c] sm:$0xf]
    %v3540 = vld [vmem:[#allocation14 + $0x450] sm:$0xff]
    %v3541 = vld [vmem:[#allocation14 + $0x458] sm:$0xf]
    %v3542 = vld [vmem:[#allocation14 + $0x45c] sm:$0xff]
    %v3543 = vld [vmem:[#allocation14 + $0x464] sm:$0xf]
    %v3544 = vld [vmem:[#allocation14 + $0x468] sm:$0xff]
    %v3545 = vld [vmem:[#allocation14 + $0x470] sm:$0xf]
    %v3546 = vld [vmem:[#allocation14 + $0x474] sm:$0xff]
    %v3547 = vld [vmem:[#allocation14 + $0x47c] sm:$0xf]
    %v3548 = vld [vmem:[#allocation14 + $0x480] sm:$0xff]
    %v3549 = vld [vmem:[#allocation14 + $0x488] sm:$0xf]
    %v3550 = vld [vmem:[#allocation14 + $0x48c] sm:$0xff]
    %v3551 = vld [vmem:[#allocation14 + $0x494] sm:$0xf]
    %v3552 = vld [vmem:[#allocation14 + $0x498] sm:$0xff]
    %v3553 = vld [vmem:[#allocation14 + $0x4a0] sm:$0xf]
    %v3554 = vld [vmem:[#allocation14 + $0x4a4] sm:$0xff]
    %v3555 = vld [vmem:[#allocation14 + $0x4ac] sm:$0xf]
    %v3556 = vld [vmem:[#allocation14 + $0x4b0] sm:$0xff]
    %v3557 = vld [vmem:[#allocation14 + $0x4b8] sm:$0xf]
    %v3558 = vld [vmem:[#allocation14 + $0x4bc] sm:$0xff]
    %v3559 = vld [vmem:[#allocation14 + $0x4c4] sm:$0xf]
    %v3560 = vld [vmem:[#allocation14 + $0x4c8] sm:$0xff]
    %v3561 = vld [vmem:[#allocation14 + $0x4d0] sm:$0xf]
    %v3562 = vld [vmem:[#allocation14 + $0x4d4] sm:$0xff]
    %v3563 = vld [vmem:[#allocation14 + $0x4dc] sm:$0xf]
    %v3564 = vld [vmem:[#allocation14 + $0x4e0] sm:$0xff]
    %v3565 = vld [vmem:[#allocation14 + $0x4e8] sm:$0xf]
    %v3566 = vld [vmem:[#allocation14 + $0x4ec] sm:$0xff]
    %v3567 = vld [vmem:[#allocation14 + $0x4f4] sm:$0xf]
    %v3568 = vld [vmem:[#allocation14 + $0x4f8] sm:$0xff]
    %v3569 = vld [vmem:[#allocation14 + $0x500] sm:$0xf]
    %v3570 = vld [vmem:[#allocation14 + $0x504] sm:$0xff]
    %v3571 = vld [vmem:[#allocation14 + $0x50c] sm:$0xf]
    %v3572 = vld [vmem:[#allocation14 + $0x510] sm:$0xff]
    %v3573 = vld [vmem:[#allocation14 + $0x518] sm:$0xf]
    %v3574 = vld [vmem:[#allocation14 + $0x51c] sm:$0xff]
    %v3575 = vld [vmem:[#allocation14 + $0x524] sm:$0xf]
    %v3576 = vld [vmem:[#allocation14 + $0x528] sm:$0xff]
    %v3577 = vld [vmem:[#allocation14 + $0x530] sm:$0xf]
    %v3578 = vld [vmem:[#allocation14 + $0x534] sm:$0xff]
    %v3579 = vld [vmem:[#allocation14 + $0x53c] sm:$0xf]
    %v3580 = vld [vmem:[#allocation14 + $0x540] sm:$0xff]
    %v3581 = vld [vmem:[#allocation14 + $0x548] sm:$0xf]
    %v3582 = vld [vmem:[#allocation14 + $0x54c] sm:$0xff]
    %v3583 = vld [vmem:[#allocation14 + $0x554] sm:$0xf]
    %v3584 = vld [vmem:[#allocation14 + $0x558] sm:$0xff]
    %v3585 = vld [vmem:[#allocation14 + $0x560] sm:$0xf]
    %v3586 = vld [vmem:[#allocation14 + $0x564] sm:$0xff]
    %v3587 = vld [vmem:[#allocation14 + $0x56c] sm:$0xf]
    %v3588 = vld [vmem:[#allocation14 + $0x570] sm:$0xff]
    %v3589 = vld [vmem:[#allocation14 + $0x578] sm:$0xf]
    %v3590 = vld [vmem:[#allocation14 + $0x57c] sm:$0xff]
    %v3591 = vld [vmem:[#allocation14 + $0x584] sm:$0xf]
    %v3592 = vld [vmem:[#allocation14 + $0x588] sm:$0xff]
    %v3593 = vld [vmem:[#allocation14 + $0x590] sm:$0xf]
    %v3594 = vld [vmem:[#allocation14 + $0x594] sm:$0xff]
    %v3595 = vld [vmem:[#allocation14 + $0x59c] sm:$0xf]
    %v3596 = vld [vmem:[#allocation14 + $0x5a0] sm:$0xff]
    %v3597 = vld [vmem:[#allocation14 + $0x5a8] sm:$0xf]
    %v3598 = vld [vmem:[#allocation14 + $0x5ac] sm:$0xff]
    %v3599 = vld [vmem:[#allocation14 + $0x5b4] sm:$0xf]
    %v3600 = vld [vmem:[#allocation14 + $0x5b8] sm:$0xff]
    %v3601 = vld [vmem:[#allocation14 + $0x5c0] sm:$0xf]
    %v3602 = vld [vmem:[#allocation14 + $0x5c4] sm:$0xff]
    %v3603 = vld [vmem:[#allocation14 + $0x5cc] sm:$0xf]
    %v3604 = vld [vmem:[#allocation14 + $0x5d0] sm:$0xff]
    %v3605 = vld [vmem:[#allocation14 + $0x5d8] sm:$0xf]
    %v3606 = vld [vmem:[#allocation14 + $0x5dc] sm:$0xff]
    %v3607 = vld [vmem:[#allocation14 + $0x5e4] sm:$0xf]
    %v3608 = vld [vmem:[#allocation14 + $0x5e8] sm:$0xff]
    %v3609 = vld [vmem:[#allocation14 + $0x5f0] sm:$0xf]
    %v3610 = vld [vmem:[#allocation14 + $0x5f4] sm:$0xff]
    %v3611 = vld [vmem:[#allocation14 + $0x5fc] sm:$0xf]
    %v3868 = vunpack.c.l.b16 %v3356
    %v3869 = vunpack.c.h.b16 %v3356
    %v3870 = vunpack.c.l.b16 %v3357
    %v3871 = vunpack.c.l.b16 %v3358
    %v3872 = vunpack.c.h.b16 %v3358
    %v3873 = vunpack.c.l.b16 %v3359
    %v3874 = vunpack.c.l.b16 %v3360
    %v3875 = vunpack.c.h.b16 %v3360
    %v3876 = vunpack.c.l.b16 %v3361
    %v3877 = vunpack.c.l.b16 %v3362
    %v3878 = vunpack.c.h.b16 %v3362
    %v3879 = vunpack.c.l.b16 %v3363
    %v3880 = vunpack.c.l.b16 %v3364
    %v3881 = vunpack.c.h.b16 %v3364
    %v3882 = vunpack.c.l.b16 %v3365
    %v3883 = vunpack.c.l.b16 %v3366
    %v3884 = vunpack.c.h.b16 %v3366
    %v3885 = vunpack.c.l.b16 %v3367
    %v3886 = vunpack.c.l.b16 %v3368
    %v3887 = vunpack.c.h.b16 %v3368
    %v3888 = vunpack.c.l.b16 %v3369
    %v3889 = vunpack.c.l.b16 %v3370
    %v3890 = vunpack.c.h.b16 %v3370
    %v3891 = vunpack.c.l.b16 %v3371
    %v3892 = vunpack.c.l.b16 %v3372
    %v3893 = vunpack.c.h.b16 %v3372
    %v3894 = vunpack.c.l.b16 %v3373
    %v3895 = vunpack.c.l.b16 %v3374
    %v3896 = vunpack.c.h.b16 %v3374
    %v3897 = vunpack.c.l.b16 %v3375
    %v3898 = vunpack.c.l.b16 %v3376
    %v3899 = vunpack.c.h.b16 %v3376
    %v3900 = vunpack.c.l.b16 %v3377
    %v3901 = vunpack.c.l.b16 %v3378
    %v3902 = vunpack.c.h.b16 %v3378
    %v3903 = vunpack.c.l.b16 %v3379
    %v3904 = vunpack.c.l.b16 %v3380
    %v3905 = vunpack.c.h.b16 %v3380
    %v3906 = vunpack.c.l.b16 %v3381
    %v3907 = vunpack.c.l.b16 %v3382
    %v3908 = vunpack.c.h.b16 %v3382
    %v3909 = vunpack.c.l.b16 %v3383
    %v3910 = vunpack.c.l.b16 %v3384
    %v3911 = vunpack.c.h.b16 %v3384
    %v3912 = vunpack.c.l.b16 %v3385
    %v3913 = vunpack.c.l.b16 %v3386
    %v3914 = vunpack.c.h.b16 %v3386
    %v3915 = vunpack.c.l.b16 %v3387
    %v3916 = vunpack.c.l.b16 %v3388
    %v3917 = vunpack.c.h.b16 %v3388
    %v3918 = vunpack.c.l.b16 %v3389
    %v3919 = vunpack.c.l.b16 %v3390
    %v3920 = vunpack.c.h.b16 %v3390
    %v3921 = vunpack.c.l.b16 %v3391
    %v3922 = vunpack.c.l.b16 %v3392
    %v3923 = vunpack.c.h.b16 %v3392
    %v3924 = vunpack.c.l.b16 %v3393
    %v3925 = vunpack.c.l.b16 %v3394
    %v3926 = vunpack.c.h.b16 %v3394
    %v3927 = vunpack.c.l.b16 %v3395
    %v3928 = vunpack.c.l.b16 %v3396
    %v3929 = vunpack.c.h.b16 %v3396
    %v3930 = vunpack.c.l.b16 %v3397
    %v3931 = vunpack.c.l.b16 %v3398
    %v3932 = vunpack.c.h.b16 %v3398
    %v3933 = vunpack.c.l.b16 %v3399
    %v3934 = vunpack.c.l.b16 %v3400
    %v3935 = vunpack.c.h.b16 %v3400
    %v3936 = vunpack.c.l.b16 %v3401
    %v3937 = vunpack.c.l.b16 %v3402
    %v3938 = vunpack.c.h.b16 %v3402
    %v3939 = vunpack.c.l.b16 %v3403
    %v3940 = vunpack.c.l.b16 %v3404
    %v3941 = vunpack.c.h.b16 %v3404
    %v3942 = vunpack.c.l.b16 %v3405
    %v3943 = vunpack.c.l.b16 %v3406
    %v3944 = vunpack.c.h.b16 %v3406
    %v3945 = vunpack.c.l.b16 %v3407
    %v3946 = vunpack.c.l.b16 %v3408
    %v3947 = vunpack.c.h.b16 %v3408
    %v3948 = vunpack.c.l.b16 %v3409
    %v3949 = vunpack.c.l.b16 %v3410
    %v3950 = vunpack.c.h.b16 %v3410
    %v3951 = vunpack.c.l.b16 %v3411
    %v3952 = vunpack.c.l.b16 %v3412
    %v3953 = vunpack.c.h.b16 %v3412
    %v3954 = vunpack.c.l.b16 %v3413
    %v3955 = vunpack.c.l.b16 %v3414
    %v3956 = vunpack.c.h.b16 %v3414
    %v3957 = vunpack.c.l.b16 %v3415
    %v3958 = vunpack.c.l.b16 %v3416
    %v3959 = vunpack.c.h.b16 %v3416
    %v3960 = vunpack.c.l.b16 %v3417
    %v3961 = vunpack.c.l.b16 %v3418
    %v3962 = vunpack.c.h.b16 %v3418
    %v3963 = vunpack.c.l.b16 %v3419
    %v3964 = vunpack.c.l.b16 %v3420
    %v3965 = vunpack.c.h.b16 %v3420
    %v3966 = vunpack.c.l.b16 %v3421
    %v3967 = vunpack.c.l.b16 %v3422
    %v3968 = vunpack.c.h.b16 %v3422
    %v3969 = vunpack.c.l.b16 %v3423
    %v3970 = vunpack.c.l.b16 %v3424
    %v3971 = vunpack.c.h.b16 %v3424
    %v3972 = vunpack.c.l.b16 %v3425
    %v3973 = vunpack.c.l.b16 %v3426
    %v3974 = vunpack.c.h.b16 %v3426
    %v3975 = vunpack.c.l.b16 %v3427
    %v3976 = vunpack.c.l.b16 %v3428
    %v3977 = vunpack.c.h.b16 %v3428
    %v3978 = vunpack.c.l.b16 %v3429
    %v3979 = vunpack.c.l.b16 %v3430
    %v3980 = vunpack.c.h.b16 %v3430
    %v3981 = vunpack.c.l.b16 %v3431
    %v3982 = vunpack.c.l.b16 %v3432
    %v3983 = vunpack.c.h.b16 %v3432
    %v3984 = vunpack.c.l.b16 %v3433
    %v3985 = vunpack.c.l.b16 %v3434
    %v3986 = vunpack.c.h.b16 %v3434
    %v3987 = vunpack.c.l.b16 %v3435
    %v3988 = vunpack.c.l.b16 %v3436
    %v3989 = vunpack.c.h.b16 %v3436
    %v3990 = vunpack.c.l.b16 %v3437
    %v3991 = vunpack.c.l.b16 %v3438
    %v3992 = vunpack.c.h.b16 %v3438
    %v3993 = vunpack.c.l.b16 %v3439
    %v3994 = vunpack.c.l.b16 %v3440
    %v3995 = vunpack.c.h.b16 %v3440
    %v3996 = vunpack.c.l.b16 %v3441
    %v3997 = vunpack.c.l.b16 %v3442
    %v3998 = vunpack.c.h.b16 %v3442
    %v3999 = vunpack.c.l.b16 %v3443
    %v4000 = vunpack.c.l.b16 %v3444
    %v4001 = vunpack.c.h.b16 %v3444
    %v4002 = vunpack.c.l.b16 %v3445
    %v4003 = vunpack.c.l.b16 %v3446
    %v4004 = vunpack.c.h.b16 %v3446
    %v4005 = vunpack.c.l.b16 %v3447
    %v4006 = vunpack.c.l.b16 %v3448
    %v4007 = vunpack.c.h.b16 %v3448
    %v4008 = vunpack.c.l.b16 %v3449
    %v4009 = vunpack.c.l.b16 %v3450
    %v4010 = vunpack.c.h.b16 %v3450
    %v4011 = vunpack.c.l.b16 %v3451
    %v4012 = vunpack.c.l.b16 %v3452
    %v4013 = vunpack.c.h.b16 %v3452
    %v4014 = vunpack.c.l.b16 %v3453
    %v4015 = vunpack.c.l.b16 %v3454
    %v4016 = vunpack.c.h.b16 %v3454
    %v4017 = vunpack.c.l.b16 %v3455
    %v4018 = vunpack.c.l.b16 %v3456
    %v4019 = vunpack.c.h.b16 %v3456
    %v4020 = vunpack.c.l.b16 %v3457
    %v4021 = vunpack.c.l.b16 %v3458
    %v4022 = vunpack.c.h.b16 %v3458
    %v4023 = vunpack.c.l.b16 %v3459
    %v4024 = vunpack.c.l.b16 %v3460
    %v4025 = vunpack.c.h.b16 %v3460
    %v4026 = vunpack.c.l.b16 %v3461
    %v4027 = vunpack.c.l.b16 %v3462
    %v4028 = vunpack.c.h.b16 %v3462
    %v4029 = vunpack.c.l.b16 %v3463
    %v4030 = vunpack.c.l.b16 %v3464
    %v4031 = vunpack.c.h.b16 %v3464
    %v4032 = vunpack.c.l.b16 %v3465
    %v4033 = vunpack.c.l.b16 %v3466
    %v4034 = vunpack.c.h.b16 %v3466
    %v4035 = vunpack.c.l.b16 %v3467
    %v4036 = vunpack.c.l.b16 %v3468
    %v4037 = vunpack.c.h.b16 %v3468
    %v4038 = vunpack.c.l.b16 %v3469
    %v4039 = vunpack.c.l.b16 %v3470
    %v4040 = vunpack.c.h.b16 %v3470
    %v4041 = vunpack.c.l.b16 %v3471
    %v4042 = vunpack.c.l.b16 %v3472
    %v4043 = vunpack.c.h.b16 %v3472
    %v4044 = vunpack.c.l.b16 %v3473
    %v4045 = vunpack.c.l.b16 %v3474
    %v4046 = vunpack.c.h.b16 %v3474
    %v4047 = vunpack.c.l.b16 %v3475
    %v4048 = vunpack.c.l.b16 %v3476
    %v4049 = vunpack.c.h.b16 %v3476
    %v4050 = vunpack.c.l.b16 %v3477
    %v4051 = vunpack.c.l.b16 %v3478
    %v4052 = vunpack.c.h.b16 %v3478
    %v4053 = vunpack.c.l.b16 %v3479
    %v4054 = vunpack.c.l.b16 %v3480
    %v4055 = vunpack.c.h.b16 %v3480
    %v4056 = vunpack.c.l.b16 %v3481
    %v4057 = vunpack.c.l.b16 %v3482
    %v4058 = vunpack.c.h.b16 %v3482
    %v4059 = vunpack.c.l.b16 %v3483
    %v4060 = vunpack.c.l.b16 %v3484
    %v4061 = vunpack.c.h.b16 %v3484
    %v4062 = vunpack.c.l.b16 %v3485
    %v4063 = vunpack.c.l.b16 %v3486
    %v4064 = vunpack.c.h.b16 %v3486
    %v4065 = vunpack.c.l.b16 %v3487
    %v4066 = vunpack.c.l.b16 %v3488
    %v4067 = vunpack.c.h.b16 %v3488
    %v4068 = vunpack.c.l.b16 %v3489
    %v4069 = vunpack.c.l.b16 %v3490
    %v4070 = vunpack.c.h.b16 %v3490
    %v4071 = vunpack.c.l.b16 %v3491
    %v4072 = vunpack.c.l.b16 %v3492
    %v4073 = vunpack.c.h.b16 %v3492
    %v4074 = vunpack.c.l.b16 %v3493
    %v4075 = vunpack.c.l.b16 %v3494
    %v4076 = vunpack.c.h.b16 %v3494
    %v4077 = vunpack.c.l.b16 %v3495
    %v4078 = vunpack.c.l.b16 %v3496
    %v4079 = vunpack.c.h.b16 %v3496
    %v4080 = vunpack.c.l.b16 %v3497
    %v4081 = vunpack.c.l.b16 %v3498
    %v4082 = vunpack.c.h.b16 %v3498
    %v4083 = vunpack.c.l.b16 %v3499
    %v4084 = vunpack.c.l.b16 %v3500
    %v4085 = vunpack.c.h.b16 %v3500
    %v4086 = vunpack.c.l.b16 %v3501
    %v4087 = vunpack.c.l.b16 %v3502
    %v4088 = vunpack.c.h.b16 %v3502
    %v4089 = vunpack.c.l.b16 %v3503
    %v4090 = vunpack.c.l.b16 %v3504
    %v4091 = vunpack.c.h.b16 %v3504
    %v4092 = vunpack.c.l.b16 %v3505
    %v4093 = vunpack.c.l.b16 %v3506
    %v4094 = vunpack.c.h.b16 %v3506
    %v4095 = vunpack.c.l.b16 %v3507
    %v4096 = vunpack.c.l.b16 %v3508
    %v4097 = vunpack.c.h.b16 %v3508
    %v4098 = vunpack.c.l.b16 %v3509
    %v4099 = vunpack.c.l.b16 %v3510
    %v4100 = vunpack.c.h.b16 %v3510
    %v4101 = vunpack.c.l.b16 %v3511
    %v4102 = vunpack.c.l.b16 %v3512
    %v4103 = vunpack.c.h.b16 %v3512
    %v4104 = vunpack.c.l.b16 %v3513
    %v4105 = vunpack.c.l.b16 %v3514
    %v4106 = vunpack.c.h.b16 %v3514
    %v4107 = vunpack.c.l.b16 %v3515
    %v4108 = vunpack.c.l.b16 %v3516
    %v4109 = vunpack.c.h.b16 %v3516
    %v4110 = vunpack.c.l.b16 %v3517
    %v4111 = vunpack.c.l.b16 %v3518
    %v4112 = vunpack.c.h.b16 %v3518
    %v4113 = vunpack.c.l.b16 %v3519
    %v4114 = vunpack.c.l.b16 %v3520
    %v4115 = vunpack.c.h.b16 %v3520
    %v4116 = vunpack.c.l.b16 %v3521
    %v4117 = vunpack.c.l.b16 %v3522
    %v4118 = vunpack.c.h.b16 %v3522
    %v4119 = vunpack.c.l.b16 %v3523
    %v4120 = vunpack.c.l.b16 %v3524
    %v4121 = vunpack.c.h.b16 %v3524
    %v4122 = vunpack.c.l.b16 %v3525
    %v4123 = vunpack.c.l.b16 %v3526
    %v4124 = vunpack.c.h.b16 %v3526
    %v4125 = vunpack.c.l.b16 %v3527
    %v4126 = vunpack.c.l.b16 %v3528
    %v4127 = vunpack.c.h.b16 %v3528
    %v4128 = vunpack.c.l.b16 %v3529
    %v4129 = vunpack.c.l.b16 %v3530
    %v4130 = vunpack.c.h.b16 %v3530
    %v4131 = vunpack.c.l.b16 %v3531
    %v4132 = vunpack.c.l.b16 %v3532
    %v4133 = vunpack.c.h.b16 %v3532
    %v4134 = vunpack.c.l.b16 %v3533
    %v4135 = vunpack.c.l.b16 %v3534
    %v4136 = vunpack.c.h.b16 %v3534
    %v4137 = vunpack.c.l.b16 %v3535
    %v4138 = vunpack.c.l.b16 %v3536
    %v4139 = vunpack.c.h.b16 %v3536
    %v4140 = vunpack.c.l.b16 %v3537
    %v4141 = vunpack.c.l.b16 %v3538
    %v4142 = vunpack.c.h.b16 %v3538
    %v4143 = vunpack.c.l.b16 %v3539
    %v4144 = vunpack.c.l.b16 %v3540
    %v4145 = vunpack.c.h.b16 %v3540
    %v4146 = vunpack.c.l.b16 %v3541
    %v4147 = vunpack.c.l.b16 %v3542
    %v4148 = vunpack.c.h.b16 %v3542
    %v4149 = vunpack.c.l.b16 %v3543
    %v4150 = vunpack.c.l.b16 %v3544
    %v4151 = vunpack.c.h.b16 %v3544
    %v4152 = vunpack.c.l.b16 %v3545
    %v4153 = vunpack.c.l.b16 %v3546
    %v4154 = vunpack.c.h.b16 %v3546
    %v4155 = vunpack.c.l.b16 %v3547
    %v4156 = vunpack.c.l.b16 %v3548
    %v4157 = vunpack.c.h.b16 %v3548
    %v4158 = vunpack.c.l.b16 %v3549
    %v4159 = vunpack.c.l.b16 %v3550
    %v4160 = vunpack.c.h.b16 %v3550
    %v4161 = vunpack.c.l.b16 %v3551
    %v4162 = vunpack.c.l.b16 %v3552
    %v4163 = vunpack.c.h.b16 %v3552
    %v4164 = vunpack.c.l.b16 %v3553
    %v4165 = vunpack.c.l.b16 %v3554
    %v4166 = vunpack.c.h.b16 %v3554
    %v4167 = vunpack.c.l.b16 %v3555
    %v4168 = vunpack.c.l.b16 %v3556
    %v4169 = vunpack.c.h.b16 %v3556
    %v4170 = vunpack.c.l.b16 %v3557
    %v4171 = vunpack.c.l.b16 %v3558
    %v4172 = vunpack.c.h.b16 %v3558
    %v4173 = vunpack.c.l.b16 %v3559
    %v4174 = vunpack.c.l.b16 %v3560
    %v4175 = vunpack.c.h.b16 %v3560
    %v4176 = vunpack.c.l.b16 %v3561
    %v4177 = vunpack.c.l.b16 %v3562
    %v4178 = vunpack.c.h.b16 %v3562
    %v4179 = vunpack.c.l.b16 %v3563
    %v4180 = vunpack.c.l.b16 %v3564
    %v4181 = vunpack.c.h.b16 %v3564
    %v4182 = vunpack.c.l.b16 %v3565
    %v4183 = vunpack.c.l.b16 %v3566
    %v4184 = vunpack.c.h.b16 %v3566
    %v4185 = vunpack.c.l.b16 %v3567
    %v4186 = vunpack.c.l.b16 %v3568
    %v4187 = vunpack.c.h.b16 %v3568
    %v4188 = vunpack.c.l.b16 %v3569
    %v4189 = vunpack.c.l.b16 %v3570
    %v4190 = vunpack.c.h.b16 %v3570
    %v4191 = vunpack.c.l.b16 %v3571
    %v4192 = vunpack.c.l.b16 %v3572
    %v4193 = vunpack.c.h.b16 %v3572
    %v4194 = vunpack.c.l.b16 %v3573
    %v4195 = vunpack.c.l.b16 %v3574
    %v4196 = vunpack.c.h.b16 %v3574
    %v4197 = vunpack.c.l.b16 %v3575
    %v4198 = vunpack.c.l.b16 %v3576
    %v4199 = vunpack.c.h.b16 %v3576
    %v4200 = vunpack.c.l.b16 %v3577
    %v4201 = vunpack.c.l.b16 %v3578
    %v4202 = vunpack.c.h.b16 %v3578
    %v4203 = vunpack.c.l.b16 %v3579
    %v4204 = vunpack.c.l.b16 %v3580
    %v4205 = vunpack.c.h.b16 %v3580
    %v4206 = vunpack.c.l.b16 %v3581
    %v4207 = vunpack.c.l.b16 %v3582
    %v4208 = vunpack.c.h.b16 %v3582
    %v4209 = vunpack.c.l.b16 %v3583
    %v4210 = vunpack.c.l.b16 %v3584
    %v4211 = vunpack.c.h.b16 %v3584
    %v4212 = vunpack.c.l.b16 %v3585
    %v4213 = vunpack.c.l.b16 %v3586
    %v4214 = vunpack.c.h.b16 %v3586
    %v4215 = vunpack.c.l.b16 %v3587
    %v4216 = vunpack.c.l.b16 %v3588
    %v4217 = vunpack.c.h.b16 %v3588
    %v4218 = vunpack.c.l.b16 %v3589
    %v4219 = vunpack.c.l.b16 %v3590
    %v4220 = vunpack.c.h.b16 %v3590
    %v4221 = vunpack.c.l.b16 %v3591
    %v4222 = vunpack.c.l.b16 %v3592
    %v4223 = vunpack.c.h.b16 %v3592
    %v4224 = vunpack.c.l.b16 %v3593
    %v4225 = vunpack.c.l.b16 %v3594
    %v4226 = vunpack.c.h.b16 %v3594
    %v4227 = vunpack.c.l.b16 %v3595
    %v4228 = vunpack.c.l.b16 %v3596
    %v4229 = vunpack.c.h.b16 %v3596
    %v4230 = vunpack.c.l.b16 %v3597
    %v4231 = vunpack.c.l.b16 %v3598
    %v4232 = vunpack.c.h.b16 %v3598
    %v4233 = vunpack.c.l.b16 %v3599
    %v4234 = vunpack.c.l.b16 %v3600
    %v4235 = vunpack.c.h.b16 %v3600
    %v4236 = vunpack.c.l.b16 %v3601
    %v4237 = vunpack.c.l.b16 %v3602
    %v4238 = vunpack.c.h.b16 %v3602
    %v4239 = vunpack.c.l.b16 %v3603
    %v4240 = vunpack.c.l.b16 %v3604
    %v4241 = vunpack.c.h.b16 %v3604
    %v4242 = vunpack.c.l.b16 %v3605
    %v4243 = vunpack.c.l.b16 %v3606
    %v4244 = vunpack.c.h.b16 %v3606
    %v4245 = vunpack.c.l.b16 %v3607
    %v4246 = vunpack.c.l.b16 %v3608
    %v4247 = vunpack.c.h.b16 %v3608
    %v4248 = vunpack.c.l.b16 %v3609
    %v4249 = vunpack.c.l.b16 %v3610
    %v4250 = vunpack.c.h.b16 %v3610
    %v4251 = vunpack.c.l.b16 %v3611
    %v4252 = vpack.c.b16 %v3871, %v3868
    %v4253 = vpack.c.b16 %v3872, %v3869
    %v4254 = vpack.c.b16 %v3873, %v3870
    %v4255 = vpack.c.b16 %v3877, %v3874
    %v4256 = vpack.c.b16 %v3878, %v3875
    %v4257 = vpack.c.b16 %v3879, %v3876
    %v4258 = vpack.c.b16 %v3883, %v3880
    %v4259 = vpack.c.b16 %v3884, %v3881
    %v4260 = vpack.c.b16 %v3885, %v3882
    %v4261 = vpack.c.b16 %v3889, %v3886
    %v4262 = vpack.c.b16 %v3890, %v3887
    %v4263 = vpack.c.b16 %v3891, %v3888
    %v4264 = vpack.c.b16 %v3895, %v3892
    %v4265 = vpack.c.b16 %v3896, %v3893
    %v4266 = vpack.c.b16 %v3897, %v3894
    %v4267 = vpack.c.b16 %v3901, %v3898
    %v4268 = vpack.c.b16 %v3902, %v3899
    %v4269 = vpack.c.b16 %v3903, %v3900
    %v4270 = vpack.c.b16 %v3907, %v3904
    %v4271 = vpack.c.b16 %v3908, %v3905
    %v4272 = vpack.c.b16 %v3909, %v3906
    %v4273 = vpack.c.b16 %v3913, %v3910
    %v4274 = vpack.c.b16 %v3914, %v3911
    %v4275 = vpack.c.b16 %v3915, %v3912
    %v4276 = vpack.c.b16 %v3919, %v3916
    %v4277 = vpack.c.b16 %v3920, %v3917
    %v4278 = vpack.c.b16 %v3921, %v3918
    %v4279 = vpack.c.b16 %v3925, %v3922
    %v4280 = vpack.c.b16 %v3926, %v3923
    %v4281 = vpack.c.b16 %v3927, %v3924
    %v4282 = vpack.c.b16 %v3931, %v3928
    %v4283 = vpack.c.b16 %v3932, %v3929
    %v4284 = vpack.c.b16 %v3933, %v3930
    %v4285 = vpack.c.b16 %v3937, %v3934
    %v4286 = vpack.c.b16 %v3938, %v3935
    %v4287 = vpack.c.b16 %v3939, %v3936
    %v4288 = vpack.c.b16 %v3943, %v3940
    %v4289 = vpack.c.b16 %v3944, %v3941
    %v4290 = vpack.c.b16 %v3945, %v3942
    %v4291 = vpack.c.b16 %v3949, %v3946
    %v4292 = vpack.c.b16 %v3950, %v3947
    %v4293 = vpack.c.b16 %v3951, %v3948
    %v4294 = vpack.c.b16 %v3955, %v3952
    %v4295 = vpack.c.b16 %v3956, %v3953
    %v4296 = vpack.c.b16 %v3957, %v3954
    %v4297 = vpack.c.b16 %v3961, %v3958
    %v4298 = vpack.c.b16 %v3962, %v3959
    %v4299 = vpack.c.b16 %v3963, %v3960
    %v4300 = vpack.c.b16 %v3967, %v3964
    %v4301 = vpack.c.b16 %v3968, %v3965
    %v4302 = vpack.c.b16 %v3969, %v3966
    %v4303 = vpack.c.b16 %v3973, %v3970
    %v4304 = vpack.c.b16 %v3974, %v3971
    %v4305 = vpack.c.b16 %v3975, %v3972
    %v4306 = vpack.c.b16 %v3979, %v3976
    %v4307 = vpack.c.b16 %v3980, %v3977
    %v4308 = vpack.c.b16 %v3981, %v3978
    %v4309 = vpack.c.b16 %v3985, %v3982
    %v4310 = vpack.c.b16 %v3986, %v3983
    %v4311 = vpack.c.b16 %v3987, %v3984
    %v4312 = vpack.c.b16 %v3991, %v3988
    %v4313 = vpack.c.b16 %v3992, %v3989
    %v4314 = vpack.c.b16 %v3993, %v3990
    %v4315 = vpack.c.b16 %v3997, %v3994
    %v4316 = vpack.c.b16 %v3998, %v3995
    %v4317 = vpack.c.b16 %v3999, %v3996
    %v4318 = vpack.c.b16 %v4003, %v4000
    %v4319 = vpack.c.b16 %v4004, %v4001
    %v4320 = vpack.c.b16 %v4005, %v4002
    %v4321 = vpack.c.b16 %v4009, %v4006
    %v4322 = vpack.c.b16 %v4010, %v4007
    %v4323 = vpack.c.b16 %v4011, %v4008
    %v4324 = vpack.c.b16 %v4015, %v4012
    %v4325 = vpack.c.b16 %v4016, %v4013
    %v4326 = vpack.c.b16 %v4017, %v4014
    %v4327 = vpack.c.b16 %v4021, %v4018
    %v4328 = vpack.c.b16 %v4022, %v4019
    %v4329 = vpack.c.b16 %v4023, %v4020
    %v4330 = vpack.c.b16 %v4027, %v4024
    %v4331 = vpack.c.b16 %v4028, %v4025
    %v4332 = vpack.c.b16 %v4029, %v4026
    %v4333 = vpack.c.b16 %v4033, %v4030
    %v4334 = vpack.c.b16 %v4034, %v4031
    %v4335 = vpack.c.b16 %v4035, %v4032
    %v4336 = vpack.c.b16 %v4039, %v4036
    %v4337 = vpack.c.b16 %v4040, %v4037
    %v4338 = vpack.c.b16 %v4041, %v4038
    %v4339 = vpack.c.b16 %v4045, %v4042
    %v4340 = vpack.c.b16 %v4046, %v4043
    %v4341 = vpack.c.b16 %v4047, %v4044
    %v4342 = vpack.c.b16 %v4051, %v4048
    %v4343 = vpack.c.b16 %v4052, %v4049
    %v4344 = vpack.c.b16 %v4053, %v4050
    %v4345 = vpack.c.b16 %v4057, %v4054
    %v4346 = vpack.c.b16 %v4058, %v4055
    %v4347 = vpack.c.b16 %v4059, %v4056
    %v4348 = vpack.c.b16 %v4063, %v4060
    %v4349 = vpack.c.b16 %v4064, %v4061
    %v4350 = vpack.c.b16 %v4065, %v4062
    %v4351 = vpack.c.b16 %v4069, %v4066
    %v4352 = vpack.c.b16 %v4070, %v4067
    %v4353 = vpack.c.b16 %v4071, %v4068
    %v4354 = vpack.c.b16 %v4075, %v4072
    %v4355 = vpack.c.b16 %v4076, %v4073
    %v4356 = vpack.c.b16 %v4077, %v4074
    %v4357 = vpack.c.b16 %v4081, %v4078
    %v4358 = vpack.c.b16 %v4082, %v4079
    %v4359 = vpack.c.b16 %v4083, %v4080
    %v4360 = vpack.c.b16 %v4087, %v4084
    %v4361 = vpack.c.b16 %v4088, %v4085
    %v4362 = vpack.c.b16 %v4089, %v4086
    %v4363 = vpack.c.b16 %v4093, %v4090
    %v4364 = vpack.c.b16 %v4094, %v4091
    %v4365 = vpack.c.b16 %v4095, %v4092
    %v4366 = vpack.c.b16 %v4099, %v4096
    %v4367 = vpack.c.b16 %v4100, %v4097
    %v4368 = vpack.c.b16 %v4101, %v4098
    %v4369 = vpack.c.b16 %v4105, %v4102
    %v4370 = vpack.c.b16 %v4106, %v4103
    %v4371 = vpack.c.b16 %v4107, %v4104
    %v4372 = vpack.c.b16 %v4111, %v4108
    %v4373 = vpack.c.b16 %v4112, %v4109
    %v4374 = vpack.c.b16 %v4113, %v4110
    %v4375 = vpack.c.b16 %v4117, %v4114
    %v4376 = vpack.c.b16 %v4118, %v4115
    %v4377 = vpack.c.b16 %v4119, %v4116
    %v4378 = vpack.c.b16 %v4123, %v4120
    %v4379 = vpack.c.b16 %v4124, %v4121
    %v4380 = vpack.c.b16 %v4125, %v4122
    %v4381 = vpack.c.b16 %v4129, %v4126
    %v4382 = vpack.c.b16 %v4130, %v4127
    %v4383 = vpack.c.b16 %v4131, %v4128
    %v4384 = vpack.c.b16 %v4135, %v4132
    %v4385 = vpack.c.b16 %v4136, %v4133
    %v4386 = vpack.c.b16 %v4137, %v4134
    %v4387 = vpack.c.b16 %v4141, %v4138
    %v4388 = vpack.c.b16 %v4142, %v4139
    %v4389 = vpack.c.b16 %v4143, %v4140
    %v4390 = vpack.c.b16 %v4147, %v4144
    %v4391 = vpack.c.b16 %v4148, %v4145
    %v4392 = vpack.c.b16 %v4149, %v4146
    %v4393 = vpack.c.b16 %v4153, %v4150
    %v4394 = vpack.c.b16 %v4154, %v4151
    %v4395 = vpack.c.b16 %v4155, %v4152
    %v4396 = vpack.c.b16 %v4159, %v4156
    %v4397 = vpack.c.b16 %v4160, %v4157
    %v4398 = vpack.c.b16 %v4161, %v4158
    %v4399 = vpack.c.b16 %v4165, %v4162
    %v4400 = vpack.c.b16 %v4166, %v4163
    %v4401 = vpack.c.b16 %v4167, %v4164
    %v4402 = vpack.c.b16 %v4171, %v4168
    %v4403 = vpack.c.b16 %v4172, %v4169
    %v4404 = vpack.c.b16 %v4173, %v4170
    %v4405 = vpack.c.b16 %v4177, %v4174
    %v4406 = vpack.c.b16 %v4178, %v4175
    %v4407 = vpack.c.b16 %v4179, %v4176
    %v4408 = vpack.c.b16 %v4183, %v4180
    %v4409 = vpack.c.b16 %v4184, %v4181
    %v4410 = vpack.c.b16 %v4185, %v4182
    %v4411 = vpack.c.b16 %v4189, %v4186
    %v4412 = vpack.c.b16 %v4190, %v4187
    %v4413 = vpack.c.b16 %v4191, %v4188
    %v4414 = vpack.c.b16 %v4195, %v4192
    %v4415 = vpack.c.b16 %v4196, %v4193
    %v4416 = vpack.c.b16 %v4197, %v4194
    %v4417 = vpack.c.b16 %v4201, %v4198
    %v4418 = vpack.c.b16 %v4202, %v4199
    %v4419 = vpack.c.b16 %v4203, %v4200
    %v4420 = vpack.c.b16 %v4207, %v4204
    %v4421 = vpack.c.b16 %v4208, %v4205
    %v4422 = vpack.c.b16 %v4209, %v4206
    %v4423 = vpack.c.b16 %v4213, %v4210
    %v4424 = vpack.c.b16 %v4214, %v4211
    %v4425 = vpack.c.b16 %v4215, %v4212
    %v4426 = vpack.c.b16 %v4219, %v4216
    %v4427 = vpack.c.b16 %v4220, %v4217
    %v4428 = vpack.c.b16 %v4221, %v4218
    %v4429 = vpack.c.b16 %v4225, %v4222
    %v4430 = vpack.c.b16 %v4226, %v4223
    %v4431 = vpack.c.b16 %v4227, %v4224
    %v4432 = vpack.c.b16 %v4231, %v4228
    %v4433 = vpack.c.b16 %v4232, %v4229
    %v4434 = vpack.c.b16 %v4233, %v4230
    %v4435 = vpack.c.b16 %v4237, %v4234
    %v4436 = vpack.c.b16 %v4238, %v4235
    %v4437 = vpack.c.b16 %v4239, %v4236
    %v4438 = vpack.c.b16 %v4243, %v4240
    %v4439 = vpack.c.b16 %v4244, %v4241
    %v4440 = vpack.c.b16 %v4245, %v4242
    %v4441 = vpack.c.b16 %v4249, %v4246
    %v4442 = vpack.c.b16 %v4250, %v4247
    %v4443 = vpack.c.b16 %v4251, %v4248
    %4636 = vmatprep.subr.bf16.mxu0 %v4253
    %4637 = vmatpush1.bf16.msra.mxu0 %v4252
    %4638 = vmatprep.subr.bf16.mxu0 %v4256
    %4639 = vmatpush1.bf16.msra.mxu0 %v4255
    %4640 = vmatprep.subr.bf16.mxu0 %v4259
    %4641 = vmatpush1.bf16.msra.mxu0 %v4258
    %4642 = vmatprep.subr.bf16.mxu0 %v4262
    %4643 = vmatpush1.bf16.msra.mxu0 %v4261
    %4644 = vmatprep.subr.bf16.mxu0 %v4265
    %4645 = vmatpush1.bf16.msra.mxu0 %v4264
    %4646 = vmatprep.subr.bf16.mxu0 %v4268
    %4647 = vmatpush1.bf16.msra.mxu0 %v4267
    %4648 = vmatprep.subr.bf16.mxu0 %v4271
    %4649 = vmatpush1.bf16.msra.mxu0 %v4270
    %4650 = vmatprep.subr.bf16.mxu0 %v4274
    %4651 = vmatpush1.bf16.msra.mxu0 %v4273
    %4652 = vmatprep.subr.bf16.mxu0 %v4277
    %4653 = vmatpush1.bf16.msra.mxu0 %v4276
    %4654 = vmatprep.subr.bf16.mxu0 %v4280
    %4655 = vmatpush1.bf16.msra.mxu0 %v4279
    %4656 = vmatprep.subr.bf16.mxu0 %v4283
    %4657 = vmatpush1.bf16.msra.mxu0 %v4282
    %4658 = vmatprep.subr.bf16.mxu0 %v4286
    %4659 = vmatpush1.bf16.msra.mxu0 %v4285
    %4660 = vmatprep.subr.bf16.mxu0 %v4289
    %4661 = vmatpush1.bf16.msra.mxu0 %v4288
    %4662 = vmatprep.subr.bf16.mxu0 %v4292
    %4663 = vmatpush1.bf16.msra.mxu0 %v4291
    %4664 = vmatprep.subr.bf16.mxu0 %v4295
    %4665 = vmatpush1.bf16.msra.mxu0 %v4294
    %4666 = vmatprep.subr.bf16.mxu0 %v4298
    %4667 = vmatpush1.bf16.msra.mxu0 %v4297
    %4668 = vmatprep.mubr.bf16.mxu0 %v3341
    %4669 = vmatmul.mubr.bf16.gmra.mrb[0].mxu0 %v3340
    %v4670 = vpop.f32.mrb[0].mxu0
    %v4671 = vadd.f32 0.0, %v4670
    %v4672 = vpop.f32.mrb[0].mxu0
    %v4673 = vadd.f32 0.0, %v4672
    %v4674 = vpop.f32.mrb[0].mxu0
    %v4675 = vadd.f32 0.0, %v4674
    %v4676 = vpop.f32.mrb[0].mxu0
    %v4677 = vadd.f32 0.0, %v4676
    %4678 = vmatprep.mubr.bf16.mxu0 %v3349
    %4679 = vmatmul.mubr.bf16.gmra.mrb[0].mxu0 %v3348
    %v4680 = vpop.f32.mrb[0].mxu0
    %v4681 = vadd.f32 0.0, %v4680
    %v4682 = vpop.f32.mrb[0].mxu0
    %v4683 = vadd.f32 0.0, %v4682
    %v4684 = vpop.f32.mrb[0].mxu0
    %v4685 = vadd.f32 0.0, %v4684
    %v4686 = vpop.f32.mrb[0].mxu0
    %v4687 = vadd.f32 0.0, %v4686
    %4688 = vdwg.mxu0
    %4689 = vmatprep.subr.bf16.mxu0 %v4301
    %4690 = vmatpush1.bf16.msra.mxu0 %v4300
    %4691 = vmatprep.subr.bf16.mxu0 %v4304
    %4692 = vmatpush1.bf16.msra.mxu0 %v4303
    %4693 = vmatprep.subr.bf16.mxu0 %v4307
    %4694 = vmatpush1.bf16.msra.mxu0 %v4306
    %4695 = vmatprep.subr.bf16.mxu0 %v4310
    %4696 = vmatpush1.bf16.msra.mxu0 %v4309
    %4697 = vmatprep.subr.bf16.mxu0 %v4313
    %4698 = vmatpush1.bf16.msra.mxu0 %v4312
    %4699 = vmatprep.subr.bf16.mxu0 %v4316
    %4700 = vmatpush1.bf16.msra.mxu0 %v4315
    %4701 = vmatprep.subr.bf16.mxu0 %v4319
    %4702 = vmatpush1.bf16.msra.mxu0 %v4318
    %4703 = vmatprep.subr.bf16.mxu0 %v4322
    %4704 = vmatpush1.bf16.msra.mxu0 %v4321
    %4705 = vmatprep.subr.bf16.mxu0 %v4325
    %4706 = vmatpush1.bf16.msra.mxu0 %v4324
    %4707 = vmatprep.subr.bf16.mxu0 %v4328
    %4708 = vmatpush1.bf16.msra.mxu0 %v4327
    %4709 = vmatprep.subr.bf16.mxu0 %v4331
    %4710 = vmatpush1.bf16.msra.mxu0 %v4330
    %4711 = vmatprep.subr.bf16.mxu0 %v4334
    %4712 = vmatpush1.bf16.msra.mxu0 %v4333
    %4713 = vmatprep.subr.bf16.mxu0 %v4337
    %4714 = vmatpush1.bf16.msra.mxu0 %v4336
    %4715 = vmatprep.subr.bf16.mxu0 %v4340
    %4716 = vmatpush1.bf16.msra.mxu0 %v4339
    %4717 = vmatprep.subr.bf16.mxu0 %v4343
    %4718 = vmatpush1.bf16.msra.mxu0 %v4342
    %4719 = vmatprep.subr.bf16.mxu0 %v4346
    %4720 = vmatpush1.bf16.msra.mxu0 %v4345
    %4721 = vmatprep.mubr.bf16.mxu0 %v3343
    %4722 = vmatmul.mubr.bf16.gmra.mrb[0].mxu0 %v3342
    %v4723 = vpop.f32.mrb[0].mxu0
    %v4724 = vadd.f32 %v4671, %v4723
    %v4725 = vpop.f32.mrb[0].mxu0
    %v4726 = vadd.f32 %v4673, %v4725
    %v4727 = vpop.f32.mrb[0].mxu0
    %v4728 = vadd.f32 %v4675, %v4727
    %v4729 = vpop.f32.mrb[0].mxu0
    %v4730 = vadd.f32 %v4677, %v4729
    %4731 = vmatprep.mubr.bf16.mxu0 %v3351
    %4732 = vmatmul.mubr.bf16.gmra.mrb[0].mxu0 %v3350
    %v4733 = vpop.f32.mrb[0].mxu0
    %v4734 = vadd.f32 %v4681, %v4733
    %v4735 = vpop.f32.mrb[0].mxu0
    %v4736 = vadd.f32 %v4683, %v4735
    %v4737 = vpop.f32.mrb[0].mxu0
    %v4738 = vadd.f32 %v4685, %v4737
    %v4739 = vpop.f32.mrb[0].mxu0
    %v4740 = vadd.f32 %v4687, %v4739
    %4741 = vdwg.mxu0
    %4742 = vmatprep.subr.bf16.mxu0 %v4349
    %4743 = vmatpush1.bf16.msra.mxu0 %v4348
    %4744 = vmatprep.subr.bf16.mxu0 %v4352
    %4745 = vmatpush1.bf16.msra.mxu0 %v4351
    %4746 = vmatprep.subr.bf16.mxu0 %v4355
    %4747 = vmatpush1.bf16.msra.mxu0 %v4354
    %4748 = vmatprep.subr.bf16.mxu0 %v4358
    %4749 = vmatpush1.bf16.msra.mxu0 %v4357
    %4750 = vmatprep.subr.bf16.mxu0 %v4361
    %4751 = vmatpush1.bf16.msra.mxu0 %v4360
    %4752 = vmatprep.subr.bf16.mxu0 %v4364
    %4753 = vmatpush1.bf16.msra.mxu0 %v4363
    %4754 = vmatprep.subr.bf16.mxu0 %v4367
    %4755 = vmatpush1.bf16.msra.mxu0 %v4366
    %4756 = vmatprep.subr.bf16.mxu0 %v4370
    %4757 = vmatpush1.bf16.msra.mxu0 %v4369
    %4758 = vmatprep.subr.bf16.mxu0 %v4373
    %4759 = vmatpush1.bf16.msra.mxu0 %v4372
    %4760 = vmatprep.subr.bf16.mxu0 %v4376
    %4761 = vmatpush1.bf16.msra.mxu0 %v4375
    %4762 = vmatprep.subr.bf16.mxu0 %v4379
    %4763 = vmatpush1.bf16.msra.mxu0 %v4378
    %4764 = vmatprep.subr.bf16.mxu0 %v4382
    %4765 = vmatpush1.bf16.msra.mxu0 %v4381
    %4766 = vmatprep.subr.bf16.mxu0 %v4385
    %4767 = vmatpush1.bf16.msra.mxu0 %v4384
    %4768 = vmatprep.subr.bf16.mxu0 %v4388
    %4769 = vmatpush1.bf16.msra.mxu0 %v4387
    %4770 = vmatprep.subr.bf16.mxu0 %v4391
    %4771 = vmatpush1.bf16.msra.mxu0 %v4390
    %4772 = vmatprep.subr.bf16.mxu0 %v4394
    %4773 = vmatpush1.bf16.msra.mxu0 %v4393
    %4774 = vmatprep.mubr.bf16.mxu0 %v3345
    %4775 = vmatmul.mubr.bf16.gmra.mrb[0].mxu0 %v3344
    %v4776 = vpop.f32.mrb[0].mxu0
    %v4777 = vadd.f32 %v4724, %v4776
    %v4778 = vpop.f32.mrb[0].mxu0
    %v4779 = vadd.f32 %v4726, %v4778
    %v4780 = vpop.f32.mrb[0].mxu0
    %v4781 = vadd.f32 %v4728, %v4780
    %v4782 = vpop.f32.mrb[0].mxu0
    %v4783 = vadd.f32 %v4730, %v4782
    %4784 = vmatprep.mubr.bf16.mxu0 %v3353
    %4785 = vmatmul.mubr.bf16.gmra.mrb[0].mxu0 %v3352
    %v4786 = vpop.f32.mrb[0].mxu0
    %v4787 = vadd.f32 %v4734, %v4786
    %v4788 = vpop.f32.mrb[0].mxu0
    %v4789 = vadd.f32 %v4736, %v4788
    %v4790 = vpop.f32.mrb[0].mxu0
    %v4791 = vadd.f32 %v4738, %v4790
    %v4792 = vpop.f32.mrb[0].mxu0
    %v4793 = vadd.f32 %v4740, %v4792
    %4794 = vdwg.mxu0
    %4795 = vmatprep.subr.bf16.mxu0 %v4397
    %4796 = vmatpush1.bf16.msra.mxu0 %v4396
    %4797 = vmatprep.subr.bf16.mxu0 %v4400
    %4798 = vmatpush1.bf16.msra.mxu0 %v4399
    %4799 = vmatprep.subr.bf16.mxu0 %v4403
    %4800 = vmatpush1.bf16.msra.mxu0 %v4402
    %4801 = vmatprep.subr.bf16.mxu0 %v4406
    %4802 = vmatpush1.bf16.msra.mxu0 %v4405
    %4803 = vmatprep.subr.bf16.mxu0 %v4409
    %4804 = vmatpush1.bf16.msra.mxu0 %v4408
    %4805 = vmatprep.subr.bf16.mxu0 %v4412
    %4806 = vmatpush1.bf16.msra.mxu0 %v4411
    %4807 = vmatprep.subr.bf16.mxu0 %v4415
    %4808 = vmatpush1.bf16.msra.mxu0 %v4414
    %4809 = vmatprep.subr.bf16.mxu0 %v4418
    %4810 = vmatpush1.bf16.msra.mxu0 %v4417
    %4811 = vmatprep.subr.bf16.mxu0 %v4421
    %4812 = vmatpush1.bf16.msra.mxu0 %v4420
    %4813 = vmatprep.subr.bf16.mxu0 %v4424
    %4814 = vmatpush1.bf16.msra.mxu0 %v4423
    %4815 = vmatprep.subr.bf16.mxu0 %v4427
    %4816 = vmatpush1.bf16.msra.mxu0 %v4426
    %4817 = vmatprep.subr.bf16.mxu0 %v4430
    %4818 = vmatpush1.bf16.msra.mxu0 %v4429
    %4819 = vmatprep.subr.bf16.mxu0 %v4433
    %4820 = vmatpush1.bf16.msra.mxu0 %v4432
    %4821 = vmatprep.subr.bf16.mxu0 %v4436
    %4822 = vmatpush1.bf16.msra.mxu0 %v4435
    %4823 = vmatprep.subr.bf16.mxu0 %v4439
    %4824 = vmatpush1.bf16.msra.mxu0 %v4438
    %4825 = vmatprep.subr.bf16.mxu0 %v4442
    %4826 = vmatpush1.bf16.msra.mxu0 %v4441
    %4827 = vmatprep.mubr.bf16.mxu0 %v3347
    %4828 = vmatmul.mubr.bf16.gmra.mrb[0].mxu0 %v3346
    %v4829 = vpop.f32.mrb[0].mxu0
    %v4830 = vadd.f32 %v4777, %v4829
    %v4831 = vpop.f32.mrb[0].mxu0
    %v4832 = vadd.f32 %v4779, %v4831
    %v4833 = vpop.f32.mrb[0].mxu0
    %v4834 = vadd.f32 %v4781, %v4833
    %v4835 = vpop.f32.mrb[0].mxu0
    %v4836 = vadd.f32 %v4783, %v4835
    %4837 = vmatprep.mubr.bf16.mxu0 %v3355
    %4838 = vmatmul.mubr.bf16.gmra.mrb[0].mxu0 %v3354
    %v4839 = vpop.f32.mrb[0].mxu0
    %v4840 = vadd.f32 %v4787, %v4839
    %v4841 = vpop.f32.mrb[0].mxu0
    %v4842 = vadd.f32 %v4789, %v4841
    %v4843 = vpop.f32.mrb[0].mxu0
    %v4844 = vadd.f32 %v4791, %v4843
    %v4845 = vpop.f32.mrb[0].mxu0
    %v4846 = vadd.f32 %v4793, %v4845
    %4847 = vdwg.mxu0
    %4848 = vmatprep.subr.bf16.mxu0 0
    %4849 = vmatpush1.bf16.msra.mxu0 %v4254
    %4850 = vmatprep.subr.bf16.mxu0 0
    %4851 = vmatpush1.bf16.msra.mxu0 %v4257
    %4852 = vmatprep.subr.bf16.mxu0 0
    %4853 = vmatpush1.bf16.msra.mxu0 %v4260
    %4854 = vmatprep.subr.bf16.mxu0 0
    %4855 = vmatpush1.bf16.msra.mxu0 %v4263
    %4856 = vmatprep.subr.bf16.mxu0 0
    %4857 = vmatpush1.bf16.msra.mxu0 %v4266
    %4858 = vmatprep.subr.bf16.mxu0 0
    %4859 = vmatpush1.bf16.msra.mxu0 %v4269
    %4860 = vmatprep.subr.bf16.mxu0 0
    %4861 = vmatpush1.bf16.msra.mxu0 %v4272
    %4862 = vmatprep.subr.bf16.mxu0 0
    %4863 = vmatpush1.bf16.msra.mxu0 %v4275
    %4864 = vmatprep.subr.bf16.mxu0 0
    %4865 = vmatpush1.bf16.msra.mxu0 %v4278
    %4866 = vmatprep.subr.bf16.mxu0 0
    %4867 = vmatpush1.bf16.msra.mxu0 %v4281
    %4868 = vmatprep.subr.bf16.mxu0 0
    %4869 = vmatpush1.bf16.msra.mxu0 %v4284
    %4870 = vmatprep.subr.bf16.mxu0 0
    %4871 = vmatpush1.bf16.msra.mxu0 %v4287
    %4872 = vmatprep.subr.bf16.mxu0 0
    %4873 = vmatpush1.bf16.msra.mxu0 %v4290
    %4874 = vmatprep.subr.bf16.mxu0 0
    %4875 = vmatpush1.bf16.msra.mxu0 %v4293
    %4876 = vmatprep.subr.bf16.mxu0 0
    %4877 = vmatpush1.bf16.msra.mxu0 %v4296
    %4878 = vmatprep.subr.bf16.mxu0 0
    %4879 = vmatpush1.bf16.msra.mxu0 %v4299
    %4880 = vmatprep.mubr.bf16.mxu0 %v3341
    %4881 = vmatmul.mubr.bf16.gmra.mrb[0].mxu0 %v3340
    %v4882 = vpop.f32.mrb[0].mxu0
    %v4883 = vadd.f32 0.0, %v4882
    %v4884 = vpop.f32.mrb[0].mxu0
    %v4885 = vpop.f32.mrb[0].mxu0
    %v4886 = vadd.f32 0.0, %v4885
    %v4887 = vpop.f32.mrb[0].mxu0
    %4888 = vmatprep.mubr.bf16.mxu0 %v3349
    %4889 = vmatmul.mubr.bf16.gmra.mrb[0].mxu0 %v3348
    %v4890 = vpop.f32.mrb[0].mxu0
    %v4891 = vadd.f32 0.0, %v4890
    %v4892 = vpop.f32.mrb[0].mxu0
    %v4893 = vpop.f32.mrb[0].mxu0
    %v4894 = vadd.f32 0.0, %v4893
    %v4895 = vpop.f32.mrb[0].mxu0
    %4896 = vdwg.mxu0
    %4897 = vmatprep.subr.bf16.mxu0 0
    %4898 = vmatpush1.bf16.msra.mxu0 %v4302
    %4899 = vmatprep.subr.bf16.mxu0 0
    %4900 = vmatpush1.bf16.msra.mxu0 %v4305
    %4901 = vmatprep.subr.bf16.mxu0 0
    %4902 = vmatpush1.bf16.msra.mxu0 %v4308
    %4903 = vmatprep.subr.bf16.mxu0 0
    %4904 = vmatpush1.bf16.msra.mxu0 %v4311
    %4905 = vmatprep.subr.bf16.mxu0 0
    %4906 = vmatpush1.bf16.msra.mxu0 %v4314
    %4907 = vmatprep.subr.bf16.mxu0 0
    %4908 = vmatpush1.bf16.msra.mxu0 %v4317
    %4909 = vmatprep.subr.bf16.mxu0 0
    %4910 = vmatpush1.bf16.msra.mxu0 %v4320
    %4911 = vmatprep.subr.bf16.mxu0 0
    %4912 = vmatpush1.bf16.msra.mxu0 %v4323
    %4913 = vmatprep.subr.bf16.mxu0 0
    %4914 = vmatpush1.bf16.msra.mxu0 %v4326
    %4915 = vmatprep.subr.bf16.mxu0 0
    %4916 = vmatpush1.bf16.msra.mxu0 %v4329
    %4917 = vmatprep.subr.bf16.mxu0 0
    %4918 = vmatpush1.bf16.msra.mxu0 %v4332
    %4919 = vmatprep.subr.bf16.mxu0 0
    %4920 = vmatpush1.bf16.msra.mxu0 %v4335
    %4921 = vmatprep.subr.bf16.mxu0 0
    %4922 = vmatpush1.bf16.msra.mxu0 %v4338
    %4923 = vmatprep.subr.bf16.mxu0 0
    %4924 = vmatpush1.bf16.msra.mxu0 %v4341
    %4925 = vmatprep.subr.bf16.mxu0 0
    %4926 = vmatpush1.bf16.msra.mxu0 %v4344
    %4927 = vmatprep.subr.bf16.mxu0 0
    %4928 = vmatpush1.bf16.msra.mxu0 %v4347
    %4929 = vmatprep.mubr.bf16.mxu0 %v3343
    %4930 = vmatmul.mubr.bf16.gmra.mrb[0].mxu0 %v3342
    %v4931 = vpop.f32.mrb[0].mxu0
    %v4932 = vadd.f32 %v4883, %v4931
    %v4933 = vpop.f32.mrb[0].mxu0
    %v4934 = vpop.f32.mrb[0].mxu0
    %v4935 = vadd.f32 %v4886, %v4934
    %v4936 = vpop.f32.mrb[0].mxu0
    %4937 = vmatprep.mubr.bf16.mxu0 %v3351
    %4938 = vmatmul.mubr.bf16.gmra.mrb[0].mxu0 %v3350
    %v4939 = vpop.f32.mrb[0].mxu0
    %v4940 = vadd.f32 %v4891, %v4939
    %v4941 = vpop.f32.mrb[0].mxu0
    %v4942 = vpop.f32.mrb[0].mxu0
    %v4943 = vadd.f32 %v4894, %v4942
    %v4944 = vpop.f32.mrb[0].mxu0
    %4945 = vdwg.mxu0
    %4946 = vmatprep.subr.bf16.mxu0 0
    %4947 = vmatpush1.bf16.msra.mxu0 %v4350
    %4948 = vmatprep.subr.bf16.mxu0 0
    %4949 = vmatpush1.bf16.msra.mxu0 %v4353
    %4950 = vmatprep.subr.bf16.mxu0 0
    %4951 = vmatpush1.bf16.msra.mxu0 %v4356
    %4952 = vmatprep.subr.bf16.mxu0 0
    %4953 = vmatpush1.bf16.msra.mxu0 %v4359
    %4954 = vmatprep.subr.bf16.mxu0 0
    %4955 = vmatpush1.bf16.msra.mxu0 %v4362
    %4956 = vmatprep.subr.bf16.mxu0 0
    %4957 = vmatpush1.bf16.msra.mxu0 %v4365
    %4958 = vmatprep.subr.bf16.mxu0 0
    %4959 = vmatpush1.bf16.msra.mxu0 %v4368
    %4960 = vmatprep.subr.bf16.mxu0 0
    %4961 = vmatpush1.bf16.msra.mxu0 %v4371
    %4962 = vmatprep.subr.bf16.mxu0 0
    %4963 = vmatpush1.bf16.msra.mxu0 %v4374
    %4964 = vmatprep.subr.bf16.mxu0 0
    %4965 = vmatpush1.bf16.msra.mxu0 %v4377
    %4966 = vmatprep.subr.bf16.mxu0 0
    %4967 = vmatpush1.bf16.msra.mxu0 %v4380
    %4968 = vmatprep.subr.bf16.mxu0 0
    %4969 = vmatpush1.bf16.msra.mxu0 %v4383
    %4970 = vmatprep.subr.bf16.mxu0 0
    %4971 = vmatpush1.bf16.msra.mxu0 %v4386
    %4972 = vmatprep.subr.bf16.mxu0 0
    %4973 = vmatpush1.bf16.msra.mxu0 %v4389
    %4974 = vmatprep.subr.bf16.mxu0 0
    %4975 = vmatpush1.bf16.msra.mxu0 %v4392
    %4976 = vmatprep.subr.bf16.mxu0 0
    %4977 = vmatpush1.bf16.msra.mxu0 %v4395
    %4978 = vmatprep.mubr.bf16.mxu0 %v3345
    %4979 = vmatmul.mubr.bf16.gmra.mrb[0].mxu0 %v3344
    %v4980 = vpop.f32.mrb[0].mxu0
    %v4981 = vadd.f32 %v4932, %v4980
    %v4982 = vpop.f32.mrb[0].mxu0
    %v4983 = vpop.f32.mrb[0].mxu0
    %v4984 = vadd.f32 %v4935, %v4983
    %v4985 = vpop.f32.mrb[0].mxu0
    %4986 = vmatprep.mubr.bf16.mxu0 %v3353
    %4987 = vmatmul.mubr.bf16.gmra.mrb[0].mxu0 %v3352
    %v4988 = vpop.f32.mrb[0].mxu0
    %v4989 = vadd.f32 %v4940, %v4988
    %v4990 = vpop.f32.mrb[0].mxu0
    %v4991 = vpop.f32.mrb[0].mxu0
    %v4992 = vadd.f32 %v4943, %v4991
    %v4993 = vpop.f32.mrb[0].mxu0
    %4994 = vdwg.mxu0
    %4995 = vmatprep.subr.bf16.mxu0 0
    %4996 = vmatpush1.bf16.msra.mxu0 %v4398
    %4997 = vmatprep.subr.bf16.mxu0 0
    %4998 = vmatpush1.bf16.msra.mxu0 %v4401
    %4999 = vmatprep.subr.bf16.mxu0 0
    %5000 = vmatpush1.bf16.msra.mxu0 %v4404
    %5001 = vmatprep.subr.bf16.mxu0 0
    %5002 = vmatpush1.bf16.msra.mxu0 %v4407
    %5003 = vmatprep.subr.bf16.mxu0 0
    %5004 = vmatpush1.bf16.msra.mxu0 %v4410
    %5005 = vmatprep.subr.bf16.mxu0 0
    %5006 = vmatpush1.bf16.msra.mxu0 %v4413
    %5007 = vmatprep.subr.bf16.mxu0 0
    %5008 = vmatpush1.bf16.msra.mxu0 %v4416
    %5009 = vmatprep.subr.bf16.mxu0 0
    %5010 = vmatpush1.bf16.msra.mxu0 %v4419
    %5011 = vmatprep.subr.bf16.mxu0 0
    %5012 = vmatpush1.bf16.msra.mxu0 %v4422
    %5013 = vmatprep.subr.bf16.mxu0 0
    %5014 = vmatpush1.bf16.msra.mxu0 %v4425
    %5015 = vmatprep.subr.bf16.mxu0 0
    %5016 = vmatpush1.bf16.msra.mxu0 %v4428
    %5017 = vmatprep.subr.bf16.mxu0 0
    %5018 = vmatpush1.bf16.msra.mxu0 %v4431
    %5019 = vmatprep.subr.bf16.mxu0 0
    %5020 = vmatpush1.bf16.msra.mxu0 %v4434
    %5021 = vmatprep.subr.bf16.mxu0 0
    %5022 = vmatpush1.bf16.msra.mxu0 %v4437
    %5023 = vmatprep.subr.bf16.mxu0 0
    %5024 = vmatpush1.bf16.msra.mxu0 %v4440
    %5025 = vmatprep.subr.bf16.mxu0 0
    %5026 = vmatpush1.bf16.msra.mxu0 %v4443
    %5027 = vmatprep.mubr.bf16.mxu0 %v3347
    %5028 = vmatmul.mubr.bf16.gmra.mrb[0].mxu0 %v3346
    %v5029 = vpop.f32.mrb[0].mxu0
    %v5030 = vadd.f32 %v4981, %v5029
    %v5031 = vpop.f32.mrb[0].mxu0
    %v5032 = vpop.f32.mrb[0].mxu0
    %v5033 = vadd.f32 %v4984, %v5032
    %v5034 = vpop.f32.mrb[0].mxu0
    %5035 = vmatprep.mubr.bf16.mxu0 %v3355
    %5036 = vmatmul.mubr.bf16.gmra.mrb[0].mxu0 %v3354
    %v5037 = vpop.f32.mrb[0].mxu0
    %v5038 = vadd.f32 %v4989, %v5037
    %v5039 = vpop.f32.mrb[0].mxu0
    %v5040 = vpop.f32.mrb[0].mxu0
    %v5041 = vadd.f32 %v4992, %v5040
    %v5042 = vpop.f32.mrb[0].mxu0
    %5043 = vdwg.mxu0
    %v5044 = vld [vmem:[%s9] sm:$0x1]
    %v5046 = vlaneseq
    %v5047 = vshrl.u32 %v5046, 7
    %v5048 = vsub.s32 0, %v5047
    %v5049 = vrot.slane %v5044, %v5048
    %v5051 = vadd.f32 %v4832, %v5049
    %v5052 = vadd.f32 %v4836, %v5049
    %v5053 = vadd.f32 %v4842, %v5049
    %v5054 = vadd.f32 %v4846, %v5049
    %5055 = vst [vmem:[#allocation15] sm:$0xff] %v5051
    %5056 = vst [vmem:[#allocation15 + $0x8] sm:$0xff] %v5052
    %5057 = vst [vmem:[#allocation15 + $0x10] sm:$0xff] %v5053
    %5058 = vst [vmem:[#allocation15 + $0x18] sm:$0xff] %v5054
    %v5059 = vld [vmem:[#allocation15 + $0x1] sm:$0xff]
    %v5060 = vld [vmem:[#allocation15 + $0x9] sm:$0x7f]
    %v5061 = vld [vmem:[#allocation15 + $0x11] sm:$0xff]
    %v5062 = vld [vmem:[#allocation15 + $0x19] sm:$0x7f]
    %v5063 = vadd.f32 %v5059, %v4830
    %v5064 = vadd.f32 %v5060, %v4834
    %v5065 = vadd.f32 %v5061, %v4840
    %v5066 = vadd.f32 %v5062, %v4844
    %5067 = vst [vmem:[#allocation15 + $0x1] sm:$0xff] %v5063
    %5068 = vst [vmem:[#allocation15 + $0x9] sm:$0x7f] %v5064
    %5069 = vst [vmem:[#allocation15 + $0x11] sm:$0xff] %v5065
    %5070 = vst [vmem:[#allocation15 + $0x19] sm:$0x7f] %v5066
    %v5071 = vld [vmem:[#allocation15] sm:$0xff]
    %v5072 = vld [vmem:[#allocation15 + $0x8] sm:$0x7f]
    %v5073 = vld [vmem:[#allocation15 + $0x10] sm:$0xff]
    %v5074 = vld [vmem:[#allocation15 + $0x18] sm:$0x7f]
    %v5079 = vrot.slane %v5030, 1
    %v5080 = vrot.slane %v5033, 1
    %v5081 = vsel %vm469, %v5079, %v5080
    %v5082 = vrot.slane %v5038, 1
    %v5083 = vrot.slane %v5041, 1
    %v5084 = vsel %vm469, %v5082, %v5083
    %v5089 = vadd.f32 %v5071, %v5081
    %v5090 = vadd.f32 %v5072, %v5080
    %v5091 = vadd.f32 %v5073, %v5084
    %v5092 = vadd.f32 %v5074, %v5083
    %5093 = vst [vmem:[#allocation15] sm:$0xff] %v5089
    %5094 = vst [vmem:[#allocation15 + $0x8] sm:$0x7f] %v5090
    %5095 = vst [vmem:[#allocation15 + $0x10] sm:$0xff] %v5091
    %5096 = vst [vmem:[#allocation15 + $0x18] sm:$0x7f] %v5092
    // Predicated region
    $region66: #{tpu_custom_call.1} parent=1 // pred_check
      _
    $region67: #{tpu_custom_call.1} parent=1 // pred_check_branch
      %5098 = sbr.rel (0) target = $region69
    $region68: #{tpu_custom_call.1} parent=1 // pred_region
      %s5100 = ssub.s32 512, 512
      %5101 = vsyncadd [#allocation8], %s5100
      %s5102 = sshll.u32 [#allocation15], 4
      %s5103 = int_to_ptr.vmem [resolvable:$true] %s5102
      %5108 = dma.vmem_to_hbm [thread:$0]  %s5103, 512, %s11, [#allocation8], 128, 128, 8
    $region69: #{tpu_custom_call.1} parent=1 // pred_fallthru
      _
    // Predicated region
    $region70: #{tpu_custom_call.1} parent=1 // pred_check
      _
    $region71: #{tpu_custom_call.1} parent=1 // pred_check_branch
      %5110 = sbr.rel (0) target = $region73
    $region72: #{tpu_custom_call.1} parent=1 // pred_region
      %5111 = dma.done [#allocation8], 512
    $region73: #{tpu_custom_call.1} parent=1 // pred_fallthru
      _
    %5112 = vsyncpa [#allocation7], 1
    %5113 = vsyncpa [#allocation10], 1
    %5114 = vsyncpa [#allocation13], 1
    %5115 = vsyncpa [#allocation8], 1

</llo_original>
